<compile_context>
chip_gen: v7x
topology: tpu7x:2x2x1
jax: 0.10.0
libtpu: 0.0.40
codegen_flags: <defaults>
</compile_context>

<pallas_src>
import numpy as np
import jax
import jax.numpy as jnp
from jax import lax
from jax.experimental import pallas as pl
from jax.experimental.pallas import tpu as pltpu

WINDOW_SIZE = 11
SIGMA = 1.5
PAD = WINDOW_SIZE // 2
C1 = (0.01 * 2) ** 2   # constants exactly as written in the PyTorch module
C2 = (0.03 * 2) ** 2

_HIGHEST = lax.Precision.HIGHEST


def _gaussian_1d(size, sigma):
    coords = np.arange(size, dtype=np.float32) - size // 2
    g = np.exp(-(coords ** 2) / (2.0 * sigma ** 2))
    return (g / g.sum()).astype(np.float32)


_W1D = _gaussian_1d(WINDOW_SIZE, SIGMA)


def _conv_band(n):
    """(n, n) matrix M with M[t, s] = w[s - t + PAD] for |s - t| <= PAD.

    For a length-n signal x, (M @ x)[t] = sum_v w[v] * x_zeropad[t + v - PAD],
    i.e. "same"-size 1-D correlation with zero padding -- exactly the edge
    semantics of F.conv2d(padding=window_size // 2), with no padded copy.
    """
    idx = np.arange(n)
    d = idx[None, :] - idx[:, None]          # s - t
    m = np.zeros((n, n), np.float32)
    mask = np.abs(d) <= PAD
    m[mask] = _W1D[(d + PAD)[mask]]
    return m


def _make_ssim_kernel(H, W):
    def kernel(x1_ref, x2_ref, bh_ref, bv_ref, out_ref):
        # One (H, W) channel slice per grid step; cast happens in-kernel so
        # the image is read from HBM exactly once in its native dtype.
        x1 = x1_ref[0, 0].astype(jnp.float32)          # (H, W)
        x2 = x2_ref[0, 0].astype(jnp.float32)          # (H, W)
        bh = bh_ref[...]                                # (W, W) column band
        bv = bv_ref[...]                                # (H, H) row band

        def gconv(x):
            # Separable zero-padded "same" Gaussian blur as two MXU matmuls.
            # (Mosaic dot lowering supports only DEFAULT/HIGHEST contract
            # precision; HIGHEST keeps us within the 1e-4 tolerance.)
            th = jnp.dot(x, bh, precision=_HIGHEST,
                         preferred_element_type=jnp.float32)
            return jnp.dot(bv, th, precision=_HIGHEST,
                           preferred_element_type=jnp.float32)

        # Five independent blurred quantities: no slices, no concatenates --
        # each dot reads/writes its own VMEM buffer and bh/bv stay staged.
        mu1 = gconv(x1)
        mu2 = gconv(x2)
        e11 = gconv(x1 * x1)
        e22 = gconv(x2 * x2)
        e12 = gconv(x1 * x2)

        mu1_sq = mu1 * mu1
        mu2_sq = mu2 * mu2
        mu1_mu2 = mu1 * mu2
        sigma1_sq = e11 - mu1_sq
        sigma2_sq = e22 - mu2_sq
        sigma12 = e12 - mu1_mu2

        num = (2.0 * mu1_mu2 + C1) * (2.0 * sigma12 + C2)
        den = (mu1_sq + mu2_sq + C1) * (sigma1_sq + sigma2_sq + C2)
        ssim_map = num / den                            # (H, W)

        # Single fused spatial-mean reduction + one scalar store per step.
        out_ref[...] = jnp.mean(ssim_map).reshape(1, 1, 1, 1)

    return kernel


def _vmem_limit_bytes():
    """Generation-aware scoped-VMEM limit: ~3/4 of physical capacity."""
    try:
        cap = pltpu.get_tpu_info().vmem_capacity_bytes
        return int(cap * 3 // 4)        # ~48 MiB on v7x, ~96 MiB on v5e/v6e
    except Exception:
        return 32 * 1024 * 1024         # conservative, known-good fallback


def ssim_loss(img1, img2, size_average=True):
    """Pallas equivalent of SSIM().forward(img1, img2) == 1 - ssim(...)."""
    B, C, H, W = img1.shape
    bh = jnp.asarray(_conv_band(W).T)   # x @ bh  == horizontal pass
    bv = jnp.asarray(_conv_band(H))     # bv @ x  == vertical pass

    kernel = _make_ssim_kernel(H, W)
    per_bc = pl.pallas_call(
        kernel,
        out_shape=jax.ShapeDtypeStruct((B, C, 1, 1), jnp.float32),
        grid_spec=pltpu.PrefetchScalarGridSpec(
            num_scalar_prefetch=0,
            grid=(B, C),
            in_specs=[
                pl.BlockSpec((1, 1, H, W), lambda b, c: (b, c, 0, 0)),
                pl.BlockSpec((1, 1, H, W), lambda b, c: (b, c, 0, 0)),
                # Constant index maps -> DMA'd once, never re-fetched.
                pl.BlockSpec((W, W), lambda b, c: (0, 0)),
                pl.BlockSpec((H, H), lambda b, c: (0, 0)),
            ],
            out_specs=pl.BlockSpec((1, 1, 1, 1), lambda b, c: (b, c, 0, 0)),
        ),
        compiler_params=pltpu.CompilerParams(
            # Two parallel axes keep both v7x TensorCores busy even at B == 1.
            dimension_semantics=("parallel", "parallel"),
            vmem_limit_bytes=_vmem_limit_bytes()),
    )(img1, img2, bh, bv)

    per_bc = per_bc[:, :, 0, 0]          # (B, C): spatial-mean SSIM per slice
    if size_average:
        ssim_val = per_bc.mean()         # == ssim_map.mean()
    else:
        ssim_val = per_bc.mean(axis=1)   # == ssim_map.mean(1).mean(1).mean(1)
    return 1.0 - ssim_val


def _ssim_loss_ref(img1, img2, size_average=True):
    """Pure-JAX reference mirroring the PyTorch module exactly."""
    B, C, H, W = img1.shape
    w1d = jnp.asarray(_W1D)
    w2d = jnp.outer(w1d, w1d)
    window = jnp.broadcast_to(w2d, (C, 1, WINDOW_SIZE, WINDOW_SIZE))

    def conv(x):
        return lax.conv_general_dilated(
            x.astype(jnp.float32), window, (1, 1),
            padding=[(PAD, PAD), (PAD, PAD)],
            dimension_numbers=("NCHW", "OIHW", "NCHW"),
            feature_group_count=C,
            precision=_HIGHEST)

    mu1, mu2 = conv(img1), conv(img2)
    mu1_sq, mu2_sq, mu1_mu2 = mu1 * mu1, mu2 * mu2, mu1 * mu2
    sigma1_sq = conv(img1 * img1) - mu1_sq
    sigma2_sq = conv(img2 * img2) - mu2_sq
    sigma12 = conv(img1 * img2) - mu1_mu2
    ssim_map = ((2 * mu1_mu2 + C1) * (2 * sigma12 + C2)) / (
        (mu1_sq + mu2_sq + C1) * (sigma1_sq + sigma2_sq + C2))
    if size_average:
        return 1.0 - ssim_map.mean()
    return 1.0 - ssim_map.mean(axis=(1, 2, 3))


if __name__ == "__main__":
    key = jax.random.PRNGKey(0)
    k1, k2 = jax.random.split(key)
    B, C, H, W = 2, 4, 16, 16
    img1 = jax.random.uniform(k1, (B, C, H, W), dtype=jnp.float32)
    img2 = jax.random.uniform(k2, (B, C, H, W), dtype=jnp.float32)

    out = jax.block_until_ready(ssim_loss(img1, img2, size_average=True))
    ref = jax.block_until_ready(_ssim_loss_ref(img1, img2, size_average=True))
    np.testing.assert_allclose(np.asarray(out), np.asarray(ref),
                               rtol=1e-4, atol=1e-4)

    out_b = jax.block_until_ready(ssim_loss(img1, img2, size_average=False))
    ref_b = jax.block_until_ready(_ssim_loss_ref(img1, img2, size_average=False))
    np.testing.assert_allclose(np.asarray(out_b), np.asarray(ref_b),
                               rtol=1e-4, atol=1e-4)

    print("KERNEL_OK")
</pallas_src>

<mosaic_0001>
module attributes {stable_mosaic.version = 11 : i64} {
  func.func @kernel(%arg0: i32, %arg1: i32, %arg2: memref<1x1x16x16xf32, #tpu.memory_space<vmem>>, %arg3: memref<1x1x16x16xf32, #tpu.memory_space<vmem>>, %arg4: memref<16x16xf32, #tpu.memory_space<vmem>>, %arg5: memref<16x16xf32, #tpu.memory_space<vmem>>, %arg6: memref<1x1x1x1xf32, #tpu.memory_space<vmem>>) attributes {dimension_semantics = [#tpu.dimension_semantics<parallel>, #tpu.dimension_semantics<parallel>], iteration_bounds = array<i64: 2, 4>, scalar_prefetch = 0 : i64, scratch_operands = 0 : i64, tpu.core_type = #tpu.core_type<tc>, window_params = [{transform_indices = @transform_0, window_bounds = array<i64: 1, 1, 16, 16>}, {transform_indices = @transform_1, window_bounds = array<i64: 1, 1, 16, 16>}, {pipeline_mode = #tpu.pipeline_mode<synchronous>, transform_indices = @transform_2, window_bounds = array<i64: 16, 16>}, {pipeline_mode = #tpu.pipeline_mode<synchronous>, transform_indices = @transform_3, window_bounds = array<i64: 16, 16>}, {transform_indices = @transform_4, window_bounds = array<i64: 1, 1, 1, 1>}]} {
    %c0 = arith.constant 0 : index
    %c0_0 = arith.constant 0 : index
    %c0_1 = arith.constant 0 : index
    %c0_2 = arith.constant 0 : index
    %0 = vector.load %arg2[%c0, %c0_0, %c0_1, %c0_2] : memref<1x1x16x16xf32, #tpu.memory_space<vmem>>, vector<1x1x16x16xf32>
    %1 = vector.shape_cast %0 : vector<1x1x16x16xf32> to vector<16x16xf32>
    %c0_3 = arith.constant 0 : index
    %c0_4 = arith.constant 0 : index
    %c0_5 = arith.constant 0 : index
    %c0_6 = arith.constant 0 : index
    %2 = vector.load %arg3[%c0_3, %c0_4, %c0_5, %c0_6] : memref<1x1x16x16xf32, #tpu.memory_space<vmem>>, vector<1x1x16x16xf32>
    %3 = vector.shape_cast %2 : vector<1x1x16x16xf32> to vector<16x16xf32>
    %c0_7 = arith.constant 0 : index
    %c0_8 = arith.constant 0 : index
    %4 = vector.load %arg4[%c0_7, %c0_8] : memref<16x16xf32, #tpu.memory_space<vmem>>, vector<16x16xf32>
    %c0_9 = arith.constant 0 : index
    %c0_10 = arith.constant 0 : index
    %5 = vector.load %arg5[%c0_9, %c0_10] : memref<16x16xf32, #tpu.memory_space<vmem>>, vector<16x16xf32>
    %cst = arith.constant dense<0.000000e+00> : vector<16x16xf32>
    %6 = tpu.matmul %1, %4, %cst {dimension_numbers = #tpu.dot_dimension_numbers<[1], [0], [0], [1], [0, 0, 1, 1], [], []>, precision = #tpu.contract_precision<fp32>} : vector<16x16xf32>, vector<16x16xf32>, vector<16x16xf32> -> vector<16x16xf32>
    %cst_11 = arith.constant dense<0.000000e+00> : vector<16x16xf32>
    %7 = tpu.matmul %5, %6, %cst_11 {dimension_numbers = #tpu.dot_dimension_numbers<[1], [0], [0], [1], [0, 0, 1, 1], [], []>, precision = #tpu.contract_precision<fp32>} : vector<16x16xf32>, vector<16x16xf32>, vector<16x16xf32> -> vector<16x16xf32>
    %cst_12 = arith.constant dense<0.000000e+00> : vector<16x16xf32>
    %8 = tpu.matmul %3, %4, %cst_12 {dimension_numbers = #tpu.dot_dimension_numbers<[1], [0], [0], [1], [0, 0, 1, 1], [], []>, precision = #tpu.contract_precision<fp32>} : vector<16x16xf32>, vector<16x16xf32>, vector<16x16xf32> -> vector<16x16xf32>
    %cst_13 = arith.constant dense<0.000000e+00> : vector<16x16xf32>
    %9 = tpu.matmul %5, %8, %cst_13 {dimension_numbers = #tpu.dot_dimension_numbers<[1], [0], [0], [1], [0, 0, 1, 1], [], []>, precision = #tpu.contract_precision<fp32>} : vector<16x16xf32>, vector<16x16xf32>, vector<16x16xf32> -> vector<16x16xf32>
    %10 = arith.mulf %1, %1 : vector<16x16xf32>
    %cst_14 = arith.constant dense<0.000000e+00> : vector<16x16xf32>
    %11 = tpu.matmul %10, %4, %cst_14 {dimension_numbers = #tpu.dot_dimension_numbers<[1], [0], [0], [1], [0, 0, 1, 1], [], []>, precision = #tpu.contract_precision<fp32>} : vector<16x16xf32>, vector<16x16xf32>, vector<16x16xf32> -> vector<16x16xf32>
    %cst_15 = arith.constant dense<0.000000e+00> : vector<16x16xf32>
    %12 = tpu.matmul %5, %11, %cst_15 {dimension_numbers = #tpu.dot_dimension_numbers<[1], [0], [0], [1], [0, 0, 1, 1], [], []>, precision = #tpu.contract_precision<fp32>} : vector<16x16xf32>, vector<16x16xf32>, vector<16x16xf32> -> vector<16x16xf32>
    %13 = arith.mulf %3, %3 : vector<16x16xf32>
    %cst_16 = arith.constant dense<0.000000e+00> : vector<16x16xf32>
    %14 = tpu.matmul %13, %4, %cst_16 {dimension_numbers = #tpu.dot_dimension_numbers<[1], [0], [0], [1], [0, 0, 1, 1], [], []>, precision = #tpu.contract_precision<fp32>} : vector<16x16xf32>, vector<16x16xf32>, vector<16x16xf32> -> vector<16x16xf32>
    %cst_17 = arith.constant dense<0.000000e+00> : vector<16x16xf32>
    %15 = tpu.matmul %5, %14, %cst_17 {dimension_numbers = #tpu.dot_dimension_numbers<[1], [0], [0], [1], [0, 0, 1, 1], [], []>, precision = #tpu.contract_precision<fp32>} : vector<16x16xf32>, vector<16x16xf32>, vector<16x16xf32> -> vector<16x16xf32>
    %16 = arith.mulf %1, %3 : vector<16x16xf32>
    %cst_18 = arith.constant dense<0.000000e+00> : vector<16x16xf32>
    %17 = tpu.matmul %16, %4, %cst_18 {dimension_numbers = #tpu.dot_dimension_numbers<[1], [0], [0], [1], [0, 0, 1, 1], [], []>, precision = #tpu.contract_precision<fp32>} : vector<16x16xf32>, vector<16x16xf32>, vector<16x16xf32> -> vector<16x16xf32>
    %cst_19 = arith.constant dense<0.000000e+00> : vector<16x16xf32>
    %18 = tpu.matmul %5, %17, %cst_19 {dimension_numbers = #tpu.dot_dimension_numbers<[1], [0], [0], [1], [0, 0, 1, 1], [], []>, precision = #tpu.contract_precision<fp32>} : vector<16x16xf32>, vector<16x16xf32>, vector<16x16xf32> -> vector<16x16xf32>
    %19 = arith.mulf %7, %7 : vector<16x16xf32>
    %20 = arith.mulf %9, %9 : vector<16x16xf32>
    %21 = arith.mulf %7, %9 : vector<16x16xf32>
    %22 = arith.subf %12, %19 : vector<16x16xf32>
    %23 = arith.subf %15, %20 : vector<16x16xf32>
    %24 = arith.subf %18, %21 : vector<16x16xf32>
    %cst_20 = arith.constant 2.000000e+00 : f32
    %25 = vector.broadcast %cst_20 : f32 to vector<16x16xf32>
    %26 = arith.mulf %25, %21 : vector<16x16xf32>
    %cst_21 = arith.constant 4.000000e-04 : f32
    %27 = vector.broadcast %cst_21 : f32 to vector<16x16xf32>
    %28 = arith.addf %26, %27 : vector<16x16xf32>
    %cst_22 = arith.constant 2.000000e+00 : f32
    %29 = vector.broadcast %cst_22 : f32 to vector<16x16xf32>
    %30 = arith.mulf %29, %24 : vector<16x16xf32>
    %cst_23 = arith.constant 3.600000e-03 : f32
    %31 = vector.broadcast %cst_23 : f32 to vector<16x16xf32>
    %32 = arith.addf %30, %31 : vector<16x16xf32>
    %33 = arith.mulf %28, %32 : vector<16x16xf32>
    %34 = arith.addf %19, %20 : vector<16x16xf32>
    %cst_24 = arith.constant 4.000000e-04 : f32
    %35 = vector.broadcast %cst_24 : f32 to vector<16x16xf32>
    %36 = arith.addf %34, %35 : vector<16x16xf32>
    %37 = arith.addf %22, %23 : vector<16x16xf32>
    %cst_25 = arith.constant 3.600000e-03 : f32
    %38 = vector.broadcast %cst_25 : f32 to vector<16x16xf32>
    %39 = arith.addf %37, %38 : vector<16x16xf32>
    %40 = arith.mulf %36, %39 : vector<16x16xf32>
    %41 = arith.divf %33, %40 : vector<16x16xf32>
    %42 = vector.shape_cast %41 : vector<16x16xf32> to vector<1x16x16xf32>
    %cst_26 = arith.constant dense<0.000000e+00> : vector<1xf32>
    %43 = vector.multi_reduction <add>, %42, %cst_26 [1, 2] : vector<1x16x16xf32> to vector<1xf32>
    %44 = vector.shape_cast %43 : vector<1xf32> to vector<1x1x1xf32>
    %45 = vector.extract %44[0, 0, 0] : f32 from vector<1x1x1xf32>
    %cst_27 = arith.constant 2.560000e+02 : f32
    %46 = arith.divf %45, %cst_27 : f32
    %47 = vector.broadcast %46 : f32 to vector<1x1x1x1xf32>
    %c0_28 = arith.constant 0 : index
    %c0_29 = arith.constant 0 : index
    %c0_30 = arith.constant 0 : index
    %c0_31 = arith.constant 0 : index
    %48 = vector.load %arg6[%c0_28, %c0_29, %c0_30, %c0_31] : memref<1x1x1x1xf32, #tpu.memory_space<vmem>>, vector<1x1x1x1xf32>
    tpu.vector_store %arg6[%c0_28, %c0_29, %c0_30, %c0_31], %47 {strides = array<i32>} : memref<1x1x1x1xf32, #tpu.memory_space<vmem>>, vector<1x1x1x1xf32>,
    return
  }
  func.func @transform_0(%arg0: i32, %arg1: i32) -> (i32, i32, i32, i32) {
    %c0_i32 = arith.constant 0 : i32
    %c0_i32_0 = arith.constant 0 : i32
    %c0_i32_1 = arith.constant 0 : i32
    return %arg0, %arg1, %c0_i32, %c0_i32_0 : i32, i32, i32, i32
  }
  func.func @transform_1(%arg0: i32, %arg1: i32) -> (i32, i32, i32, i32) {
    %c0_i32 = arith.constant 0 : i32
    %c0_i32_0 = arith.constant 0 : i32
    %c0_i32_1 = arith.constant 0 : i32
    return %arg0, %arg1, %c0_i32, %c0_i32_0 : i32, i32, i32, i32
  }
  func.func @transform_2(%arg0: i32, %arg1: i32) -> (i32, i32) {
    %c0_i32 = arith.constant 0 : i32
    %c0_i32_0 = arith.constant 0 : i32
    %c0_i32_1 = arith.constant 0 : i32
    return %c0_i32, %c0_i32_0 : i32, i32
  }
  func.func @transform_3(%arg0: i32, %arg1: i32) -> (i32, i32) {
    %c0_i32 = arith.constant 0 : i32
    %c0_i32_0 = arith.constant 0 : i32
    %c0_i32_1 = arith.constant 0 : i32
    return %c0_i32, %c0_i32_0 : i32, i32
  }
  func.func @transform_4(%arg0: i32, %arg1: i32) -> (i32, i32, i32, i32) {
    %c0_i32 = arith.constant 0 : i32
    %c0_i32_0 = arith.constant 0 : i32
    %c0_i32_1 = arith.constant 0 : i32
    return %arg0, %arg1, %c0_i32, %c0_i32_0 : i32, i32, i32, i32
  }
}

</mosaic_0001>

<llo_original>
// kernel: tpu_custom_call.1
$region0: #{tpu_custom_call.1}
  #allocation0 [shape = 'u32[]', space=smem, size = 0x4, offset = 0x4, fixed_abs, tag = 'smem constant byte address 0x4 - core index']
  #allocation1 [shape = 'u32[144,128]{1,0:T(1,128)}', space=vmem, size = 0x12000, scoped, tag = 'internal scratch']
  %s0 = inlined_call_operand.hbm [shape: f32[2,4,16,16], index: 0, kind: input, shape index: {}]
  %s1 = inlined_call_operand.hbm [shape: f32[2,4,16,16], index: 1, kind: input, shape index: {}]
  %s2 = inlined_call_operand.hbm [shape: f32[16,16], index: 2, kind: input, shape index: {}]
  %s3 = inlined_call_operand.hbm [shape: f32[16,16], index: 3, kind: input, shape index: {}]
  %s4 = inlined_call_operand.vmem [shape: f32[2,4,1,1], index: 4, kind: output, shape index: {}]
  %s5 = sld [smem:[#allocation0]]
  $region65: #{tpu_custom_call.1} parent=0
    _
  %s7 = ssub.s32 1, %s5
  %s8 = scalar_select 0, %s7, %s5
  $region1: #{tpu_custom_call.1} parent=0
    #allocation2 [shape = 'u8[16384]{0}', space=vmem, size = 0x4000, scoped, tag = 'input window, operand 0']
    #allocation3 [shape = 's32[2]{0}', space=sflag, size = 0x8, scoped, tag = 'scoped memory for tpu_custom_call.1']
    #allocation4 [shape = 'u8[16384]{0}', space=vmem, size = 0x4000, scoped, tag = 'input window, operand 1']
    #allocation5 [shape = 's32[2]{0}', space=sflag, size = 0x8, scoped, tag = 'scoped memory for tpu_custom_call.1']
    #allocation6 [shape = 'u8[8192]{0}', space=vmem, size = 0x2000, scoped, tag = 'input window, operand 2, single buffered']
    #allocation7 [shape = 'u8[8192]{0}', space=vmem, size = 0x2000, scoped, tag = 'input window, operand 3, single buffered']
    #allocation8 [shape = 's32[1]{0}', space=sflag, size = 0x4, scoped, tag = 'scoped memory for tpu_custom_call.1']
    %9 = vsyncpa [#allocation3], 0
    %s10 = scalar_lea.sflag [#allocation3], 1
    %11 = vsyncpa %s10, 0
    %12 = vsyncpa [#allocation5], 0
    %s13 = scalar_lea.sflag [#allocation5], 1
    %14 = vsyncpa %s13, 0
    %15 = vsyncpa [#allocation8], 0
    loop: start=0, step=1, limit=10
    $region2: #{tpu_custom_call.1} parent=1 // loop_pre_header
      _
    $region3: #{tpu_custom_call.1} parent=1 // loop_header
      %s17 = sphi 0, %s21
      %p18 = scmp.ge.s32.totalorder %s17, 10
      %s24 = sphi 0, %s36
      %s25 = sphi 0, %s32
      %s26 = sphi 0, %s24
      %s27 = sphi 0, %s25
      %s28 = sphi 0, %s26
      %s29 = sphi 0, %s27
      %s41 = sphi 0, %s43
      %s44 = sphi 0, %s41
      %s45 = sphi 0, %s44
      %s61 = sphi 0, %s45
      %s69 = sphi 0, %s71
      %s72 = sphi 0, %s69
      %s73 = sphi 0, %s72
      %s89 = sphi 0, %s73
      %s93 = sphi 0, %s93
      %s95 = sphi 0, %s93
      %s96 = sphi 0, %s95
      %s110 = sphi 0, %s96
      %s114 = sphi 0, %s114
      %s116 = sphi 0, %s114
      %s117 = sphi 0, %s116
      %s131 = sphi 0, %s117
      %s139 = sphi 0, %s141
      %s142 = sphi 0, %s139
      %s143 = sphi 0, %s142
      %s159 = sphi 0, %s143
    $region4: #{tpu_custom_call.1} parent=1 // loop_header_branch
      %20 = sbr.rel (%p18) target = $region8
    $region5: #{tpu_custom_call.1} parent=1 // loop_body
      %s22 = ssub.s32 %s17, 1
      %s23 = ssub.s32 %s17, 2
      %s30 = sadd.s32 1, %s25
      %p31 = scmp.ge.s32.totalorder %s30, 4
      %s32 = scalar_select %p31, 0, %s30
      %s33 = sadd.s32 1, %s24
      %s34 = scalar_select %p31, %s33, %s24
      %p35 = scmp.ge.s32.totalorder %s34, 2
      %s36 = scalar_select %p35, 0, %s34
      %s37 = ssub.s32 %s24, %s36
      %s38 = ssub.s32 %s25, %s32
      %s39 = sor.u32 %s37, %s38
      %p40 = scmp.eq.s32.totalorder %s39, 0
      %s42 = sadd.s32 %s41, 1
      %s43 = scalar_select %p40, %s41, %s42
      %p46 = pneg %p40
      %p47 = scmp.eq.s32.totalorder %s17, 7
      %p48 = por %p46, %p47
      %p49 = scmp.ne.s32.totalorder %s41, %s44
      %p50 = scmp.eq.s32.totalorder %s17, 0
      %p51 = por %p49, %p50
      %p52 = scmp.ne.s32.totalorder %s41, %s44
      %p53 = scmp.eq.s32.totalorder %s22, 7
      %p54 = por %p52, %p53
      %p55 = scmp.ne.s32.totalorder %s44, %s45
      %p56 = scmp.eq.s32.totalorder %s22, 0
      %p57 = por %p55, %p56
      %p58 = scmp.ne.s32.totalorder %s44, %s45
      %p59 = scmp.eq.s32.totalorder %s23, 7
      %p60 = por %p58, %p59
      %p62 = scmp.ne.s32.totalorder %s45, %s61
      %p63 = scmp.eq.s32.totalorder %s23, 0
      %p64 = por %p62, %p63
      %s65 = ssub.s32 %s24, %s36
      %s66 = ssub.s32 %s25, %s32
      %s67 = sor.u32 %s65, %s66
      %p68 = scmp.eq.s32.totalorder %s67, 0
      %s70 = sadd.s32 %s69, 1
      %s71 = scalar_select %p68, %s69, %s70
      %p74 = pneg %p68
      %p75 = scmp.eq.s32.totalorder %s17, 7
      %p76 = por %p74, %p75
      %p77 = scmp.ne.s32.totalorder %s69, %s72
      %p78 = scmp.eq.s32.totalorder %s17, 0
      %p79 = por %p77, %p78
      %p80 = scmp.ne.s32.totalorder %s69, %s72
      %p81 = scmp.eq.s32.totalorder %s22, 7
      %p82 = por %p80, %p81
      %p83 = scmp.ne.s32.totalorder %s72, %s73
      %p84 = scmp.eq.s32.totalorder %s22, 0
      %p85 = por %p83, %p84
      %p86 = scmp.ne.s32.totalorder %s72, %s73
      %p87 = scmp.eq.s32.totalorder %s23, 7
      %p88 = por %p86, %p87
      %p90 = scmp.ne.s32.totalorder %s73, %s89
      %p91 = scmp.eq.s32.totalorder %s23, 0
      %p92 = por %p90, %p91
      %s94 = sadd.s32 %s93, 1
      %p97 = scmp.eq.s32.totalorder %s17, 7
      %p98 = scmp.ne.s32.totalorder %s93, %s95
      %p99 = scmp.eq.s32.totalorder %s17, 0
      %p100 = por %p98, %p99
      %p101 = scmp.ne.s32.totalorder %s93, %s95
      %p102 = scmp.eq.s32.totalorder %s22, 7
      %p103 = por %p101, %p102
      %p104 = scmp.ne.s32.totalorder %s95, %s96
      %p105 = scmp.eq.s32.totalorder %s22, 0
      %p106 = por %p104, %p105
      %p107 = scmp.ne.s32.totalorder %s95, %s96
      %p108 = scmp.eq.s32.totalorder %s23, 7
      %p109 = por %p107, %p108
      %p111 = scmp.ne.s32.totalorder %s96, %s110
      %p112 = scmp.eq.s32.totalorder %s23, 0
      %p113 = por %p111, %p112
      %s115 = sadd.s32 %s114, 1
      %p118 = scmp.eq.s32.totalorder %s17, 7
      %p119 = scmp.ne.s32.totalorder %s114, %s116
      %p120 = scmp.eq.s32.totalorder %s17, 0
      %p121 = por %p119, %p120
      %p122 = scmp.ne.s32.totalorder %s114, %s116
      %p123 = scmp.eq.s32.totalorder %s22, 7
      %p124 = por %p122, %p123
      %p125 = scmp.ne.s32.totalorder %s116, %s117
      %p126 = scmp.eq.s32.totalorder %s22, 0
      %p127 = por %p125, %p126
      %p128 = scmp.ne.s32.totalorder %s116, %s117
      %p129 = scmp.eq.s32.totalorder %s23, 7
      %p130 = por %p128, %p129
      %p132 = scmp.ne.s32.totalorder %s117, %s131
      %p133 = scmp.eq.s32.totalorder %s23, 0
      %p134 = por %p132, %p133
      %s135 = ssub.s32 %s24, %s36
      %s136 = ssub.s32 %s25, %s32
      %s137 = sor.u32 %s135, %s136
      %p138 = scmp.eq.s32.totalorder %s137, 0
      %s140 = sadd.s32 %s139, 1
      %s141 = scalar_select %p138, %s139, %s140
      %p144 = pneg %p138
      %p145 = scmp.eq.s32.totalorder %s17, 7
      %p146 = por %p144, %p145
      %p147 = scmp.ne.s32.totalorder %s139, %s142
      %p148 = scmp.eq.s32.totalorder %s17, 0
      %p149 = por %p147, %p148
      %p150 = scmp.ne.s32.totalorder %s139, %s142
      %p151 = scmp.eq.s32.totalorder %s22, 7
      %p152 = por %p150, %p151
      %p153 = scmp.ne.s32.totalorder %s142, %s143
      %p154 = scmp.eq.s32.totalorder %s22, 0
      %p155 = por %p153, %p154
      %p156 = scmp.ne.s32.totalorder %s142, %s143
      %p157 = scmp.eq.s32.totalorder %s23, 7
      %p158 = por %p156, %p157
      %p160 = scmp.ne.s32.totalorder %s143, %s159
      %p161 = scmp.eq.s32.totalorder %s23, 0
      %p162 = por %p160, %p161
      %p163 = scmp.le.s32.totalorder 1, %s17
      %p164 = scmp.lt.s32.totalorder %s17, 9
      %p165 = pnand %p163, %p164
      %p166 = pneg %p165
      // Predicated region
      $region9: #{tpu_custom_call.1} parent=5 // pred_check
        _
      $region10: #{tpu_custom_call.1} parent=5 // pred_check_branch
        %168 = sbr.rel (%p165) target = $region12
      $region11: #{tpu_custom_call.1} parent=5 // pred_region
        %s169 = ssub.s32 %s17, 1
        // Predicated region
        $region13: #{tpu_custom_call.1} parent=11 // pred_check
          %p170 = pneg %p106
        $region14: #{tpu_custom_call.1} parent=11 // pred_check_branch
          %172 = sbr.rel (%p170) target = $region16
        $region15: #{tpu_custom_call.1} parent=11 // pred_region
          %s174 = ssub.s32 256, 256
          %175 = vsyncadd [#allocation5], %s174
          %s176 = sshll.u32 [#allocation6], 4
          %s177 = int_to_ptr.vmem [resolvable:$true] %s176
          %182 = dma.hbm_to_vmem [thread:$0]  %s2, 256, %s177, [#allocation5], 128, 128, 8
        $region16: #{tpu_custom_call.1} parent=11 // pred_fallthru
          _
        // Predicated region
        $region17: #{tpu_custom_call.1} parent=11 // pred_check
          %p183 = pneg %p127
        $region18: #{tpu_custom_call.1} parent=11 // pred_check_branch
          %185 = sbr.rel (%p183) target = $region20
        $region19: #{tpu_custom_call.1} parent=11 // pred_region
          %s187 = ssub.s32 256, 256
          %188 = vsyncadd [#allocation8], %s187
          %s189 = sshll.u32 [#allocation7], 4
          %s190 = int_to_ptr.vmem [resolvable:$true] %s189
          %195 = dma.hbm_to_vmem [thread:$0]  %s3, 256, %s190, [#allocation8], 128, 128, 8
        $region20: #{tpu_custom_call.1} parent=11 // pred_fallthru
          _
      $region12: #{tpu_custom_call.1} parent=5 // pred_fallthru
        _
      %p196 = scmp.lt.s32.totalorder %s17, 8
      // Predicated region
      $region21: #{tpu_custom_call.1} parent=5 // pred_check
        %p197 = pneg %p196
      $region22: #{tpu_custom_call.1} parent=5 // pred_check_branch
        %199 = sbr.rel (%p197) target = $region24
      $region23: #{tpu_custom_call.1} parent=5 // pred_region
        // Predicated region
        $region25: #{tpu_custom_call.1} parent=23 // pred_check
          %p200 = pneg %p51
        $region26: #{tpu_custom_call.1} parent=23 // pred_check_branch
          %202 = sbr.rel (%p200) target = $region28
        $region27: #{tpu_custom_call.1} parent=23 // pred_region
          %s203 = sand.u32 %s41, 1
          %s204 = scalar_lea.sflag [#allocation3], %s203
          %s205 = sand.u32 %s41, 1
          %s206 = smul.addr %s205, 16
          %s207 = scalar_lea.vmem [#allocation2], %s206
          %s209 = ssub.s32 256, 256
          %210 = vsyncadd %s204, %s209
          %s211 = smul.addr %s25, 2
          %s212 = smul.addr %s24, 8
          %s213 = sadd.s32 %s211, %s212
          %s214 = smul.addr %s213, 128
          %s215 = scalar_lea.hbm %s0, %s214
          %s216 = sshll.u32 %s207, 4
          %s217 = int_to_ptr.vmem [resolvable:$true] %s216
          %222 = dma.hbm_to_vmem [thread:$0]  %s215, 256, %s217, %s204, 128, 128, 8
        $region28: #{tpu_custom_call.1} parent=23 // pred_fallthru
          _
        // Predicated region
        $region29: #{tpu_custom_call.1} parent=23 // pred_check
          %p223 = pneg %p79
        $region30: #{tpu_custom_call.1} parent=23 // pred_check_branch
          %225 = sbr.rel (%p223) target = $region32
        $region31: #{tpu_custom_call.1} parent=23 // pred_region
          %s226 = sand.u32 %s17, 1
          %s227 = scalar_lea.sflag [#allocation5], %s226
          %s228 = sand.u32 %s69, 1
          %s229 = smul.addr %s228, 16
          %s230 = scalar_lea.vmem [#allocation4], %s229
          %s232 = ssub.s32 256, 256
          %233 = vsyncadd %s227, %s232
          %s234 = smul.addr %s25, 2
          %s235 = smul.addr %s24, 8
          %s236 = sadd.s32 %s234, %s235
          %s237 = smul.addr %s236, 128
          %s238 = scalar_lea.hbm %s1, %s237
          %s239 = sshll.u32 %s230, 4
          %s240 = int_to_ptr.vmem [resolvable:$true] %s239
          %245 = dma.hbm_to_vmem [thread:$0]  %s238, 256, %s240, %s227, 128, 128, 8
        $region32: #{tpu_custom_call.1} parent=23 // pred_fallthru
          _
      $region24: #{tpu_custom_call.1} parent=5 // pred_fallthru
        _
      %p246 = scmp.le.s32.totalorder 1, %s17
      %p247 = scmp.lt.s32.totalorder %s17, 9
      %p248 = pnand %p246, %p247
      %p249 = pneg %p248
      // Predicated region
      $region33: #{tpu_custom_call.1} parent=5 // pred_check
        _
      $region34: #{tpu_custom_call.1} parent=5 // pred_check_branch
        %251 = sbr.rel (%p248) target = $region36
      $region35: #{tpu_custom_call.1} parent=5 // pred_region
        %s252 = ssub.s32 %s17, 1
        %s253 = sand.u32 %s44, 1
        %s254 = scalar_lea.sflag [#allocation3], %s253
        %s255 = sand.u32 %s44, 1
        %s256 = smul.addr %s255, 16
        %s257 = scalar_lea.vmem [#allocation2], %s256
        // Predicated region
        $region37: #{tpu_custom_call.1} parent=35 // pred_check
          %p258 = pneg %p57
        $region38: #{tpu_custom_call.1} parent=35 // pred_check_branch
          %260 = sbr.rel (%p258) target = $region40
        $region39: #{tpu_custom_call.1} parent=35 // pred_region
          %261 = dma.done %s254, 256
        $region40: #{tpu_custom_call.1} parent=35 // pred_fallthru
          _
        %s262 = sand.u32 %s22, 1
        %s263 = scalar_lea.sflag [#allocation5], %s262
        %s264 = sand.u32 %s72, 1
        %s265 = smul.addr %s264, 16
        %s266 = scalar_lea.vmem [#allocation4], %s265
        // Predicated region
        $region41: #{tpu_custom_call.1} parent=35 // pred_check
          %p267 = pneg %p85
        $region42: #{tpu_custom_call.1} parent=35 // pred_check_branch
          %269 = sbr.rel (%p267) target = $region44
        $region43: #{tpu_custom_call.1} parent=35 // pred_region
          %270 = dma.done %s263, 256
        $region44: #{tpu_custom_call.1} parent=35 // pred_fallthru
          _
        // Predicated region
        $region45: #{tpu_custom_call.1} parent=35 // pred_check
          %p271 = pneg %p106
        $region46: #{tpu_custom_call.1} parent=35 // pred_check_branch
          %273 = sbr.rel (%p271) target = $region48
        $region47: #{tpu_custom_call.1} parent=35 // pred_region
          %274 = dma.done [#allocation5], 256
        $region48: #{tpu_custom_call.1} parent=35 // pred_fallthru
          _
        // Predicated region
        $region49: #{tpu_custom_call.1} parent=35 // pred_check
          %p275 = pneg %p127
        $region50: #{tpu_custom_call.1} parent=35 // pred_check_branch
          %277 = sbr.rel (%p275) target = $region52
        $region51: #{tpu_custom_call.1} parent=35 // pred_region
          %278 = dma.done [#allocation8], 256
        $region52: #{tpu_custom_call.1} parent=35 // pred_fallthru
          _
        %s279 = sand.u32 %s44, 1
        %s280 = scalar_lea.sflag [#allocation3], %s279
        %s281 = sand.u32 %s44, 1
        %s282 = smul.addr %s281, 16
        %s283 = scalar_lea.vmem [#allocation2], %s282
        %p284 = pneg %p57
        %p285 = pneg %p54
        %s286 = sand.u32 %s22, 1
        %s287 = scalar_lea.sflag [#allocation5], %s286
        %s288 = sand.u32 %s72, 1
        %s289 = smul.addr %s288, 16
        %s290 = scalar_lea.vmem [#allocation4], %s289
        %p291 = pneg %p85
        %p292 = pneg %p82
        %p293 = pneg %p106
        %p294 = pneg %p103
        %p295 = pneg %p127
        %p296 = pneg %p124
        %p297 = pneg %p155
        %p298 = pneg %p152
        %p299 = scmp.lt.s32.totalorder %s26, 1
        %s300 = scalar_select %p299, %s26, 1
        %p301 = scmp.lt.s32.totalorder %s27, 3
        %s302 = scalar_select %p301, %s27, 3
        %s303 = smul.addr %s300, 4
        %s304 = sadd.s32 %s302, %s303
        %s305 = scalar_lea.vmem %s4, %s304
        %p306 = scmp.lt.s32.totalorder %s26, 1
        %s307 = scalar_select %p306, %s26, 1
        %p308 = scmp.lt.s32.totalorder %s27, 3
        %s309 = scalar_select %p308, %s27, 3
        %s310 = smul.addr %s307, 4
        %s311 = sadd.s32 %s309, %s310
        %s312 = scalar_lea.vmem %s4, %s311
        %v313 = vld [vmem:[%s257] sm:$0xff]
        %v314 = vld [vmem:[%s257 + $0x8] sm:$0xff]
        %v315 = vld [vmem:[%s266] sm:$0xff]
        %v316 = vld [vmem:[%s266 + $0x8] sm:$0xff]
        %v317 = vld [vmem:[#allocation6] sm:$0xff]
        %v318 = vld [vmem:[#allocation6 + $0x8] sm:$0xff]
        %v319 = vld [vmem:[#allocation7] sm:$0xff]
        %v320 = vld [vmem:[#allocation7 + $0x8] sm:$0xff]
        %vm321 = vcmask 130048
        %v323 = vsel %vm321, %v313, 0
        %v326 = vsel %vm321, %v314, 0
        %328 = vmatprep.subr.mxu0 0.0
        %v329 = vand.u32 %v317, 4294901760
        %330 = vmatpush1.msra.mxu0 %v329
        %331 = vmatprep.subr.mxu0 0.0
        %v332 = vand.u32 %v318, 4294901760
        %333 = vmatpush1.msra.mxu0 %v332
        %334 = vmatprep.subr.mxu0 0.0
        %335 = vmatpush1.msra.mxu0 0.0
        %336 = vmatprep.subr.mxu0 0.0
        %337 = vmatpush1.msra.mxu0 0.0
        %338 = vmatprep.subr.mxu0 0.0
        %339 = vmatpush1.msra.mxu0 0.0
        %340 = vmatprep.subr.mxu0 0.0
        %341 = vmatpush1.msra.mxu0 0.0
        %342 = vmatprep.subr.mxu0 0.0
        %343 = vmatpush1.msra.mxu0 0.0
        %344 = vmatprep.subr.mxu0 0.0
        %345 = vmatpush1.msra.mxu0 0.0
        %346 = vmatprep.subr.mxu0 0.0
        %347 = vmatpush1.msra.mxu0 0.0
        %348 = vmatprep.subr.mxu0 0.0
        %349 = vmatpush1.msra.mxu0 0.0
        %350 = vmatprep.subr.mxu0 0.0
        %351 = vmatpush1.msra.mxu0 0.0
        %352 = vmatprep.subr.mxu0 0.0
        %353 = vmatpush1.msra.mxu0 0.0
        %354 = vmatprep.subr.mxu0 0.0
        %355 = vmatpush1.msra.mxu0 0.0
        %356 = vmatprep.subr.mxu0 0.0
        %357 = vmatpush1.msra.mxu0 0.0
        %358 = vmatprep.subr.mxu0 0.0
        %359 = vmatpush1.msra.mxu0 0.0
        %360 = vmatprep.subr.mxu0 0.0
        %361 = vmatpush1.msra.mxu0 0.0
        %362 = vmatprep.subr.mxu0 0.0
        %363 = vmatpush1.msra.mxu0 0.0
        %364 = vmatprep.subr.mxu0 0.0
        %365 = vmatpush1.msra.mxu0 0.0
        %366 = vmatprep.subr.mxu0 0.0
        %367 = vmatpush1.msra.mxu0 0.0
        %368 = vmatprep.subr.mxu0 0.0
        %369 = vmatpush1.msra.mxu0 0.0
        %370 = vmatprep.subr.mxu0 0.0
        %371 = vmatpush1.msra.mxu0 0.0
        %372 = vmatprep.subr.mxu0 0.0
        %373 = vmatpush1.msra.mxu0 0.0
        %374 = vmatprep.subr.mxu0 0.0
        %375 = vmatpush1.msra.mxu0 0.0
        %376 = vmatprep.subr.mxu0 0.0
        %377 = vmatpush1.msra.mxu0 0.0
        %378 = vmatprep.subr.mxu0 0.0
        %379 = vmatpush1.msra.mxu0 0.0
        %380 = vmatprep.subr.mxu0 0.0
        %381 = vmatpush1.msra.mxu0 0.0
        %382 = vmatprep.subr.mxu0 0.0
        %383 = vmatpush1.msra.mxu0 0.0
        %384 = vmatprep.subr.mxu0 0.0
        %385 = vmatpush1.msra.mxu0 0.0
        %386 = vmatprep.subr.mxu0 0.0
        %387 = vmatpush1.msra.mxu0 0.0
        %388 = vmatprep.subr.mxu0 0.0
        %389 = vmatpush1.msra.mxu0 0.0
        %390 = vmatprep.subr.mxu0 0.0
        %391 = vmatpush1.msra.mxu0 0.0
        %392 = vmatprep.subr.mxu0 0.0
        %393 = vmatpush1.msra.mxu0 0.0
        %394 = vmatprep.mubr.f32.mxu0 0.0
        %v395 = vand.u32 %v323, 4294901760
        %v396 = vsub.f32 %v323, %v395
        %v397 = vand.u32 %v396, 4294901760
        %v398 = vsub.f32 %v396, %v397
        %v399 = vand.u32 %v398, 4294901760
        %400 = vmatmul.mubr.f32.gmra.mrb[0].mxu0 %v399
        %v401 = vpop.f32.mrb[0].mxu0
        %v402 = vadd.f32 0.0, %v401
        %v403 = vpop.f32.mrb[0].mxu0
        %404 = vmatprep.mubr.f32.mxu0 0.0
        %v405 = vand.u32 %v326, 4294901760
        %v406 = vsub.f32 %v326, %v405
        %v407 = vand.u32 %v406, 4294901760
        %v408 = vsub.f32 %v406, %v407
        %v409 = vand.u32 %v408, 4294901760
        %410 = vmatmul.mubr.f32.gmra.mrb[0].mxu0 %v409
        %v411 = vpop.f32.mrb[0].mxu0
        %v412 = vadd.f32 0.0, %v411
        %v413 = vpop.f32.mrb[0].mxu0
        %414 = vdwg.mxu0
        %415 = vmatprep.subr.mxu0 0.0
        %v416 = vand.u32 %v317, 4294901760
        %v417 = vsub.f32 %v317, %v416
        %v418 = vand.u32 %v417, 4294901760
        %v419 = vsub.f32 %v417, %v418
        %v420 = vand.u32 %v419, 4294901760
        %421 = vmatpush1.msra.mxu0 %v420
        %422 = vmatprep.subr.mxu0 0.0
        %v423 = vand.u32 %v318, 4294901760
        %v424 = vsub.f32 %v318, %v423
        %v425 = vand.u32 %v424, 4294901760
        %v426 = vsub.f32 %v424, %v425
        %v427 = vand.u32 %v426, 4294901760
        %428 = vmatpush1.msra.mxu0 %v427
        %429 = vmatprep.subr.mxu0 0.0
        %430 = vmatpush1.msra.mxu0 0.0
        %431 = vmatprep.subr.mxu0 0.0
        %432 = vmatpush1.msra.mxu0 0.0
        %433 = vmatprep.subr.mxu0 0.0
        %434 = vmatpush1.msra.mxu0 0.0
        %435 = vmatprep.subr.mxu0 0.0
        %436 = vmatpush1.msra.mxu0 0.0
        %437 = vmatprep.subr.mxu0 0.0
        %438 = vmatpush1.msra.mxu0 0.0
        %439 = vmatprep.subr.mxu0 0.0
        %440 = vmatpush1.msra.mxu0 0.0
        %441 = vmatprep.subr.mxu0 0.0
        %442 = vmatpush1.msra.mxu0 0.0
        %443 = vmatprep.subr.mxu0 0.0
        %444 = vmatpush1.msra.mxu0 0.0
        %445 = vmatprep.subr.mxu0 0.0
        %446 = vmatpush1.msra.mxu0 0.0
        %447 = vmatprep.subr.mxu0 0.0
        %448 = vmatpush1.msra.mxu0 0.0
        %449 = vmatprep.subr.mxu0 0.0
        %450 = vmatpush1.msra.mxu0 0.0
        %451 = vmatprep.subr.mxu0 0.0
        %452 = vmatpush1.msra.mxu0 0.0
        %453 = vmatprep.subr.mxu0 0.0
        %454 = vmatpush1.msra.mxu0 0.0
        %455 = vmatprep.subr.mxu0 0.0
        %456 = vmatpush1.msra.mxu0 0.0
        %457 = vmatprep.subr.mxu0 0.0
        %458 = vmatpush1.msra.mxu0 0.0
        %459 = vmatprep.subr.mxu0 0.0
        %460 = vmatpush1.msra.mxu0 0.0
        %461 = vmatprep.subr.mxu0 0.0
        %462 = vmatpush1.msra.mxu0 0.0
        %463 = vmatprep.subr.mxu0 0.0
        %464 = vmatpush1.msra.mxu0 0.0
        %465 = vmatprep.subr.mxu0 0.0
        %466 = vmatpush1.msra.mxu0 0.0
        %467 = vmatprep.subr.mxu0 0.0
        %468 = vmatpush1.msra.mxu0 0.0
        %469 = vmatprep.subr.mxu0 0.0
        %470 = vmatpush1.msra.mxu0 0.0
        %471 = vmatprep.subr.mxu0 0.0
        %472 = vmatpush1.msra.mxu0 0.0
        %473 = vmatprep.subr.mxu0 0.0
        %474 = vmatpush1.msra.mxu0 0.0
        %475 = vmatprep.subr.mxu0 0.0
        %476 = vmatpush1.msra.mxu0 0.0
        %477 = vmatprep.subr.mxu0 0.0
        %478 = vmatpush1.msra.mxu0 0.0
        %479 = vmatprep.subr.mxu0 0.0
        %480 = vmatpush1.msra.mxu0 0.0
        %481 = vmatprep.subr.mxu0 0.0
        %482 = vmatpush1.msra.mxu0 0.0
        %483 = vmatprep.subr.mxu0 0.0
        %484 = vmatpush1.msra.mxu0 0.0
        %485 = vmatprep.subr.mxu0 0.0
        %486 = vmatpush1.msra.mxu0 0.0
        %487 = vmatprep.subr.mxu0 0.0
        %488 = vmatpush1.msra.mxu0 0.0
        %489 = vmatprep.mubr.f32.mxu0 0.0
        %v490 = vand.u32 %v323, 4294901760
        %491 = vmatmul.mubr.f32.gmra.mrb[0].mxu0 %v490
        %v492 = vpop.f32.mrb[0].mxu0
        %v493 = vadd.f32 %v402, %v492
        %v494 = vpop.f32.mrb[0].mxu0
        %495 = vmatprep.mubr.f32.mxu0 0.0
        %v496 = vand.u32 %v326, 4294901760
        %497 = vmatmul.mubr.f32.gmra.mrb[0].mxu0 %v496
        %v498 = vpop.f32.mrb[0].mxu0
        %v499 = vadd.f32 %v412, %v498
        %v500 = vpop.f32.mrb[0].mxu0
        %501 = vdwg.mxu0
        %502 = vmatprep.subr.mxu0 0.0
        %v503 = vand.u32 %v317, 4294901760
        %v504 = vsub.f32 %v317, %v503
        %505 = vmatpush1.msra.mxu0 %v504
        %506 = vmatprep.subr.mxu0 0.0
        %v507 = vand.u32 %v318, 4294901760
        %v508 = vsub.f32 %v318, %v507
        %509 = vmatpush1.msra.mxu0 %v508
        %510 = vmatprep.subr.mxu0 0.0
        %511 = vmatpush1.msra.mxu0 0.0
        %512 = vmatprep.subr.mxu0 0.0
        %513 = vmatpush1.msra.mxu0 0.0
        %514 = vmatprep.subr.mxu0 0.0
        %515 = vmatpush1.msra.mxu0 0.0
        %516 = vmatprep.subr.mxu0 0.0
        %517 = vmatpush1.msra.mxu0 0.0
        %518 = vmatprep.subr.mxu0 0.0
        %519 = vmatpush1.msra.mxu0 0.0
        %520 = vmatprep.subr.mxu0 0.0
        %521 = vmatpush1.msra.mxu0 0.0
        %522 = vmatprep.subr.mxu0 0.0
        %523 = vmatpush1.msra.mxu0 0.0
        %524 = vmatprep.subr.mxu0 0.0
        %525 = vmatpush1.msra.mxu0 0.0
        %526 = vmatprep.subr.mxu0 0.0
        %527 = vmatpush1.msra.mxu0 0.0
        %528 = vmatprep.subr.mxu0 0.0
        %529 = vmatpush1.msra.mxu0 0.0
        %530 = vmatprep.subr.mxu0 0.0
        %531 = vmatpush1.msra.mxu0 0.0
        %532 = vmatprep.subr.mxu0 0.0
        %533 = vmatpush1.msra.mxu0 0.0
        %534 = vmatprep.subr.mxu0 0.0
        %535 = vmatpush1.msra.mxu0 0.0
        %536 = vmatprep.subr.mxu0 0.0
        %537 = vmatpush1.msra.mxu0 0.0
        %538 = vmatprep.subr.mxu0 0.0
        %539 = vmatpush1.msra.mxu0 0.0
        %540 = vmatprep.subr.mxu0 0.0
        %541 = vmatpush1.msra.mxu0 0.0
        %542 = vmatprep.subr.mxu0 0.0
        %543 = vmatpush1.msra.mxu0 0.0
        %544 = vmatprep.subr.mxu0 0.0
        %545 = vmatpush1.msra.mxu0 0.0
        %546 = vmatprep.subr.mxu0 0.0
        %547 = vmatpush1.msra.mxu0 0.0
        %548 = vmatprep.subr.mxu0 0.0
        %549 = vmatpush1.msra.mxu0 0.0
        %550 = vmatprep.subr.mxu0 0.0
        %551 = vmatpush1.msra.mxu0 0.0
        %552 = vmatprep.subr.mxu0 0.0
        %553 = vmatpush1.msra.mxu0 0.0
        %554 = vmatprep.subr.mxu0 0.0
        %555 = vmatpush1.msra.mxu0 0.0
        %556 = vmatprep.subr.mxu0 0.0
        %557 = vmatpush1.msra.mxu0 0.0
        %558 = vmatprep.subr.mxu0 0.0
        %559 = vmatpush1.msra.mxu0 0.0
        %560 = vmatprep.subr.mxu0 0.0
        %561 = vmatpush1.msra.mxu0 0.0
        %562 = vmatprep.subr.mxu0 0.0
        %563 = vmatpush1.msra.mxu0 0.0
        %564 = vmatprep.subr.mxu0 0.0
        %565 = vmatpush1.msra.mxu0 0.0
        %566 = vmatprep.subr.mxu0 0.0
        %567 = vmatpush1.msra.mxu0 0.0
        %568 = vmatprep.subr.mxu0 0.0
        %569 = vmatpush1.msra.mxu0 0.0
        %570 = vmatprep.mubr.f32.mxu0 0.0
        %v571 = vand.u32 %v323, 4294901760
        %v572 = vsub.f32 %v323, %v571
        %573 = vmatmul.mubr.f32.gmra.mrb[0].mxu0 %v572
        %v574 = vpop.f32.mrb[0].mxu0
        %v575 = vadd.f32 %v493, %v574
        %v576 = vpop.f32.mrb[0].mxu0
        %577 = vmatprep.mubr.f32.mxu0 0.0
        %v578 = vand.u32 %v326, 4294901760
        %v579 = vsub.f32 %v326, %v578
        %580 = vmatmul.mubr.f32.gmra.mrb[0].mxu0 %v579
        %v581 = vpop.f32.mrb[0].mxu0
        %v582 = vadd.f32 %v499, %v581
        %v583 = vpop.f32.mrb[0].mxu0
        %584 = vdwg.mxu0
        %585 = vmatprep.subr.mxu0 0.0
        %v586 = vand.u32 %v317, 4294901760
        %587 = vmatpush1.msra.mxu0 %v586
        %588 = vmatprep.subr.mxu0 0.0
        %v589 = vand.u32 %v318, 4294901760
        %590 = vmatpush1.msra.mxu0 %v589
        %591 = vmatprep.subr.mxu0 0.0
        %592 = vmatpush1.msra.mxu0 0.0
        %593 = vmatprep.subr.mxu0 0.0
        %594 = vmatpush1.msra.mxu0 0.0
        %595 = vmatprep.subr.mxu0 0.0
        %596 = vmatpush1.msra.mxu0 0.0
        %597 = vmatprep.subr.mxu0 0.0
        %598 = vmatpush1.msra.mxu0 0.0
        %599 = vmatprep.subr.mxu0 0.0
        %600 = vmatpush1.msra.mxu0 0.0
        %601 = vmatprep.subr.mxu0 0.0
        %602 = vmatpush1.msra.mxu0 0.0
        %603 = vmatprep.subr.mxu0 0.0
        %604 = vmatpush1.msra.mxu0 0.0
        %605 = vmatprep.subr.mxu0 0.0
        %606 = vmatpush1.msra.mxu0 0.0
        %607 = vmatprep.subr.mxu0 0.0
        %608 = vmatpush1.msra.mxu0 0.0
        %609 = vmatprep.subr.mxu0 0.0
        %610 = vmatpush1.msra.mxu0 0.0
        %611 = vmatprep.subr.mxu0 0.0
        %612 = vmatpush1.msra.mxu0 0.0
        %613 = vmatprep.subr.mxu0 0.0
        %614 = vmatpush1.msra.mxu0 0.0
        %615 = vmatprep.subr.mxu0 0.0
        %616 = vmatpush1.msra.mxu0 0.0
        %617 = vmatprep.subr.mxu0 0.0
        %618 = vmatpush1.msra.mxu0 0.0
        %619 = vmatprep.subr.mxu0 0.0
        %620 = vmatpush1.msra.mxu0 0.0
        %621 = vmatprep.subr.mxu0 0.0
        %622 = vmatpush1.msra.mxu0 0.0
        %623 = vmatprep.subr.mxu0 0.0
        %624 = vmatpush1.msra.mxu0 0.0
        %625 = vmatprep.subr.mxu0 0.0
        %626 = vmatpush1.msra.mxu0 0.0
        %627 = vmatprep.subr.mxu0 0.0
        %628 = vmatpush1.msra.mxu0 0.0
        %629 = vmatprep.subr.mxu0 0.0
        %630 = vmatpush1.msra.mxu0 0.0
        %631 = vmatprep.subr.mxu0 0.0
        %632 = vmatpush1.msra.mxu0 0.0
        %633 = vmatprep.subr.mxu0 0.0
        %634 = vmatpush1.msra.mxu0 0.0
        %635 = vmatprep.subr.mxu0 0.0
        %636 = vmatpush1.msra.mxu0 0.0
        %637 = vmatprep.subr.mxu0 0.0
        %638 = vmatpush1.msra.mxu0 0.0
        %639 = vmatprep.subr.mxu0 0.0
        %640 = vmatpush1.msra.mxu0 0.0
        %641 = vmatprep.subr.mxu0 0.0
        %642 = vmatpush1.msra.mxu0 0.0
        %643 = vmatprep.subr.mxu0 0.0
        %644 = vmatpush1.msra.mxu0 0.0
        %645 = vmatprep.subr.mxu0 0.0
        %646 = vmatpush1.msra.mxu0 0.0
        %647 = vmatprep.subr.mxu0 0.0
        %648 = vmatpush1.msra.mxu0 0.0
        %649 = vmatprep.subr.mxu0 0.0
        %650 = vmatpush1.msra.mxu0 0.0
        %651 = vmatprep.mubr.f32.mxu0 0.0
        %v652 = vand.u32 %v323, 4294901760
        %v653 = vsub.f32 %v323, %v652
        %v654 = vand.u32 %v653, 4294901760
        %655 = vmatmul.mubr.f32.gmra.mrb[0].mxu0 %v654
        %v656 = vpop.f32.mrb[0].mxu0
        %v657 = vadd.f32 %v575, %v656
        %v658 = vpop.f32.mrb[0].mxu0
        %659 = vmatprep.mubr.f32.mxu0 0.0
        %v660 = vand.u32 %v326, 4294901760
        %v661 = vsub.f32 %v326, %v660
        %v662 = vand.u32 %v661, 4294901760
        %663 = vmatmul.mubr.f32.gmra.mrb[0].mxu0 %v662
        %v664 = vpop.f32.mrb[0].mxu0
        %v665 = vadd.f32 %v582, %v664
        %v666 = vpop.f32.mrb[0].mxu0
        %667 = vdwg.mxu0
        %668 = vmatprep.subr.mxu0 0.0
        %v669 = vand.u32 %v317, 4294901760
        %v670 = vsub.f32 %v317, %v669
        %v671 = vand.u32 %v670, 4294901760
        %672 = vmatpush1.msra.mxu0 %v671
        %673 = vmatprep.subr.mxu0 0.0
        %v674 = vand.u32 %v318, 4294901760
        %v675 = vsub.f32 %v318, %v674
        %v676 = vand.u32 %v675, 4294901760
        %677 = vmatpush1.msra.mxu0 %v676
        %678 = vmatprep.subr.mxu0 0.0
        %679 = vmatpush1.msra.mxu0 0.0
        %680 = vmatprep.subr.mxu0 0.0
        %681 = vmatpush1.msra.mxu0 0.0
        %682 = vmatprep.subr.mxu0 0.0
        %683 = vmatpush1.msra.mxu0 0.0
        %684 = vmatprep.subr.mxu0 0.0
        %685 = vmatpush1.msra.mxu0 0.0
        %686 = vmatprep.subr.mxu0 0.0
        %687 = vmatpush1.msra.mxu0 0.0
        %688 = vmatprep.subr.mxu0 0.0
        %689 = vmatpush1.msra.mxu0 0.0
        %690 = vmatprep.subr.mxu0 0.0
        %691 = vmatpush1.msra.mxu0 0.0
        %692 = vmatprep.subr.mxu0 0.0
        %693 = vmatpush1.msra.mxu0 0.0
        %694 = vmatprep.subr.mxu0 0.0
        %695 = vmatpush1.msra.mxu0 0.0
        %696 = vmatprep.subr.mxu0 0.0
        %697 = vmatpush1.msra.mxu0 0.0
        %698 = vmatprep.subr.mxu0 0.0
        %699 = vmatpush1.msra.mxu0 0.0
        %700 = vmatprep.subr.mxu0 0.0
        %701 = vmatpush1.msra.mxu0 0.0
        %702 = vmatprep.subr.mxu0 0.0
        %703 = vmatpush1.msra.mxu0 0.0
        %704 = vmatprep.subr.mxu0 0.0
        %705 = vmatpush1.msra.mxu0 0.0
        %706 = vmatprep.subr.mxu0 0.0
        %707 = vmatpush1.msra.mxu0 0.0
        %708 = vmatprep.subr.mxu0 0.0
        %709 = vmatpush1.msra.mxu0 0.0
        %710 = vmatprep.subr.mxu0 0.0
        %711 = vmatpush1.msra.mxu0 0.0
        %712 = vmatprep.subr.mxu0 0.0
        %713 = vmatpush1.msra.mxu0 0.0
        %714 = vmatprep.subr.mxu0 0.0
        %715 = vmatpush1.msra.mxu0 0.0
        %716 = vmatprep.subr.mxu0 0.0
        %717 = vmatpush1.msra.mxu0 0.0
        %718 = vmatprep.subr.mxu0 0.0
        %719 = vmatpush1.msra.mxu0 0.0
        %720 = vmatprep.subr.mxu0 0.0
        %721 = vmatpush1.msra.mxu0 0.0
        %722 = vmatprep.subr.mxu0 0.0
        %723 = vmatpush1.msra.mxu0 0.0
        %724 = vmatprep.subr.mxu0 0.0
        %725 = vmatpush1.msra.mxu0 0.0
        %726 = vmatprep.subr.mxu0 0.0
        %727 = vmatpush1.msra.mxu0 0.0
        %728 = vmatprep.subr.mxu0 0.0
        %729 = vmatpush1.msra.mxu0 0.0
        %730 = vmatprep.subr.mxu0 0.0
        %731 = vmatpush1.msra.mxu0 0.0
        %732 = vmatprep.subr.mxu0 0.0
        %733 = vmatpush1.msra.mxu0 0.0
        %734 = vmatprep.subr.mxu0 0.0
        %735 = vmatpush1.msra.mxu0 0.0
        %736 = vmatprep.subr.mxu0 0.0
        %737 = vmatpush1.msra.mxu0 0.0
        %738 = vmatprep.mubr.f32.mxu0 0.0
        %v739 = vand.u32 %v323, 4294901760
        %740 = vmatmul.mubr.f32.gmra.mrb[0].mxu0 %v739
        %v741 = vpop.f32.mrb[0].mxu0
        %v742 = vadd.f32 %v657, %v741
        %v743 = vpop.f32.mrb[0].mxu0
        %744 = vmatprep.mubr.f32.mxu0 0.0
        %v745 = vand.u32 %v326, 4294901760
        %746 = vmatmul.mubr.f32.gmra.mrb[0].mxu0 %v745
        %v747 = vpop.f32.mrb[0].mxu0
        %v748 = vadd.f32 %v665, %v747
        %v749 = vpop.f32.mrb[0].mxu0
        %750 = vdwg.mxu0
        %751 = vmatprep.subr.mxu0 0.0
        %v752 = vand.u32 %v317, 4294901760
        %753 = vmatpush1.msra.mxu0 %v752
        %754 = vmatprep.subr.mxu0 0.0
        %v755 = vand.u32 %v318, 4294901760
        %756 = vmatpush1.msra.mxu0 %v755
        %757 = vmatprep.subr.mxu0 0.0
        %758 = vmatpush1.msra.mxu0 0.0
        %759 = vmatprep.subr.mxu0 0.0
        %760 = vmatpush1.msra.mxu0 0.0
        %761 = vmatprep.subr.mxu0 0.0
        %762 = vmatpush1.msra.mxu0 0.0
        %763 = vmatprep.subr.mxu0 0.0
        %764 = vmatpush1.msra.mxu0 0.0
        %765 = vmatprep.subr.mxu0 0.0
        %766 = vmatpush1.msra.mxu0 0.0
        %767 = vmatprep.subr.mxu0 0.0
        %768 = vmatpush1.msra.mxu0 0.0
        %769 = vmatprep.subr.mxu0 0.0
        %770 = vmatpush1.msra.mxu0 0.0
        %771 = vmatprep.subr.mxu0 0.0
        %772 = vmatpush1.msra.mxu0 0.0
        %773 = vmatprep.subr.mxu0 0.0
        %774 = vmatpush1.msra.mxu0 0.0
        %775 = vmatprep.subr.mxu0 0.0
        %776 = vmatpush1.msra.mxu0 0.0
        %777 = vmatprep.subr.mxu0 0.0
        %778 = vmatpush1.msra.mxu0 0.0
        %779 = vmatprep.subr.mxu0 0.0
        %780 = vmatpush1.msra.mxu0 0.0
        %781 = vmatprep.subr.mxu0 0.0
        %782 = vmatpush1.msra.mxu0 0.0
        %783 = vmatprep.subr.mxu0 0.0
        %784 = vmatpush1.msra.mxu0 0.0
        %785 = vmatprep.subr.mxu0 0.0
        %786 = vmatpush1.msra.mxu0 0.0
        %787 = vmatprep.subr.mxu0 0.0
        %788 = vmatpush1.msra.mxu0 0.0
        %789 = vmatprep.subr.mxu0 0.0
        %790 = vmatpush1.msra.mxu0 0.0
        %791 = vmatprep.subr.mxu0 0.0
        %792 = vmatpush1.msra.mxu0 0.0
        %793 = vmatprep.subr.mxu0 0.0
        %794 = vmatpush1.msra.mxu0 0.0
        %795 = vmatprep.subr.mxu0 0.0
        %796 = vmatpush1.msra.mxu0 0.0
        %797 = vmatprep.subr.mxu0 0.0
        %798 = vmatpush1.msra.mxu0 0.0
        %799 = vmatprep.subr.mxu0 0.0
        %800 = vmatpush1.msra.mxu0 0.0
        %801 = vmatprep.subr.mxu0 0.0
        %802 = vmatpush1.msra.mxu0 0.0
        %803 = vmatprep.subr.mxu0 0.0
        %804 = vmatpush1.msra.mxu0 0.0
        %805 = vmatprep.subr.mxu0 0.0
        %806 = vmatpush1.msra.mxu0 0.0
        %807 = vmatprep.subr.mxu0 0.0
        %808 = vmatpush1.msra.mxu0 0.0
        %809 = vmatprep.subr.mxu0 0.0
        %810 = vmatpush1.msra.mxu0 0.0
        %811 = vmatprep.subr.mxu0 0.0
        %812 = vmatpush1.msra.mxu0 0.0
        %813 = vmatprep.subr.mxu0 0.0
        %814 = vmatpush1.msra.mxu0 0.0
        %815 = vmatprep.subr.mxu0 0.0
        %816 = vmatpush1.msra.mxu0 0.0
        %817 = vmatprep.mubr.f32.mxu0 0.0
        %v818 = vand.u32 %v323, 4294901760
        %819 = vmatmul.mubr.f32.gmra.mrb[0].mxu0 %v818
        %v820 = vpop.f32.mrb[0].mxu0
        %v821 = vadd.f32 %v742, %v820
        %v822 = vpop.f32.mrb[0].mxu0
        %823 = vmatprep.mubr.f32.mxu0 0.0
        %v824 = vand.u32 %v326, 4294901760
        %825 = vmatmul.mubr.f32.gmra.mrb[0].mxu0 %v824
        %v826 = vpop.f32.mrb[0].mxu0
        %v827 = vadd.f32 %v748, %v826
        %v828 = vpop.f32.mrb[0].mxu0
        %829 = vdwg.mxu0
        %v831 = vsel %vm321, %v319, 0
        %v834 = vsel %vm321, %v320, 0
        %836 = vmatprep.subr.mxu0 0.0
        %v837 = vand.u32 %v821, 4294901760
        %838 = vmatpush1.msra.mxu0 %v837
        %839 = vmatprep.subr.mxu0 0.0
        %v840 = vand.u32 %v827, 4294901760
        %841 = vmatpush1.msra.mxu0 %v840
        %842 = vmatprep.subr.mxu0 0.0
        %843 = vmatpush1.msra.mxu0 0.0
        %844 = vmatprep.subr.mxu0 0.0
        %845 = vmatpush1.msra.mxu0 0.0
        %846 = vmatprep.subr.mxu0 0.0
        %847 = vmatpush1.msra.mxu0 0.0
        %848 = vmatprep.subr.mxu0 0.0
        %849 = vmatpush1.msra.mxu0 0.0
        %850 = vmatprep.subr.mxu0 0.0
        %851 = vmatpush1.msra.mxu0 0.0
        %852 = vmatprep.subr.mxu0 0.0
        %853 = vmatpush1.msra.mxu0 0.0
        %854 = vmatprep.subr.mxu0 0.0
        %855 = vmatpush1.msra.mxu0 0.0
        %856 = vmatprep.subr.mxu0 0.0
        %857 = vmatpush1.msra.mxu0 0.0
        %858 = vmatprep.subr.mxu0 0.0
        %859 = vmatpush1.msra.mxu0 0.0
        %860 = vmatprep.subr.mxu0 0.0
        %861 = vmatpush1.msra.mxu0 0.0
        %862 = vmatprep.subr.mxu0 0.0
        %863 = vmatpush1.msra.mxu0 0.0
        %864 = vmatprep.subr.mxu0 0.0
        %865 = vmatpush1.msra.mxu0 0.0
        %866 = vmatprep.subr.mxu0 0.0
        %867 = vmatpush1.msra.mxu0 0.0
        %868 = vmatprep.subr.mxu0 0.0
        %869 = vmatpush1.msra.mxu0 0.0
        %870 = vmatprep.subr.mxu0 0.0
        %871 = vmatpush1.msra.mxu0 0.0
        %872 = vmatprep.subr.mxu0 0.0
        %873 = vmatpush1.msra.mxu0 0.0
        %874 = vmatprep.subr.mxu0 0.0
        %875 = vmatpush1.msra.mxu0 0.0
        %876 = vmatprep.subr.mxu0 0.0
        %877 = vmatpush1.msra.mxu0 0.0
        %878 = vmatprep.subr.mxu0 0.0
        %879 = vmatpush1.msra.mxu0 0.0
        %880 = vmatprep.subr.mxu0 0.0
        %881 = vmatpush1.msra.mxu0 0.0
        %882 = vmatprep.subr.mxu0 0.0
        %883 = vmatpush1.msra.mxu0 0.0
        %884 = vmatprep.subr.mxu0 0.0
        %885 = vmatpush1.msra.mxu0 0.0
        %886 = vmatprep.subr.mxu0 0.0
        %887 = vmatpush1.msra.mxu0 0.0
        %888 = vmatprep.subr.mxu0 0.0
        %889 = vmatpush1.msra.mxu0 0.0
        %890 = vmatprep.subr.mxu0 0.0
        %891 = vmatpush1.msra.mxu0 0.0
        %892 = vmatprep.subr.mxu0 0.0
        %893 = vmatpush1.msra.mxu0 0.0
        %894 = vmatprep.subr.mxu0 0.0
        %895 = vmatpush1.msra.mxu0 0.0
        %896 = vmatprep.subr.mxu0 0.0
        %897 = vmatpush1.msra.mxu0 0.0
        %898 = vmatprep.subr.mxu0 0.0
        %899 = vmatpush1.msra.mxu0 0.0
        %900 = vmatprep.subr.mxu0 0.0
        %901 = vmatpush1.msra.mxu0 0.0
        %902 = vmatprep.mubr.f32.mxu0 0.0
        %v903 = vand.u32 %v831, 4294901760
        %v904 = vsub.f32 %v831, %v903
        %v905 = vand.u32 %v904, 4294901760
        %v906 = vsub.f32 %v904, %v905
        %v907 = vand.u32 %v906, 4294901760
        %908 = vmatmul.mubr.f32.gmra.mrb[0].mxu0 %v907
        %v909 = vpop.f32.mrb[0].mxu0
        %v910 = vadd.f32 0.0, %v909
        %v911 = vpop.f32.mrb[0].mxu0
        %912 = vmatprep.mubr.f32.mxu0 0.0
        %v913 = vand.u32 %v834, 4294901760
        %v914 = vsub.f32 %v834, %v913
        %v915 = vand.u32 %v914, 4294901760
        %v916 = vsub.f32 %v914, %v915
        %v917 = vand.u32 %v916, 4294901760
        %918 = vmatmul.mubr.f32.gmra.mrb[0].mxu0 %v917
        %v919 = vpop.f32.mrb[0].mxu0
        %v920 = vadd.f32 0.0, %v919
        %v921 = vpop.f32.mrb[0].mxu0
        %922 = vdwg.mxu0
        %923 = vmatprep.subr.mxu0 0.0
        %v924 = vand.u32 %v821, 4294901760
        %v925 = vsub.f32 %v821, %v924
        %v926 = vand.u32 %v925, 4294901760
        %v927 = vsub.f32 %v925, %v926
        %v928 = vand.u32 %v927, 4294901760
        %929 = vmatpush1.msra.mxu0 %v928
        %930 = vmatprep.subr.mxu0 0.0
        %v931 = vand.u32 %v827, 4294901760
        %v932 = vsub.f32 %v827, %v931
        %v933 = vand.u32 %v932, 4294901760
        %v934 = vsub.f32 %v932, %v933
        %v935 = vand.u32 %v934, 4294901760
        %936 = vmatpush1.msra.mxu0 %v935
        %937 = vmatprep.subr.mxu0 0.0
        %938 = vmatpush1.msra.mxu0 0.0
        %939 = vmatprep.subr.mxu0 0.0
        %940 = vmatpush1.msra.mxu0 0.0
        %941 = vmatprep.subr.mxu0 0.0
        %942 = vmatpush1.msra.mxu0 0.0
        %943 = vmatprep.subr.mxu0 0.0
        %944 = vmatpush1.msra.mxu0 0.0
        %945 = vmatprep.subr.mxu0 0.0
        %946 = vmatpush1.msra.mxu0 0.0
        %947 = vmatprep.subr.mxu0 0.0
        %948 = vmatpush1.msra.mxu0 0.0
        %949 = vmatprep.subr.mxu0 0.0
        %950 = vmatpush1.msra.mxu0 0.0
        %951 = vmatprep.subr.mxu0 0.0
        %952 = vmatpush1.msra.mxu0 0.0
        %953 = vmatprep.subr.mxu0 0.0
        %954 = vmatpush1.msra.mxu0 0.0
        %955 = vmatprep.subr.mxu0 0.0
        %956 = vmatpush1.msra.mxu0 0.0
        %957 = vmatprep.subr.mxu0 0.0
        %958 = vmatpush1.msra.mxu0 0.0
        %959 = vmatprep.subr.mxu0 0.0
        %960 = vmatpush1.msra.mxu0 0.0
        %961 = vmatprep.subr.mxu0 0.0
        %962 = vmatpush1.msra.mxu0 0.0
        %963 = vmatprep.subr.mxu0 0.0
        %964 = vmatpush1.msra.mxu0 0.0
        %965 = vmatprep.subr.mxu0 0.0
        %966 = vmatpush1.msra.mxu0 0.0
        %967 = vmatprep.subr.mxu0 0.0
        %968 = vmatpush1.msra.mxu0 0.0
        %969 = vmatprep.subr.mxu0 0.0
        %970 = vmatpush1.msra.mxu0 0.0
        %971 = vmatprep.subr.mxu0 0.0
        %972 = vmatpush1.msra.mxu0 0.0
        %973 = vmatprep.subr.mxu0 0.0
        %974 = vmatpush1.msra.mxu0 0.0
        %975 = vmatprep.subr.mxu0 0.0
        %976 = vmatpush1.msra.mxu0 0.0
        %977 = vmatprep.subr.mxu0 0.0
        %978 = vmatpush1.msra.mxu0 0.0
        %979 = vmatprep.subr.mxu0 0.0
        %980 = vmatpush1.msra.mxu0 0.0
        %981 = vmatprep.subr.mxu0 0.0
        %982 = vmatpush1.msra.mxu0 0.0
        %983 = vmatprep.subr.mxu0 0.0
        %984 = vmatpush1.msra.mxu0 0.0
        %985 = vmatprep.subr.mxu0 0.0
        %986 = vmatpush1.msra.mxu0 0.0
        %987 = vmatprep.subr.mxu0 0.0
        %988 = vmatpush1.msra.mxu0 0.0
        %989 = vmatprep.subr.mxu0 0.0
        %990 = vmatpush1.msra.mxu0 0.0
        %991 = vmatprep.subr.mxu0 0.0
        %992 = vmatpush1.msra.mxu0 0.0
        %993 = vmatprep.subr.mxu0 0.0
        %994 = vmatpush1.msra.mxu0 0.0
        %995 = vmatprep.subr.mxu0 0.0
        %996 = vmatpush1.msra.mxu0 0.0
        %997 = vmatprep.mubr.f32.mxu0 0.0
        %v998 = vand.u32 %v831, 4294901760
        %999 = vmatmul.mubr.f32.gmra.mrb[0].mxu0 %v998
        %v1000 = vpop.f32.mrb[0].mxu0
        %v1001 = vadd.f32 %v910, %v1000
        %v1002 = vpop.f32.mrb[0].mxu0
        %1003 = vmatprep.mubr.f32.mxu0 0.0
        %v1004 = vand.u32 %v834, 4294901760
        %1005 = vmatmul.mubr.f32.gmra.mrb[0].mxu0 %v1004
        %v1006 = vpop.f32.mrb[0].mxu0
        %v1007 = vadd.f32 %v920, %v1006
        %v1008 = vpop.f32.mrb[0].mxu0
        %1009 = vdwg.mxu0
        %1010 = vmatprep.subr.mxu0 0.0
        %v1011 = vand.u32 %v821, 4294901760
        %v1012 = vsub.f32 %v821, %v1011
        %1013 = vmatpush1.msra.mxu0 %v1012
        %1014 = vmatprep.subr.mxu0 0.0
        %v1015 = vand.u32 %v827, 4294901760
        %v1016 = vsub.f32 %v827, %v1015
        %1017 = vmatpush1.msra.mxu0 %v1016
        %1018 = vmatprep.subr.mxu0 0.0
        %1019 = vmatpush1.msra.mxu0 0.0
        %1020 = vmatprep.subr.mxu0 0.0
        %1021 = vmatpush1.msra.mxu0 0.0
        %1022 = vmatprep.subr.mxu0 0.0
        %1023 = vmatpush1.msra.mxu0 0.0
        %1024 = vmatprep.subr.mxu0 0.0
        %1025 = vmatpush1.msra.mxu0 0.0
        %1026 = vmatprep.subr.mxu0 0.0
        %1027 = vmatpush1.msra.mxu0 0.0
        %1028 = vmatprep.subr.mxu0 0.0
        %1029 = vmatpush1.msra.mxu0 0.0
        %1030 = vmatprep.subr.mxu0 0.0
        %1031 = vmatpush1.msra.mxu0 0.0
        %1032 = vmatprep.subr.mxu0 0.0
        %1033 = vmatpush1.msra.mxu0 0.0
        %1034 = vmatprep.subr.mxu0 0.0
        %1035 = vmatpush1.msra.mxu0 0.0
        %1036 = vmatprep.subr.mxu0 0.0
        %1037 = vmatpush1.msra.mxu0 0.0
        %1038 = vmatprep.subr.mxu0 0.0
        %1039 = vmatpush1.msra.mxu0 0.0
        %1040 = vmatprep.subr.mxu0 0.0
        %1041 = vmatpush1.msra.mxu0 0.0
        %1042 = vmatprep.subr.mxu0 0.0
        %1043 = vmatpush1.msra.mxu0 0.0
        %1044 = vmatprep.subr.mxu0 0.0
        %1045 = vmatpush1.msra.mxu0 0.0
        %1046 = vmatprep.subr.mxu0 0.0
        %1047 = vmatpush1.msra.mxu0 0.0
        %1048 = vmatprep.subr.mxu0 0.0
        %1049 = vmatpush1.msra.mxu0 0.0
        %1050 = vmatprep.subr.mxu0 0.0
        %1051 = vmatpush1.msra.mxu0 0.0
        %1052 = vmatprep.subr.mxu0 0.0
        %1053 = vmatpush1.msra.mxu0 0.0
        %1054 = vmatprep.subr.mxu0 0.0
        %1055 = vmatpush1.msra.mxu0 0.0
        %1056 = vmatprep.subr.mxu0 0.0
        %1057 = vmatpush1.msra.mxu0 0.0
        %1058 = vmatprep.subr.mxu0 0.0
        %1059 = vmatpush1.msra.mxu0 0.0
        %1060 = vmatprep.subr.mxu0 0.0
        %1061 = vmatpush1.msra.mxu0 0.0
        %1062 = vmatprep.subr.mxu0 0.0
        %1063 = vmatpush1.msra.mxu0 0.0
        %1064 = vmatprep.subr.mxu0 0.0
        %1065 = vmatpush1.msra.mxu0 0.0
        %1066 = vmatprep.subr.mxu0 0.0
        %1067 = vmatpush1.msra.mxu0 0.0
        %1068 = vmatprep.subr.mxu0 0.0
        %1069 = vmatpush1.msra.mxu0 0.0
        %1070 = vmatprep.subr.mxu0 0.0
        %1071 = vmatpush1.msra.mxu0 0.0
        %1072 = vmatprep.subr.mxu0 0.0
        %1073 = vmatpush1.msra.mxu0 0.0
        %1074 = vmatprep.subr.mxu0 0.0
        %1075 = vmatpush1.msra.mxu0 0.0
        %1076 = vmatprep.subr.mxu0 0.0
        %1077 = vmatpush1.msra.mxu0 0.0
        %1078 = vmatprep.mubr.f32.mxu0 0.0
        %v1079 = vand.u32 %v831, 4294901760
        %v1080 = vsub.f32 %v831, %v1079
        %1081 = vmatmul.mubr.f32.gmra.mrb[0].mxu0 %v1080
        %v1082 = vpop.f32.mrb[0].mxu0
        %v1083 = vadd.f32 %v1001, %v1082
        %v1084 = vpop.f32.mrb[0].mxu0
        %1085 = vmatprep.mubr.f32.mxu0 0.0
        %v1086 = vand.u32 %v834, 4294901760
        %v1087 = vsub.f32 %v834, %v1086
        %1088 = vmatmul.mubr.f32.gmra.mrb[0].mxu0 %v1087
        %v1089 = vpop.f32.mrb[0].mxu0
        %v1090 = vadd.f32 %v1007, %v1089
        %v1091 = vpop.f32.mrb[0].mxu0
        %1092 = vdwg.mxu0
        %1093 = vmatprep.subr.mxu0 0.0
        %v1094 = vand.u32 %v821, 4294901760
        %1095 = vmatpush1.msra.mxu0 %v1094
        %1096 = vmatprep.subr.mxu0 0.0
        %v1097 = vand.u32 %v827, 4294901760
        %1098 = vmatpush1.msra.mxu0 %v1097
        %1099 = vmatprep.subr.mxu0 0.0
        %1100 = vmatpush1.msra.mxu0 0.0
        %1101 = vmatprep.subr.mxu0 0.0
        %1102 = vmatpush1.msra.mxu0 0.0
        %1103 = vmatprep.subr.mxu0 0.0
        %1104 = vmatpush1.msra.mxu0 0.0
        %1105 = vmatprep.subr.mxu0 0.0
        %1106 = vmatpush1.msra.mxu0 0.0
        %1107 = vmatprep.subr.mxu0 0.0
        %1108 = vmatpush1.msra.mxu0 0.0
        %1109 = vmatprep.subr.mxu0 0.0
        %1110 = vmatpush1.msra.mxu0 0.0
        %1111 = vmatprep.subr.mxu0 0.0
        %1112 = vmatpush1.msra.mxu0 0.0
        %1113 = vmatprep.subr.mxu0 0.0
        %1114 = vmatpush1.msra.mxu0 0.0
        %1115 = vmatprep.subr.mxu0 0.0
        %1116 = vmatpush1.msra.mxu0 0.0
        %1117 = vmatprep.subr.mxu0 0.0
        %1118 = vmatpush1.msra.mxu0 0.0
        %1119 = vmatprep.subr.mxu0 0.0
        %1120 = vmatpush1.msra.mxu0 0.0
        %1121 = vmatprep.subr.mxu0 0.0
        %1122 = vmatpush1.msra.mxu0 0.0
        %1123 = vmatprep.subr.mxu0 0.0
        %1124 = vmatpush1.msra.mxu0 0.0
        %1125 = vmatprep.subr.mxu0 0.0
        %1126 = vmatpush1.msra.mxu0 0.0
        %1127 = vmatprep.subr.mxu0 0.0
        %1128 = vmatpush1.msra.mxu0 0.0
        %1129 = vmatprep.subr.mxu0 0.0
        %1130 = vmatpush1.msra.mxu0 0.0
        %1131 = vmatprep.subr.mxu0 0.0
        %1132 = vmatpush1.msra.mxu0 0.0
        %1133 = vmatprep.subr.mxu0 0.0
        %1134 = vmatpush1.msra.mxu0 0.0
        %1135 = vmatprep.subr.mxu0 0.0
        %1136 = vmatpush1.msra.mxu0 0.0
        %1137 = vmatprep.subr.mxu0 0.0
        %1138 = vmatpush1.msra.mxu0 0.0
        %1139 = vmatprep.subr.mxu0 0.0
        %1140 = vmatpush1.msra.mxu0 0.0
        %1141 = vmatprep.subr.mxu0 0.0
        %1142 = vmatpush1.msra.mxu0 0.0
        %1143 = vmatprep.subr.mxu0 0.0
        %1144 = vmatpush1.msra.mxu0 0.0
        %1145 = vmatprep.subr.mxu0 0.0
        %1146 = vmatpush1.msra.mxu0 0.0
        %1147 = vmatprep.subr.mxu0 0.0
        %1148 = vmatpush1.msra.mxu0 0.0
        %1149 = vmatprep.subr.mxu0 0.0
        %1150 = vmatpush1.msra.mxu0 0.0
        %1151 = vmatprep.subr.mxu0 0.0
        %1152 = vmatpush1.msra.mxu0 0.0
        %1153 = vmatprep.subr.mxu0 0.0
        %1154 = vmatpush1.msra.mxu0 0.0
        %1155 = vmatprep.subr.mxu0 0.0
        %1156 = vmatpush1.msra.mxu0 0.0
        %1157 = vmatprep.subr.mxu0 0.0
        %1158 = vmatpush1.msra.mxu0 0.0
        %1159 = vmatprep.mubr.f32.mxu0 0.0
        %v1160 = vand.u32 %v831, 4294901760
        %v1161 = vsub.f32 %v831, %v1160
        %v1162 = vand.u32 %v1161, 4294901760
        %1163 = vmatmul.mubr.f32.gmra.mrb[0].mxu0 %v1162
        %v1164 = vpop.f32.mrb[0].mxu0
        %v1165 = vadd.f32 %v1083, %v1164
        %v1166 = vpop.f32.mrb[0].mxu0
        %1167 = vmatprep.mubr.f32.mxu0 0.0
        %v1168 = vand.u32 %v834, 4294901760
        %v1169 = vsub.f32 %v834, %v1168
        %v1170 = vand.u32 %v1169, 4294901760
        %1171 = vmatmul.mubr.f32.gmra.mrb[0].mxu0 %v1170
        %v1172 = vpop.f32.mrb[0].mxu0
        %v1173 = vadd.f32 %v1090, %v1172
        %v1174 = vpop.f32.mrb[0].mxu0
        %1175 = vdwg.mxu0
        %1176 = vmatprep.subr.mxu0 0.0
        %v1177 = vand.u32 %v821, 4294901760
        %v1178 = vsub.f32 %v821, %v1177
        %v1179 = vand.u32 %v1178, 4294901760
        %1180 = vmatpush1.msra.mxu0 %v1179
        %1181 = vmatprep.subr.mxu0 0.0
        %v1182 = vand.u32 %v827, 4294901760
        %v1183 = vsub.f32 %v827, %v1182
        %v1184 = vand.u32 %v1183, 4294901760
        %1185 = vmatpush1.msra.mxu0 %v1184
        %1186 = vmatprep.subr.mxu0 0.0
        %1187 = vmatpush1.msra.mxu0 0.0
        %1188 = vmatprep.subr.mxu0 0.0
        %1189 = vmatpush1.msra.mxu0 0.0
        %1190 = vmatprep.subr.mxu0 0.0
        %1191 = vmatpush1.msra.mxu0 0.0
        %1192 = vmatprep.subr.mxu0 0.0
        %1193 = vmatpush1.msra.mxu0 0.0
        %1194 = vmatprep.subr.mxu0 0.0
        %1195 = vmatpush1.msra.mxu0 0.0
        %1196 = vmatprep.subr.mxu0 0.0
        %1197 = vmatpush1.msra.mxu0 0.0
        %1198 = vmatprep.subr.mxu0 0.0
        %1199 = vmatpush1.msra.mxu0 0.0
        %1200 = vmatprep.subr.mxu0 0.0
        %1201 = vmatpush1.msra.mxu0 0.0
        %1202 = vmatprep.subr.mxu0 0.0
        %1203 = vmatpush1.msra.mxu0 0.0
        %1204 = vmatprep.subr.mxu0 0.0
        %1205 = vmatpush1.msra.mxu0 0.0
        %1206 = vmatprep.subr.mxu0 0.0
        %1207 = vmatpush1.msra.mxu0 0.0
        %1208 = vmatprep.subr.mxu0 0.0
        %1209 = vmatpush1.msra.mxu0 0.0
        %1210 = vmatprep.subr.mxu0 0.0
        %1211 = vmatpush1.msra.mxu0 0.0
        %1212 = vmatprep.subr.mxu0 0.0
        %1213 = vmatpush1.msra.mxu0 0.0
        %1214 = vmatprep.subr.mxu0 0.0
        %1215 = vmatpush1.msra.mxu0 0.0
        %1216 = vmatprep.subr.mxu0 0.0
        %1217 = vmatpush1.msra.mxu0 0.0
        %1218 = vmatprep.subr.mxu0 0.0
        %1219 = vmatpush1.msra.mxu0 0.0
        %1220 = vmatprep.subr.mxu0 0.0
        %1221 = vmatpush1.msra.mxu0 0.0
        %1222 = vmatprep.subr.mxu0 0.0
        %1223 = vmatpush1.msra.mxu0 0.0
        %1224 = vmatprep.subr.mxu0 0.0
        %1225 = vmatpush1.msra.mxu0 0.0
        %1226 = vmatprep.subr.mxu0 0.0
        %1227 = vmatpush1.msra.mxu0 0.0
        %1228 = vmatprep.subr.mxu0 0.0
        %1229 = vmatpush1.msra.mxu0 0.0
        %1230 = vmatprep.subr.mxu0 0.0
        %1231 = vmatpush1.msra.mxu0 0.0
        %1232 = vmatprep.subr.mxu0 0.0
        %1233 = vmatpush1.msra.mxu0 0.0
        %1234 = vmatprep.subr.mxu0 0.0
        %1235 = vmatpush1.msra.mxu0 0.0
        %1236 = vmatprep.subr.mxu0 0.0
        %1237 = vmatpush1.msra.mxu0 0.0
        %1238 = vmatprep.subr.mxu0 0.0
        %1239 = vmatpush1.msra.mxu0 0.0
        %1240 = vmatprep.subr.mxu0 0.0
        %1241 = vmatpush1.msra.mxu0 0.0
        %1242 = vmatprep.subr.mxu0 0.0
        %1243 = vmatpush1.msra.mxu0 0.0
        %1244 = vmatprep.subr.mxu0 0.0
        %1245 = vmatpush1.msra.mxu0 0.0
        %1246 = vmatprep.mubr.f32.mxu0 0.0
        %v1247 = vand.u32 %v831, 4294901760
        %1248 = vmatmul.mubr.f32.gmra.mrb[0].mxu0 %v1247
        %v1249 = vpop.f32.mrb[0].mxu0
        %v1250 = vadd.f32 %v1165, %v1249
        %v1251 = vpop.f32.mrb[0].mxu0
        %1252 = vmatprep.mubr.f32.mxu0 0.0
        %v1253 = vand.u32 %v834, 4294901760
        %1254 = vmatmul.mubr.f32.gmra.mrb[0].mxu0 %v1253
        %v1255 = vpop.f32.mrb[0].mxu0
        %v1256 = vadd.f32 %v1173, %v1255
        %v1257 = vpop.f32.mrb[0].mxu0
        %1258 = vdwg.mxu0
        %1259 = vmatprep.subr.mxu0 0.0
        %v1260 = vand.u32 %v821, 4294901760
        %1261 = vmatpush1.msra.mxu0 %v1260
        %1262 = vmatprep.subr.mxu0 0.0
        %v1263 = vand.u32 %v827, 4294901760
        %1264 = vmatpush1.msra.mxu0 %v1263
        %1265 = vmatprep.subr.mxu0 0.0
        %1266 = vmatpush1.msra.mxu0 0.0
        %1267 = vmatprep.subr.mxu0 0.0
        %1268 = vmatpush1.msra.mxu0 0.0
        %1269 = vmatprep.subr.mxu0 0.0
        %1270 = vmatpush1.msra.mxu0 0.0
        %1271 = vmatprep.subr.mxu0 0.0
        %1272 = vmatpush1.msra.mxu0 0.0
        %1273 = vmatprep.subr.mxu0 0.0
        %1274 = vmatpush1.msra.mxu0 0.0
        %1275 = vmatprep.subr.mxu0 0.0
        %1276 = vmatpush1.msra.mxu0 0.0
        %1277 = vmatprep.subr.mxu0 0.0
        %1278 = vmatpush1.msra.mxu0 0.0
        %1279 = vmatprep.subr.mxu0 0.0
        %1280 = vmatpush1.msra.mxu0 0.0
        %1281 = vmatprep.subr.mxu0 0.0
        %1282 = vmatpush1.msra.mxu0 0.0
        %1283 = vmatprep.subr.mxu0 0.0
        %1284 = vmatpush1.msra.mxu0 0.0
        %1285 = vmatprep.subr.mxu0 0.0
        %1286 = vmatpush1.msra.mxu0 0.0
        %1287 = vmatprep.subr.mxu0 0.0
        %1288 = vmatpush1.msra.mxu0 0.0
        %1289 = vmatprep.subr.mxu0 0.0
        %1290 = vmatpush1.msra.mxu0 0.0
        %1291 = vmatprep.subr.mxu0 0.0
        %1292 = vmatpush1.msra.mxu0 0.0
        %1293 = vmatprep.subr.mxu0 0.0
        %1294 = vmatpush1.msra.mxu0 0.0
        %1295 = vmatprep.subr.mxu0 0.0
        %1296 = vmatpush1.msra.mxu0 0.0
        %1297 = vmatprep.subr.mxu0 0.0
        %1298 = vmatpush1.msra.mxu0 0.0
        %1299 = vmatprep.subr.mxu0 0.0
        %1300 = vmatpush1.msra.mxu0 0.0
        %1301 = vmatprep.subr.mxu0 0.0
        %1302 = vmatpush1.msra.mxu0 0.0
        %1303 = vmatprep.subr.mxu0 0.0
        %1304 = vmatpush1.msra.mxu0 0.0
        %1305 = vmatprep.subr.mxu0 0.0
        %1306 = vmatpush1.msra.mxu0 0.0
        %1307 = vmatprep.subr.mxu0 0.0
        %1308 = vmatpush1.msra.mxu0 0.0
        %1309 = vmatprep.subr.mxu0 0.0
        %1310 = vmatpush1.msra.mxu0 0.0
        %1311 = vmatprep.subr.mxu0 0.0
        %1312 = vmatpush1.msra.mxu0 0.0
        %1313 = vmatprep.subr.mxu0 0.0
        %1314 = vmatpush1.msra.mxu0 0.0
        %1315 = vmatprep.subr.mxu0 0.0
        %1316 = vmatpush1.msra.mxu0 0.0
        %1317 = vmatprep.subr.mxu0 0.0
        %1318 = vmatpush1.msra.mxu0 0.0
        %1319 = vmatprep.subr.mxu0 0.0
        %1320 = vmatpush1.msra.mxu0 0.0
        %1321 = vmatprep.subr.mxu0 0.0
        %1322 = vmatpush1.msra.mxu0 0.0
        %1323 = vmatprep.subr.mxu0 0.0
        %1324 = vmatpush1.msra.mxu0 0.0
        %1325 = vmatprep.mubr.f32.mxu0 0.0
        %v1326 = vand.u32 %v831, 4294901760
        %1327 = vmatmul.mubr.f32.gmra.mrb[0].mxu0 %v1326
        %v1328 = vpop.f32.mrb[0].mxu0
        %v1329 = vadd.f32 %v1250, %v1328
        %v1330 = vpop.f32.mrb[0].mxu0
        %1331 = vmatprep.mubr.f32.mxu0 0.0
        %v1332 = vand.u32 %v834, 4294901760
        %1333 = vmatmul.mubr.f32.gmra.mrb[0].mxu0 %v1332
        %v1334 = vpop.f32.mrb[0].mxu0
        %v1335 = vadd.f32 %v1256, %v1334
        %v1336 = vpop.f32.mrb[0].mxu0
        %1337 = vdwg.mxu0
        %v1339 = vsel %vm321, %v315, 0
        %v1342 = vsel %vm321, %v316, 0
        %1344 = vmatprep.subr.mxu0 0.0
        %v1345 = vand.u32 %v317, 4294901760
        %1346 = vmatpush1.msra.mxu0 %v1345
        %1347 = vmatprep.subr.mxu0 0.0
        %v1348 = vand.u32 %v318, 4294901760
        %1349 = vmatpush1.msra.mxu0 %v1348
        %1350 = vmatprep.subr.mxu0 0.0
        %1351 = vmatpush1.msra.mxu0 0.0
        %1352 = vmatprep.subr.mxu0 0.0
        %1353 = vmatpush1.msra.mxu0 0.0
        %1354 = vmatprep.subr.mxu0 0.0
        %1355 = vmatpush1.msra.mxu0 0.0
        %1356 = vmatprep.subr.mxu0 0.0
        %1357 = vmatpush1.msra.mxu0 0.0
        %1358 = vmatprep.subr.mxu0 0.0
        %1359 = vmatpush1.msra.mxu0 0.0
        %1360 = vmatprep.subr.mxu0 0.0
        %1361 = vmatpush1.msra.mxu0 0.0
        %1362 = vmatprep.subr.mxu0 0.0
        %1363 = vmatpush1.msra.mxu0 0.0
        %1364 = vmatprep.subr.mxu0 0.0
        %1365 = vmatpush1.msra.mxu0 0.0
        %1366 = vmatprep.subr.mxu0 0.0
        %1367 = vmatpush1.msra.mxu0 0.0
        %1368 = vmatprep.subr.mxu0 0.0
        %1369 = vmatpush1.msra.mxu0 0.0
        %1370 = vmatprep.subr.mxu0 0.0
        %1371 = vmatpush1.msra.mxu0 0.0
        %1372 = vmatprep.subr.mxu0 0.0
        %1373 = vmatpush1.msra.mxu0 0.0
        %1374 = vmatprep.subr.mxu0 0.0
        %1375 = vmatpush1.msra.mxu0 0.0
        %1376 = vmatprep.subr.mxu0 0.0
        %1377 = vmatpush1.msra.mxu0 0.0
        %1378 = vmatprep.subr.mxu0 0.0
        %1379 = vmatpush1.msra.mxu0 0.0
        %1380 = vmatprep.subr.mxu0 0.0
        %1381 = vmatpush1.msra.mxu0 0.0
        %1382 = vmatprep.subr.mxu0 0.0
        %1383 = vmatpush1.msra.mxu0 0.0
        %1384 = vmatprep.subr.mxu0 0.0
        %1385 = vmatpush1.msra.mxu0 0.0
        %1386 = vmatprep.subr.mxu0 0.0
        %1387 = vmatpush1.msra.mxu0 0.0
        %1388 = vmatprep.subr.mxu0 0.0
        %1389 = vmatpush1.msra.mxu0 0.0
        %1390 = vmatprep.subr.mxu0 0.0
        %1391 = vmatpush1.msra.mxu0 0.0
        %1392 = vmatprep.subr.mxu0 0.0
        %1393 = vmatpush1.msra.mxu0 0.0
        %1394 = vmatprep.subr.mxu0 0.0
        %1395 = vmatpush1.msra.mxu0 0.0
        %1396 = vmatprep.subr.mxu0 0.0
        %1397 = vmatpush1.msra.mxu0 0.0
        %1398 = vmatprep.subr.mxu0 0.0
        %1399 = vmatpush1.msra.mxu0 0.0
        %1400 = vmatprep.subr.mxu0 0.0
        %1401 = vmatpush1.msra.mxu0 0.0
        %1402 = vmatprep.subr.mxu0 0.0
        %1403 = vmatpush1.msra.mxu0 0.0
        %1404 = vmatprep.subr.mxu0 0.0
        %1405 = vmatpush1.msra.mxu0 0.0
        %1406 = vmatprep.subr.mxu0 0.0
        %1407 = vmatpush1.msra.mxu0 0.0
        %1408 = vmatprep.subr.mxu0 0.0
        %1409 = vmatpush1.msra.mxu0 0.0
        %1410 = vmatprep.mubr.f32.mxu0 0.0
        %v1411 = vand.u32 %v1339, 4294901760
        %v1412 = vsub.f32 %v1339, %v1411
        %v1413 = vand.u32 %v1412, 4294901760
        %v1414 = vsub.f32 %v1412, %v1413
        %v1415 = vand.u32 %v1414, 4294901760
        %1416 = vmatmul.mubr.f32.gmra.mrb[0].mxu0 %v1415
        %v1417 = vpop.f32.mrb[0].mxu0
        %v1418 = vadd.f32 0.0, %v1417
        %v1419 = vpop.f32.mrb[0].mxu0
        %1420 = vmatprep.mubr.f32.mxu0 0.0
        %v1421 = vand.u32 %v1342, 4294901760
        %v1422 = vsub.f32 %v1342, %v1421
        %v1423 = vand.u32 %v1422, 4294901760
        %v1424 = vsub.f32 %v1422, %v1423
        %v1425 = vand.u32 %v1424, 4294901760
        %1426 = vmatmul.mubr.f32.gmra.mrb[0].mxu0 %v1425
        %v1427 = vpop.f32.mrb[0].mxu0
        %v1428 = vadd.f32 0.0, %v1427
        %v1429 = vpop.f32.mrb[0].mxu0
        %1430 = vdwg.mxu0
        %1431 = vmatprep.subr.mxu0 0.0
        %v1432 = vand.u32 %v317, 4294901760
        %v1433 = vsub.f32 %v317, %v1432
        %v1434 = vand.u32 %v1433, 4294901760
        %v1435 = vsub.f32 %v1433, %v1434
        %v1436 = vand.u32 %v1435, 4294901760
        %1437 = vmatpush1.msra.mxu0 %v1436
        %1438 = vmatprep.subr.mxu0 0.0
        %v1439 = vand.u32 %v318, 4294901760
        %v1440 = vsub.f32 %v318, %v1439
        %v1441 = vand.u32 %v1440, 4294901760
        %v1442 = vsub.f32 %v1440, %v1441
        %v1443 = vand.u32 %v1442, 4294901760
        %1444 = vmatpush1.msra.mxu0 %v1443
        %1445 = vmatprep.subr.mxu0 0.0
        %1446 = vmatpush1.msra.mxu0 0.0
        %1447 = vmatprep.subr.mxu0 0.0
        %1448 = vmatpush1.msra.mxu0 0.0
        %1449 = vmatprep.subr.mxu0 0.0
        %1450 = vmatpush1.msra.mxu0 0.0
        %1451 = vmatprep.subr.mxu0 0.0
        %1452 = vmatpush1.msra.mxu0 0.0
        %1453 = vmatprep.subr.mxu0 0.0
        %1454 = vmatpush1.msra.mxu0 0.0
        %1455 = vmatprep.subr.mxu0 0.0
        %1456 = vmatpush1.msra.mxu0 0.0
        %1457 = vmatprep.subr.mxu0 0.0
        %1458 = vmatpush1.msra.mxu0 0.0
        %1459 = vmatprep.subr.mxu0 0.0
        %1460 = vmatpush1.msra.mxu0 0.0
        %1461 = vmatprep.subr.mxu0 0.0
        %1462 = vmatpush1.msra.mxu0 0.0
        %1463 = vmatprep.subr.mxu0 0.0
        %1464 = vmatpush1.msra.mxu0 0.0
        %1465 = vmatprep.subr.mxu0 0.0
        %1466 = vmatpush1.msra.mxu0 0.0
        %1467 = vmatprep.subr.mxu0 0.0
        %1468 = vmatpush1.msra.mxu0 0.0
        %1469 = vmatprep.subr.mxu0 0.0
        %1470 = vmatpush1.msra.mxu0 0.0
        %1471 = vmatprep.subr.mxu0 0.0
        %1472 = vmatpush1.msra.mxu0 0.0
        %1473 = vmatprep.subr.mxu0 0.0
        %1474 = vmatpush1.msra.mxu0 0.0
        %1475 = vmatprep.subr.mxu0 0.0
        %1476 = vmatpush1.msra.mxu0 0.0
        %1477 = vmatprep.subr.mxu0 0.0
        %1478 = vmatpush1.msra.mxu0 0.0
        %1479 = vmatprep.subr.mxu0 0.0
        %1480 = vmatpush1.msra.mxu0 0.0
        %1481 = vmatprep.subr.mxu0 0.0
        %1482 = vmatpush1.msra.mxu0 0.0
        %1483 = vmatprep.subr.mxu0 0.0
        %1484 = vmatpush1.msra.mxu0 0.0
        %1485 = vmatprep.subr.mxu0 0.0
        %1486 = vmatpush1.msra.mxu0 0.0
        %1487 = vmatprep.subr.mxu0 0.0
        %1488 = vmatpush1.msra.mxu0 0.0
        %1489 = vmatprep.subr.mxu0 0.0
        %1490 = vmatpush1.msra.mxu0 0.0
        %1491 = vmatprep.subr.mxu0 0.0
        %1492 = vmatpush1.msra.mxu0 0.0
        %1493 = vmatprep.subr.mxu0 0.0
        %1494 = vmatpush1.msra.mxu0 0.0
        %1495 = vmatprep.subr.mxu0 0.0
        %1496 = vmatpush1.msra.mxu0 0.0
        %1497 = vmatprep.subr.mxu0 0.0
        %1498 = vmatpush1.msra.mxu0 0.0
        %1499 = vmatprep.subr.mxu0 0.0
        %1500 = vmatpush1.msra.mxu0 0.0
        %1501 = vmatprep.subr.mxu0 0.0
        %1502 = vmatpush1.msra.mxu0 0.0
        %1503 = vmatprep.subr.mxu0 0.0
        %1504 = vmatpush1.msra.mxu0 0.0
        %1505 = vmatprep.mubr.f32.mxu0 0.0
        %v1506 = vand.u32 %v1339, 4294901760
        %1507 = vmatmul.mubr.f32.gmra.mrb[0].mxu0 %v1506
        %v1508 = vpop.f32.mrb[0].mxu0
        %v1509 = vadd.f32 %v1418, %v1508
        %v1510 = vpop.f32.mrb[0].mxu0
        %1511 = vmatprep.mubr.f32.mxu0 0.0
        %v1512 = vand.u32 %v1342, 4294901760
        %1513 = vmatmul.mubr.f32.gmra.mrb[0].mxu0 %v1512
        %v1514 = vpop.f32.mrb[0].mxu0
        %v1515 = vadd.f32 %v1428, %v1514
        %v1516 = vpop.f32.mrb[0].mxu0
        %1517 = vdwg.mxu0
        %1518 = vmatprep.subr.mxu0 0.0
        %v1519 = vand.u32 %v317, 4294901760
        %v1520 = vsub.f32 %v317, %v1519
        %1521 = vmatpush1.msra.mxu0 %v1520
        %1522 = vmatprep.subr.mxu0 0.0
        %v1523 = vand.u32 %v318, 4294901760
        %v1524 = vsub.f32 %v318, %v1523
        %1525 = vmatpush1.msra.mxu0 %v1524
        %1526 = vmatprep.subr.mxu0 0.0
        %1527 = vmatpush1.msra.mxu0 0.0
        %1528 = vmatprep.subr.mxu0 0.0
        %1529 = vmatpush1.msra.mxu0 0.0
        %1530 = vmatprep.subr.mxu0 0.0
        %1531 = vmatpush1.msra.mxu0 0.0
        %1532 = vmatprep.subr.mxu0 0.0
        %1533 = vmatpush1.msra.mxu0 0.0
        %1534 = vmatprep.subr.mxu0 0.0
        %1535 = vmatpush1.msra.mxu0 0.0
        %1536 = vmatprep.subr.mxu0 0.0
        %1537 = vmatpush1.msra.mxu0 0.0
        %1538 = vmatprep.subr.mxu0 0.0
        %1539 = vmatpush1.msra.mxu0 0.0
        %1540 = vmatprep.subr.mxu0 0.0
        %1541 = vmatpush1.msra.mxu0 0.0
        %1542 = vmatprep.subr.mxu0 0.0
        %1543 = vmatpush1.msra.mxu0 0.0
        %1544 = vmatprep.subr.mxu0 0.0
        %1545 = vmatpush1.msra.mxu0 0.0
        %1546 = vmatprep.subr.mxu0 0.0
        %1547 = vmatpush1.msra.mxu0 0.0
        %1548 = vmatprep.subr.mxu0 0.0
        %1549 = vmatpush1.msra.mxu0 0.0
        %1550 = vmatprep.subr.mxu0 0.0
        %1551 = vmatpush1.msra.mxu0 0.0
        %1552 = vmatprep.subr.mxu0 0.0
        %1553 = vmatpush1.msra.mxu0 0.0
        %1554 = vmatprep.subr.mxu0 0.0
        %1555 = vmatpush1.msra.mxu0 0.0
        %1556 = vmatprep.subr.mxu0 0.0
        %1557 = vmatpush1.msra.mxu0 0.0
        %1558 = vmatprep.subr.mxu0 0.0
        %1559 = vmatpush1.msra.mxu0 0.0
        %1560 = vmatprep.subr.mxu0 0.0
        %1561 = vmatpush1.msra.mxu0 0.0
        %1562 = vmatprep.subr.mxu0 0.0
        %1563 = vmatpush1.msra.mxu0 0.0
        %1564 = vmatprep.subr.mxu0 0.0
        %1565 = vmatpush1.msra.mxu0 0.0
        %1566 = vmatprep.subr.mxu0 0.0
        %1567 = vmatpush1.msra.mxu0 0.0
        %1568 = vmatprep.subr.mxu0 0.0
        %1569 = vmatpush1.msra.mxu0 0.0
        %1570 = vmatprep.subr.mxu0 0.0
        %1571 = vmatpush1.msra.mxu0 0.0
        %1572 = vmatprep.subr.mxu0 0.0
        %1573 = vmatpush1.msra.mxu0 0.0
        %1574 = vmatprep.subr.mxu0 0.0
        %1575 = vmatpush1.msra.mxu0 0.0
        %1576 = vmatprep.subr.mxu0 0.0
        %1577 = vmatpush1.msra.mxu0 0.0
        %1578 = vmatprep.subr.mxu0 0.0
        %1579 = vmatpush1.msra.mxu0 0.0
        %1580 = vmatprep.subr.mxu0 0.0
        %1581 = vmatpush1.msra.mxu0 0.0
        %1582 = vmatprep.subr.mxu0 0.0
        %1583 = vmatpush1.msra.mxu0 0.0
        %1584 = vmatprep.subr.mxu0 0.0
        %1585 = vmatpush1.msra.mxu0 0.0
        %1586 = vmatprep.mubr.f32.mxu0 0.0
        %v1587 = vand.u32 %v1339, 4294901760
        %v1588 = vsub.f32 %v1339, %v1587
        %1589 = vmatmul.mubr.f32.gmra.mrb[0].mxu0 %v1588
        %v1590 = vpop.f32.mrb[0].mxu0
        %v1591 = vadd.f32 %v1509, %v1590
        %v1592 = vpop.f32.mrb[0].mxu0
        %1593 = vmatprep.mubr.f32.mxu0 0.0
        %v1594 = vand.u32 %v1342, 4294901760
        %v1595 = vsub.f32 %v1342, %v1594
        %1596 = vmatmul.mubr.f32.gmra.mrb[0].mxu0 %v1595
        %v1597 = vpop.f32.mrb[0].mxu0
        %v1598 = vadd.f32 %v1515, %v1597
        %v1599 = vpop.f32.mrb[0].mxu0
        %1600 = vdwg.mxu0
        %1601 = vmatprep.subr.mxu0 0.0
        %v1602 = vand.u32 %v317, 4294901760
        %1603 = vmatpush1.msra.mxu0 %v1602
        %1604 = vmatprep.subr.mxu0 0.0
        %v1605 = vand.u32 %v318, 4294901760
        %1606 = vmatpush1.msra.mxu0 %v1605
        %1607 = vmatprep.subr.mxu0 0.0
        %1608 = vmatpush1.msra.mxu0 0.0
        %1609 = vmatprep.subr.mxu0 0.0
        %1610 = vmatpush1.msra.mxu0 0.0
        %1611 = vmatprep.subr.mxu0 0.0
        %1612 = vmatpush1.msra.mxu0 0.0
        %1613 = vmatprep.subr.mxu0 0.0
        %1614 = vmatpush1.msra.mxu0 0.0
        %1615 = vmatprep.subr.mxu0 0.0
        %1616 = vmatpush1.msra.mxu0 0.0
        %1617 = vmatprep.subr.mxu0 0.0
        %1618 = vmatpush1.msra.mxu0 0.0
        %1619 = vmatprep.subr.mxu0 0.0
        %1620 = vmatpush1.msra.mxu0 0.0
        %1621 = vmatprep.subr.mxu0 0.0
        %1622 = vmatpush1.msra.mxu0 0.0
        %1623 = vmatprep.subr.mxu0 0.0
        %1624 = vmatpush1.msra.mxu0 0.0
        %1625 = vmatprep.subr.mxu0 0.0
        %1626 = vmatpush1.msra.mxu0 0.0
        %1627 = vmatprep.subr.mxu0 0.0
        %1628 = vmatpush1.msra.mxu0 0.0
        %1629 = vmatprep.subr.mxu0 0.0
        %1630 = vmatpush1.msra.mxu0 0.0
        %1631 = vmatprep.subr.mxu0 0.0
        %1632 = vmatpush1.msra.mxu0 0.0
        %1633 = vmatprep.subr.mxu0 0.0
        %1634 = vmatpush1.msra.mxu0 0.0
        %1635 = vmatprep.subr.mxu0 0.0
        %1636 = vmatpush1.msra.mxu0 0.0
        %1637 = vmatprep.subr.mxu0 0.0
        %1638 = vmatpush1.msra.mxu0 0.0
        %1639 = vmatprep.subr.mxu0 0.0
        %1640 = vmatpush1.msra.mxu0 0.0
        %1641 = vmatprep.subr.mxu0 0.0
        %1642 = vmatpush1.msra.mxu0 0.0
        %1643 = vmatprep.subr.mxu0 0.0
        %1644 = vmatpush1.msra.mxu0 0.0
        %1645 = vmatprep.subr.mxu0 0.0
        %1646 = vmatpush1.msra.mxu0 0.0
        %1647 = vmatprep.subr.mxu0 0.0
        %1648 = vmatpush1.msra.mxu0 0.0
        %1649 = vmatprep.subr.mxu0 0.0
        %1650 = vmatpush1.msra.mxu0 0.0
        %1651 = vmatprep.subr.mxu0 0.0
        %1652 = vmatpush1.msra.mxu0 0.0
        %1653 = vmatprep.subr.mxu0 0.0
        %1654 = vmatpush1.msra.mxu0 0.0
        %1655 = vmatprep.subr.mxu0 0.0
        %1656 = vmatpush1.msra.mxu0 0.0
        %1657 = vmatprep.subr.mxu0 0.0
        %1658 = vmatpush1.msra.mxu0 0.0
        %1659 = vmatprep.subr.mxu0 0.0
        %1660 = vmatpush1.msra.mxu0 0.0
        %1661 = vmatprep.subr.mxu0 0.0
        %1662 = vmatpush1.msra.mxu0 0.0
        %1663 = vmatprep.subr.mxu0 0.0
        %1664 = vmatpush1.msra.mxu0 0.0
        %1665 = vmatprep.subr.mxu0 0.0
        %1666 = vmatpush1.msra.mxu0 0.0
        %1667 = vmatprep.mubr.f32.mxu0 0.0
        %v1668 = vand.u32 %v1339, 4294901760
        %v1669 = vsub.f32 %v1339, %v1668
        %v1670 = vand.u32 %v1669, 4294901760
        %1671 = vmatmul.mubr.f32.gmra.mrb[0].mxu0 %v1670
        %v1672 = vpop.f32.mrb[0].mxu0
        %v1673 = vadd.f32 %v1591, %v1672
        %v1674 = vpop.f32.mrb[0].mxu0
        %1675 = vmatprep.mubr.f32.mxu0 0.0
        %v1676 = vand.u32 %v1342, 4294901760
        %v1677 = vsub.f32 %v1342, %v1676
        %v1678 = vand.u32 %v1677, 4294901760
        %1679 = vmatmul.mubr.f32.gmra.mrb[0].mxu0 %v1678
        %v1680 = vpop.f32.mrb[0].mxu0
        %v1681 = vadd.f32 %v1598, %v1680
        %v1682 = vpop.f32.mrb[0].mxu0
        %1683 = vdwg.mxu0
        %1684 = vmatprep.subr.mxu0 0.0
        %v1685 = vand.u32 %v317, 4294901760
        %v1686 = vsub.f32 %v317, %v1685
        %v1687 = vand.u32 %v1686, 4294901760
        %1688 = vmatpush1.msra.mxu0 %v1687
        %1689 = vmatprep.subr.mxu0 0.0
        %v1690 = vand.u32 %v318, 4294901760
        %v1691 = vsub.f32 %v318, %v1690
        %v1692 = vand.u32 %v1691, 4294901760
        %1693 = vmatpush1.msra.mxu0 %v1692
        %1694 = vmatprep.subr.mxu0 0.0
        %1695 = vmatpush1.msra.mxu0 0.0
        %1696 = vmatprep.subr.mxu0 0.0
        %1697 = vmatpush1.msra.mxu0 0.0
        %1698 = vmatprep.subr.mxu0 0.0
        %1699 = vmatpush1.msra.mxu0 0.0
        %1700 = vmatprep.subr.mxu0 0.0
        %1701 = vmatpush1.msra.mxu0 0.0
        %1702 = vmatprep.subr.mxu0 0.0
        %1703 = vmatpush1.msra.mxu0 0.0
        %1704 = vmatprep.subr.mxu0 0.0
        %1705 = vmatpush1.msra.mxu0 0.0
        %1706 = vmatprep.subr.mxu0 0.0
        %1707 = vmatpush1.msra.mxu0 0.0
        %1708 = vmatprep.subr.mxu0 0.0
        %1709 = vmatpush1.msra.mxu0 0.0
        %1710 = vmatprep.subr.mxu0 0.0
        %1711 = vmatpush1.msra.mxu0 0.0
        %1712 = vmatprep.subr.mxu0 0.0
        %1713 = vmatpush1.msra.mxu0 0.0
        %1714 = vmatprep.subr.mxu0 0.0
        %1715 = vmatpush1.msra.mxu0 0.0
        %1716 = vmatprep.subr.mxu0 0.0
        %1717 = vmatpush1.msra.mxu0 0.0
        %1718 = vmatprep.subr.mxu0 0.0
        %1719 = vmatpush1.msra.mxu0 0.0
        %1720 = vmatprep.subr.mxu0 0.0
        %1721 = vmatpush1.msra.mxu0 0.0
        %1722 = vmatprep.subr.mxu0 0.0
        %1723 = vmatpush1.msra.mxu0 0.0
        %1724 = vmatprep.subr.mxu0 0.0
        %1725 = vmatpush1.msra.mxu0 0.0
        %1726 = vmatprep.subr.mxu0 0.0
        %1727 = vmatpush1.msra.mxu0 0.0
        %1728 = vmatprep.subr.mxu0 0.0
        %1729 = vmatpush1.msra.mxu0 0.0
        %1730 = vmatprep.subr.mxu0 0.0
        %1731 = vmatpush1.msra.mxu0 0.0
        %1732 = vmatprep.subr.mxu0 0.0
        %1733 = vmatpush1.msra.mxu0 0.0
        %1734 = vmatprep.subr.mxu0 0.0
        %1735 = vmatpush1.msra.mxu0 0.0
        %1736 = vmatprep.subr.mxu0 0.0
        %1737 = vmatpush1.msra.mxu0 0.0
        %1738 = vmatprep.subr.mxu0 0.0
        %1739 = vmatpush1.msra.mxu0 0.0
        %1740 = vmatprep.subr.mxu0 0.0
        %1741 = vmatpush1.msra.mxu0 0.0
        %1742 = vmatprep.subr.mxu0 0.0
        %1743 = vmatpush1.msra.mxu0 0.0
        %1744 = vmatprep.subr.mxu0 0.0
        %1745 = vmatpush1.msra.mxu0 0.0
        %1746 = vmatprep.subr.mxu0 0.0
        %1747 = vmatpush1.msra.mxu0 0.0
        %1748 = vmatprep.subr.mxu0 0.0
        %1749 = vmatpush1.msra.mxu0 0.0
        %1750 = vmatprep.subr.mxu0 0.0
        %1751 = vmatpush1.msra.mxu0 0.0
        %1752 = vmatprep.subr.mxu0 0.0
        %1753 = vmatpush1.msra.mxu0 0.0
        %1754 = vmatprep.mubr.f32.mxu0 0.0
        %v1755 = vand.u32 %v1339, 4294901760
        %1756 = vmatmul.mubr.f32.gmra.mrb[0].mxu0 %v1755
        %v1757 = vpop.f32.mrb[0].mxu0
        %v1758 = vadd.f32 %v1673, %v1757
        %v1759 = vpop.f32.mrb[0].mxu0
        %1760 = vmatprep.mubr.f32.mxu0 0.0
        %v1761 = vand.u32 %v1342, 4294901760
        %1762 = vmatmul.mubr.f32.gmra.mrb[0].mxu0 %v1761
        %v1763 = vpop.f32.mrb[0].mxu0
        %v1764 = vadd.f32 %v1681, %v1763
        %v1765 = vpop.f32.mrb[0].mxu0
        %1766 = vdwg.mxu0
        %1767 = vmatprep.subr.mxu0 0.0
        %v1768 = vand.u32 %v317, 4294901760
        %1769 = vmatpush1.msra.mxu0 %v1768
        %1770 = vmatprep.subr.mxu0 0.0
        %v1771 = vand.u32 %v318, 4294901760
        %1772 = vmatpush1.msra.mxu0 %v1771
        %1773 = vmatprep.subr.mxu0 0.0
        %1774 = vmatpush1.msra.mxu0 0.0
        %1775 = vmatprep.subr.mxu0 0.0
        %1776 = vmatpush1.msra.mxu0 0.0
        %1777 = vmatprep.subr.mxu0 0.0
        %1778 = vmatpush1.msra.mxu0 0.0
        %1779 = vmatprep.subr.mxu0 0.0
        %1780 = vmatpush1.msra.mxu0 0.0
        %1781 = vmatprep.subr.mxu0 0.0
        %1782 = vmatpush1.msra.mxu0 0.0
        %1783 = vmatprep.subr.mxu0 0.0
        %1784 = vmatpush1.msra.mxu0 0.0
        %1785 = vmatprep.subr.mxu0 0.0
        %1786 = vmatpush1.msra.mxu0 0.0
        %1787 = vmatprep.subr.mxu0 0.0
        %1788 = vmatpush1.msra.mxu0 0.0
        %1789 = vmatprep.subr.mxu0 0.0
        %1790 = vmatpush1.msra.mxu0 0.0
        %1791 = vmatprep.subr.mxu0 0.0
        %1792 = vmatpush1.msra.mxu0 0.0
        %1793 = vmatprep.subr.mxu0 0.0
        %1794 = vmatpush1.msra.mxu0 0.0
        %1795 = vmatprep.subr.mxu0 0.0
        %1796 = vmatpush1.msra.mxu0 0.0
        %1797 = vmatprep.subr.mxu0 0.0
        %1798 = vmatpush1.msra.mxu0 0.0
        %1799 = vmatprep.subr.mxu0 0.0
        %1800 = vmatpush1.msra.mxu0 0.0
        %1801 = vmatprep.subr.mxu0 0.0
        %1802 = vmatpush1.msra.mxu0 0.0
        %1803 = vmatprep.subr.mxu0 0.0
        %1804 = vmatpush1.msra.mxu0 0.0
        %1805 = vmatprep.subr.mxu0 0.0
        %1806 = vmatpush1.msra.mxu0 0.0
        %1807 = vmatprep.subr.mxu0 0.0
        %1808 = vmatpush1.msra.mxu0 0.0
        %1809 = vmatprep.subr.mxu0 0.0
        %1810 = vmatpush1.msra.mxu0 0.0
        %1811 = vmatprep.subr.mxu0 0.0
        %1812 = vmatpush1.msra.mxu0 0.0
        %1813 = vmatprep.subr.mxu0 0.0
        %1814 = vmatpush1.msra.mxu0 0.0
        %1815 = vmatprep.subr.mxu0 0.0
        %1816 = vmatpush1.msra.mxu0 0.0
        %1817 = vmatprep.subr.mxu0 0.0
        %1818 = vmatpush1.msra.mxu0 0.0
        %1819 = vmatprep.subr.mxu0 0.0
        %1820 = vmatpush1.msra.mxu0 0.0
        %1821 = vmatprep.subr.mxu0 0.0
        %1822 = vmatpush1.msra.mxu0 0.0
        %1823 = vmatprep.subr.mxu0 0.0
        %1824 = vmatpush1.msra.mxu0 0.0
        %1825 = vmatprep.subr.mxu0 0.0
        %1826 = vmatpush1.msra.mxu0 0.0
        %1827 = vmatprep.subr.mxu0 0.0
        %1828 = vmatpush1.msra.mxu0 0.0
        %1829 = vmatprep.subr.mxu0 0.0
        %1830 = vmatpush1.msra.mxu0 0.0
        %1831 = vmatprep.subr.mxu0 0.0
        %1832 = vmatpush1.msra.mxu0 0.0
        %1833 = vmatprep.mubr.f32.mxu0 0.0
        %v1834 = vand.u32 %v1339, 4294901760
        %1835 = vmatmul.mubr.f32.gmra.mrb[0].mxu0 %v1834
        %v1836 = vpop.f32.mrb[0].mxu0
        %v1837 = vadd.f32 %v1758, %v1836
        %v1838 = vpop.f32.mrb[0].mxu0
        %1839 = vmatprep.mubr.f32.mxu0 0.0
        %v1840 = vand.u32 %v1342, 4294901760
        %1841 = vmatmul.mubr.f32.gmra.mrb[0].mxu0 %v1840
        %v1842 = vpop.f32.mrb[0].mxu0
        %v1843 = vadd.f32 %v1764, %v1842
        %v1844 = vpop.f32.mrb[0].mxu0
        %1845 = vdwg.mxu0
        %1846 = vmatprep.subr.mxu0 0.0
        %v1847 = vand.u32 %v1837, 4294901760
        %1848 = vmatpush1.msra.mxu0 %v1847
        %1849 = vmatprep.subr.mxu0 0.0
        %v1850 = vand.u32 %v1843, 4294901760
        %1851 = vmatpush1.msra.mxu0 %v1850
        %1852 = vmatprep.subr.mxu0 0.0
        %1853 = vmatpush1.msra.mxu0 0.0
        %1854 = vmatprep.subr.mxu0 0.0
        %1855 = vmatpush1.msra.mxu0 0.0
        %1856 = vmatprep.subr.mxu0 0.0
        %1857 = vmatpush1.msra.mxu0 0.0
        %1858 = vmatprep.subr.mxu0 0.0
        %1859 = vmatpush1.msra.mxu0 0.0
        %1860 = vmatprep.subr.mxu0 0.0
        %1861 = vmatpush1.msra.mxu0 0.0
        %1862 = vmatprep.subr.mxu0 0.0
        %1863 = vmatpush1.msra.mxu0 0.0
        %1864 = vmatprep.subr.mxu0 0.0
        %1865 = vmatpush1.msra.mxu0 0.0
        %1866 = vmatprep.subr.mxu0 0.0
        %1867 = vmatpush1.msra.mxu0 0.0
        %1868 = vmatprep.subr.mxu0 0.0
        %1869 = vmatpush1.msra.mxu0 0.0
        %1870 = vmatprep.subr.mxu0 0.0
        %1871 = vmatpush1.msra.mxu0 0.0
        %1872 = vmatprep.subr.mxu0 0.0
        %1873 = vmatpush1.msra.mxu0 0.0
        %1874 = vmatprep.subr.mxu0 0.0
        %1875 = vmatpush1.msra.mxu0 0.0
        %1876 = vmatprep.subr.mxu0 0.0
        %1877 = vmatpush1.msra.mxu0 0.0
        %1878 = vmatprep.subr.mxu0 0.0
        %1879 = vmatpush1.msra.mxu0 0.0
        %1880 = vmatprep.subr.mxu0 0.0
        %1881 = vmatpush1.msra.mxu0 0.0
        %1882 = vmatprep.subr.mxu0 0.0
        %1883 = vmatpush1.msra.mxu0 0.0
        %1884 = vmatprep.subr.mxu0 0.0
        %1885 = vmatpush1.msra.mxu0 0.0
        %1886 = vmatprep.subr.mxu0 0.0
        %1887 = vmatpush1.msra.mxu0 0.0
        %1888 = vmatprep.subr.mxu0 0.0
        %1889 = vmatpush1.msra.mxu0 0.0
        %1890 = vmatprep.subr.mxu0 0.0
        %1891 = vmatpush1.msra.mxu0 0.0
        %1892 = vmatprep.subr.mxu0 0.0
        %1893 = vmatpush1.msra.mxu0 0.0
        %1894 = vmatprep.subr.mxu0 0.0
        %1895 = vmatpush1.msra.mxu0 0.0
        %1896 = vmatprep.subr.mxu0 0.0
        %1897 = vmatpush1.msra.mxu0 0.0
        %1898 = vmatprep.subr.mxu0 0.0
        %1899 = vmatpush1.msra.mxu0 0.0
        %1900 = vmatprep.subr.mxu0 0.0
        %1901 = vmatpush1.msra.mxu0 0.0
        %1902 = vmatprep.subr.mxu0 0.0
        %1903 = vmatpush1.msra.mxu0 0.0
        %1904 = vmatprep.subr.mxu0 0.0
        %1905 = vmatpush1.msra.mxu0 0.0
        %1906 = vmatprep.subr.mxu0 0.0
        %1907 = vmatpush1.msra.mxu0 0.0
        %1908 = vmatprep.subr.mxu0 0.0
        %1909 = vmatpush1.msra.mxu0 0.0
        %1910 = vmatprep.subr.mxu0 0.0
        %1911 = vmatpush1.msra.mxu0 0.0
        %1912 = vmatprep.mubr.f32.mxu0 0.0
        %v1913 = vand.u32 %v831, 4294901760
        %v1914 = vsub.f32 %v831, %v1913
        %v1915 = vand.u32 %v1914, 4294901760
        %v1916 = vsub.f32 %v1914, %v1915
        %v1917 = vand.u32 %v1916, 4294901760
        %1918 = vmatmul.mubr.f32.gmra.mrb[0].mxu0 %v1917
        %v1919 = vpop.f32.mrb[0].mxu0
        %v1920 = vadd.f32 0.0, %v1919
        %v1921 = vpop.f32.mrb[0].mxu0
        %1922 = vmatprep.mubr.f32.mxu0 0.0
        %v1923 = vand.u32 %v834, 4294901760
        %v1924 = vsub.f32 %v834, %v1923
        %v1925 = vand.u32 %v1924, 4294901760
        %v1926 = vsub.f32 %v1924, %v1925
        %v1927 = vand.u32 %v1926, 4294901760
        %1928 = vmatmul.mubr.f32.gmra.mrb[0].mxu0 %v1927
        %v1929 = vpop.f32.mrb[0].mxu0
        %v1930 = vadd.f32 0.0, %v1929
        %v1931 = vpop.f32.mrb[0].mxu0
        %1932 = vdwg.mxu0
        %1933 = vmatprep.subr.mxu0 0.0
        %v1934 = vand.u32 %v1837, 4294901760
        %v1935 = vsub.f32 %v1837, %v1934
        %v1936 = vand.u32 %v1935, 4294901760
        %v1937 = vsub.f32 %v1935, %v1936
        %v1938 = vand.u32 %v1937, 4294901760
        %1939 = vmatpush1.msra.mxu0 %v1938
        %1940 = vmatprep.subr.mxu0 0.0
        %v1941 = vand.u32 %v1843, 4294901760
        %v1942 = vsub.f32 %v1843, %v1941
        %v1943 = vand.u32 %v1942, 4294901760
        %v1944 = vsub.f32 %v1942, %v1943
        %v1945 = vand.u32 %v1944, 4294901760
        %1946 = vmatpush1.msra.mxu0 %v1945
        %1947 = vmatprep.subr.mxu0 0.0
        %1948 = vmatpush1.msra.mxu0 0.0
        %1949 = vmatprep.subr.mxu0 0.0
        %1950 = vmatpush1.msra.mxu0 0.0
        %1951 = vmatprep.subr.mxu0 0.0
        %1952 = vmatpush1.msra.mxu0 0.0
        %1953 = vmatprep.subr.mxu0 0.0
        %1954 = vmatpush1.msra.mxu0 0.0
        %1955 = vmatprep.subr.mxu0 0.0
        %1956 = vmatpush1.msra.mxu0 0.0
        %1957 = vmatprep.subr.mxu0 0.0
        %1958 = vmatpush1.msra.mxu0 0.0
        %1959 = vmatprep.subr.mxu0 0.0
        %1960 = vmatpush1.msra.mxu0 0.0
        %1961 = vmatprep.subr.mxu0 0.0
        %1962 = vmatpush1.msra.mxu0 0.0
        %1963 = vmatprep.subr.mxu0 0.0
        %1964 = vmatpush1.msra.mxu0 0.0
        %1965 = vmatprep.subr.mxu0 0.0
        %1966 = vmatpush1.msra.mxu0 0.0
        %1967 = vmatprep.subr.mxu0 0.0
        %1968 = vmatpush1.msra.mxu0 0.0
        %1969 = vmatprep.subr.mxu0 0.0
        %1970 = vmatpush1.msra.mxu0 0.0
        %1971 = vmatprep.subr.mxu0 0.0
        %1972 = vmatpush1.msra.mxu0 0.0
        %1973 = vmatprep.subr.mxu0 0.0
        %1974 = vmatpush1.msra.mxu0 0.0
        %1975 = vmatprep.subr.mxu0 0.0
        %1976 = vmatpush1.msra.mxu0 0.0
        %1977 = vmatprep.subr.mxu0 0.0
        %1978 = vmatpush1.msra.mxu0 0.0
        %1979 = vmatprep.subr.mxu0 0.0
        %1980 = vmatpush1.msra.mxu0 0.0
        %1981 = vmatprep.subr.mxu0 0.0
        %1982 = vmatpush1.msra.mxu0 0.0
        %1983 = vmatprep.subr.mxu0 0.0
        %1984 = vmatpush1.msra.mxu0 0.0
        %1985 = vmatprep.subr.mxu0 0.0
        %1986 = vmatpush1.msra.mxu0 0.0
        %1987 = vmatprep.subr.mxu0 0.0
        %1988 = vmatpush1.msra.mxu0 0.0
        %1989 = vmatprep.subr.mxu0 0.0
        %1990 = vmatpush1.msra.mxu0 0.0
        %1991 = vmatprep.subr.mxu0 0.0
        %1992 = vmatpush1.msra.mxu0 0.0
        %1993 = vmatprep.subr.mxu0 0.0
        %1994 = vmatpush1.msra.mxu0 0.0
        %1995 = vmatprep.subr.mxu0 0.0
        %1996 = vmatpush1.msra.mxu0 0.0
        %1997 = vmatprep.subr.mxu0 0.0
        %1998 = vmatpush1.msra.mxu0 0.0
        %1999 = vmatprep.subr.mxu0 0.0
        %2000 = vmatpush1.msra.mxu0 0.0
        %2001 = vmatprep.subr.mxu0 0.0
        %2002 = vmatpush1.msra.mxu0 0.0
        %2003 = vmatprep.subr.mxu0 0.0
        %2004 = vmatpush1.msra.mxu0 0.0
        %2005 = vmatprep.subr.mxu0 0.0
        %2006 = vmatpush1.msra.mxu0 0.0
        %2007 = vmatprep.mubr.f32.mxu0 0.0
        %v2008 = vand.u32 %v831, 4294901760
        %2009 = vmatmul.mubr.f32.gmra.mrb[0].mxu0 %v2008
        %v2010 = vpop.f32.mrb[0].mxu0
        %v2011 = vadd.f32 %v1920, %v2010
        %v2012 = vpop.f32.mrb[0].mxu0
        %2013 = vmatprep.mubr.f32.mxu0 0.0
        %v2014 = vand.u32 %v834, 4294901760
        %2015 = vmatmul.mubr.f32.gmra.mrb[0].mxu0 %v2014
        %v2016 = vpop.f32.mrb[0].mxu0
        %v2017 = vadd.f32 %v1930, %v2016
        %v2018 = vpop.f32.mrb[0].mxu0
        %2019 = vdwg.mxu0
        %2020 = vmatprep.subr.mxu0 0.0
        %v2021 = vand.u32 %v1837, 4294901760
        %v2022 = vsub.f32 %v1837, %v2021
        %2023 = vmatpush1.msra.mxu0 %v2022
        %2024 = vmatprep.subr.mxu0 0.0
        %v2025 = vand.u32 %v1843, 4294901760
        %v2026 = vsub.f32 %v1843, %v2025
        %2027 = vmatpush1.msra.mxu0 %v2026
        %2028 = vmatprep.subr.mxu0 0.0
        %2029 = vmatpush1.msra.mxu0 0.0
        %2030 = vmatprep.subr.mxu0 0.0
        %2031 = vmatpush1.msra.mxu0 0.0
        %2032 = vmatprep.subr.mxu0 0.0
        %2033 = vmatpush1.msra.mxu0 0.0
        %2034 = vmatprep.subr.mxu0 0.0
        %2035 = vmatpush1.msra.mxu0 0.0
        %2036 = vmatprep.subr.mxu0 0.0
        %2037 = vmatpush1.msra.mxu0 0.0
        %2038 = vmatprep.subr.mxu0 0.0
        %2039 = vmatpush1.msra.mxu0 0.0
        %2040 = vmatprep.subr.mxu0 0.0
        %2041 = vmatpush1.msra.mxu0 0.0
        %2042 = vmatprep.subr.mxu0 0.0
        %2043 = vmatpush1.msra.mxu0 0.0
        %2044 = vmatprep.subr.mxu0 0.0
        %2045 = vmatpush1.msra.mxu0 0.0
        %2046 = vmatprep.subr.mxu0 0.0
        %2047 = vmatpush1.msra.mxu0 0.0
        %2048 = vmatprep.subr.mxu0 0.0
        %2049 = vmatpush1.msra.mxu0 0.0
        %2050 = vmatprep.subr.mxu0 0.0
        %2051 = vmatpush1.msra.mxu0 0.0
        %2052 = vmatprep.subr.mxu0 0.0
        %2053 = vmatpush1.msra.mxu0 0.0
        %2054 = vmatprep.subr.mxu0 0.0
        %2055 = vmatpush1.msra.mxu0 0.0
        %2056 = vmatprep.subr.mxu0 0.0
        %2057 = vmatpush1.msra.mxu0 0.0
        %2058 = vmatprep.subr.mxu0 0.0
        %2059 = vmatpush1.msra.mxu0 0.0
        %2060 = vmatprep.subr.mxu0 0.0
        %2061 = vmatpush1.msra.mxu0 0.0
        %2062 = vmatprep.subr.mxu0 0.0
        %2063 = vmatpush1.msra.mxu0 0.0
        %2064 = vmatprep.subr.mxu0 0.0
        %2065 = vmatpush1.msra.mxu0 0.0
        %2066 = vmatprep.subr.mxu0 0.0
        %2067 = vmatpush1.msra.mxu0 0.0
        %2068 = vmatprep.subr.mxu0 0.0
        %2069 = vmatpush1.msra.mxu0 0.0
        %2070 = vmatprep.subr.mxu0 0.0
        %2071 = vmatpush1.msra.mxu0 0.0
        %2072 = vmatprep.subr.mxu0 0.0
        %2073 = vmatpush1.msra.mxu0 0.0
        %2074 = vmatprep.subr.mxu0 0.0
        %2075 = vmatpush1.msra.mxu0 0.0
        %2076 = vmatprep.subr.mxu0 0.0
        %2077 = vmatpush1.msra.mxu0 0.0
        %2078 = vmatprep.subr.mxu0 0.0
        %2079 = vmatpush1.msra.mxu0 0.0
        %2080 = vmatprep.subr.mxu0 0.0
        %2081 = vmatpush1.msra.mxu0 0.0
        %2082 = vmatprep.subr.mxu0 0.0
        %2083 = vmatpush1.msra.mxu0 0.0
        %2084 = vmatprep.subr.mxu0 0.0
        %2085 = vmatpush1.msra.mxu0 0.0
        %2086 = vmatprep.subr.mxu0 0.0
        %2087 = vmatpush1.msra.mxu0 0.0
        %2088 = vmatprep.mubr.f32.mxu0 0.0
        %v2089 = vand.u32 %v831, 4294901760
        %v2090 = vsub.f32 %v831, %v2089
        %2091 = vmatmul.mubr.f32.gmra.mrb[0].mxu0 %v2090
        %v2092 = vpop.f32.mrb[0].mxu0
        %v2093 = vadd.f32 %v2011, %v2092
        %v2094 = vpop.f32.mrb[0].mxu0
        %2095 = vmatprep.mubr.f32.mxu0 0.0
        %v2096 = vand.u32 %v834, 4294901760
        %v2097 = vsub.f32 %v834, %v2096
        %2098 = vmatmul.mubr.f32.gmra.mrb[0].mxu0 %v2097
        %v2099 = vpop.f32.mrb[0].mxu0
        %v2100 = vadd.f32 %v2017, %v2099
        %v2101 = vpop.f32.mrb[0].mxu0
        %2102 = vdwg.mxu0
        %2103 = vmatprep.subr.mxu0 0.0
        %v2104 = vand.u32 %v1837, 4294901760
        %2105 = vmatpush1.msra.mxu0 %v2104
        %2106 = vmatprep.subr.mxu0 0.0
        %v2107 = vand.u32 %v1843, 4294901760
        %2108 = vmatpush1.msra.mxu0 %v2107
        %2109 = vmatprep.subr.mxu0 0.0
        %2110 = vmatpush1.msra.mxu0 0.0
        %2111 = vmatprep.subr.mxu0 0.0
        %2112 = vmatpush1.msra.mxu0 0.0
        %2113 = vmatprep.subr.mxu0 0.0
        %2114 = vmatpush1.msra.mxu0 0.0
        %2115 = vmatprep.subr.mxu0 0.0
        %2116 = vmatpush1.msra.mxu0 0.0
        %2117 = vmatprep.subr.mxu0 0.0
        %2118 = vmatpush1.msra.mxu0 0.0
        %2119 = vmatprep.subr.mxu0 0.0
        %2120 = vmatpush1.msra.mxu0 0.0
        %2121 = vmatprep.subr.mxu0 0.0
        %2122 = vmatpush1.msra.mxu0 0.0
        %2123 = vmatprep.subr.mxu0 0.0
        %2124 = vmatpush1.msra.mxu0 0.0
        %2125 = vmatprep.subr.mxu0 0.0
        %2126 = vmatpush1.msra.mxu0 0.0
        %2127 = vmatprep.subr.mxu0 0.0
        %2128 = vmatpush1.msra.mxu0 0.0
        %2129 = vmatprep.subr.mxu0 0.0
        %2130 = vmatpush1.msra.mxu0 0.0
        %2131 = vmatprep.subr.mxu0 0.0
        %2132 = vmatpush1.msra.mxu0 0.0
        %2133 = vmatprep.subr.mxu0 0.0
        %2134 = vmatpush1.msra.mxu0 0.0
        %2135 = vmatprep.subr.mxu0 0.0
        %2136 = vmatpush1.msra.mxu0 0.0
        %2137 = vmatprep.subr.mxu0 0.0
        %2138 = vmatpush1.msra.mxu0 0.0
        %2139 = vmatprep.subr.mxu0 0.0
        %2140 = vmatpush1.msra.mxu0 0.0
        %2141 = vmatprep.subr.mxu0 0.0
        %2142 = vmatpush1.msra.mxu0 0.0
        %2143 = vmatprep.subr.mxu0 0.0
        %2144 = vmatpush1.msra.mxu0 0.0
        %2145 = vmatprep.subr.mxu0 0.0
        %2146 = vmatpush1.msra.mxu0 0.0
        %2147 = vmatprep.subr.mxu0 0.0
        %2148 = vmatpush1.msra.mxu0 0.0
        %2149 = vmatprep.subr.mxu0 0.0
        %2150 = vmatpush1.msra.mxu0 0.0
        %2151 = vmatprep.subr.mxu0 0.0
        %2152 = vmatpush1.msra.mxu0 0.0
        %2153 = vmatprep.subr.mxu0 0.0
        %2154 = vmatpush1.msra.mxu0 0.0
        %2155 = vmatprep.subr.mxu0 0.0
        %2156 = vmatpush1.msra.mxu0 0.0
        %2157 = vmatprep.subr.mxu0 0.0
        %2158 = vmatpush1.msra.mxu0 0.0
        %2159 = vmatprep.subr.mxu0 0.0
        %2160 = vmatpush1.msra.mxu0 0.0
        %2161 = vmatprep.subr.mxu0 0.0
        %2162 = vmatpush1.msra.mxu0 0.0
        %2163 = vmatprep.subr.mxu0 0.0
        %2164 = vmatpush1.msra.mxu0 0.0
        %2165 = vmatprep.subr.mxu0 0.0
        %2166 = vmatpush1.msra.mxu0 0.0
        %2167 = vmatprep.subr.mxu0 0.0
        %2168 = vmatpush1.msra.mxu0 0.0
        %2169 = vmatprep.mubr.f32.mxu0 0.0
        %v2170 = vand.u32 %v831, 4294901760
        %v2171 = vsub.f32 %v831, %v2170
        %v2172 = vand.u32 %v2171, 4294901760
        %2173 = vmatmul.mubr.f32.gmra.mrb[0].mxu0 %v2172
        %v2174 = vpop.f32.mrb[0].mxu0
        %v2175 = vadd.f32 %v2093, %v2174
        %v2176 = vpop.f32.mrb[0].mxu0
        %2177 = vmatprep.mubr.f32.mxu0 0.0
        %v2178 = vand.u32 %v834, 4294901760
        %v2179 = vsub.f32 %v834, %v2178
        %v2180 = vand.u32 %v2179, 4294901760
        %2181 = vmatmul.mubr.f32.gmra.mrb[0].mxu0 %v2180
        %v2182 = vpop.f32.mrb[0].mxu0
        %v2183 = vadd.f32 %v2100, %v2182
        %v2184 = vpop.f32.mrb[0].mxu0
        %2185 = vdwg.mxu0
        %2186 = vmatprep.subr.mxu0 0.0
        %v2187 = vand.u32 %v1837, 4294901760
        %v2188 = vsub.f32 %v1837, %v2187
        %v2189 = vand.u32 %v2188, 4294901760
        %2190 = vmatpush1.msra.mxu0 %v2189
        %2191 = vmatprep.subr.mxu0 0.0
        %v2192 = vand.u32 %v1843, 4294901760
        %v2193 = vsub.f32 %v1843, %v2192
        %v2194 = vand.u32 %v2193, 4294901760
        %2195 = vmatpush1.msra.mxu0 %v2194
        %2196 = vmatprep.subr.mxu0 0.0
        %2197 = vmatpush1.msra.mxu0 0.0
        %2198 = vmatprep.subr.mxu0 0.0
        %2199 = vmatpush1.msra.mxu0 0.0
        %2200 = vmatprep.subr.mxu0 0.0
        %2201 = vmatpush1.msra.mxu0 0.0
        %2202 = vmatprep.subr.mxu0 0.0
        %2203 = vmatpush1.msra.mxu0 0.0
        %2204 = vmatprep.subr.mxu0 0.0
        %2205 = vmatpush1.msra.mxu0 0.0
        %2206 = vmatprep.subr.mxu0 0.0
        %2207 = vmatpush1.msra.mxu0 0.0
        %2208 = vmatprep.subr.mxu0 0.0
        %2209 = vmatpush1.msra.mxu0 0.0
        %2210 = vmatprep.subr.mxu0 0.0
        %2211 = vmatpush1.msra.mxu0 0.0
        %2212 = vmatprep.subr.mxu0 0.0
        %2213 = vmatpush1.msra.mxu0 0.0
        %2214 = vmatprep.subr.mxu0 0.0
        %2215 = vmatpush1.msra.mxu0 0.0
        %2216 = vmatprep.subr.mxu0 0.0
        %2217 = vmatpush1.msra.mxu0 0.0
        %2218 = vmatprep.subr.mxu0 0.0
        %2219 = vmatpush1.msra.mxu0 0.0
        %2220 = vmatprep.subr.mxu0 0.0
        %2221 = vmatpush1.msra.mxu0 0.0
        %2222 = vmatprep.subr.mxu0 0.0
        %2223 = vmatpush1.msra.mxu0 0.0
        %2224 = vmatprep.subr.mxu0 0.0
        %2225 = vmatpush1.msra.mxu0 0.0
        %2226 = vmatprep.subr.mxu0 0.0
        %2227 = vmatpush1.msra.mxu0 0.0
        %2228 = vmatprep.subr.mxu0 0.0
        %2229 = vmatpush1.msra.mxu0 0.0
        %2230 = vmatprep.subr.mxu0 0.0
        %2231 = vmatpush1.msra.mxu0 0.0
        %2232 = vmatprep.subr.mxu0 0.0
        %2233 = vmatpush1.msra.mxu0 0.0
        %2234 = vmatprep.subr.mxu0 0.0
        %2235 = vmatpush1.msra.mxu0 0.0
        %2236 = vmatprep.subr.mxu0 0.0
        %2237 = vmatpush1.msra.mxu0 0.0
        %2238 = vmatprep.subr.mxu0 0.0
        %2239 = vmatpush1.msra.mxu0 0.0
        %2240 = vmatprep.subr.mxu0 0.0
        %2241 = vmatpush1.msra.mxu0 0.0
        %2242 = vmatprep.subr.mxu0 0.0
        %2243 = vmatpush1.msra.mxu0 0.0
        %2244 = vmatprep.subr.mxu0 0.0
        %2245 = vmatpush1.msra.mxu0 0.0
        %2246 = vmatprep.subr.mxu0 0.0
        %2247 = vmatpush1.msra.mxu0 0.0
        %2248 = vmatprep.subr.mxu0 0.0
        %2249 = vmatpush1.msra.mxu0 0.0
        %2250 = vmatprep.subr.mxu0 0.0
        %2251 = vmatpush1.msra.mxu0 0.0
        %2252 = vmatprep.subr.mxu0 0.0
        %2253 = vmatpush1.msra.mxu0 0.0
        %2254 = vmatprep.subr.mxu0 0.0
        %2255 = vmatpush1.msra.mxu0 0.0
        %2256 = vmatprep.mubr.f32.mxu0 0.0
        %v2257 = vand.u32 %v831, 4294901760
        %2258 = vmatmul.mubr.f32.gmra.mrb[0].mxu0 %v2257
        %v2259 = vpop.f32.mrb[0].mxu0
        %v2260 = vadd.f32 %v2175, %v2259
        %v2261 = vpop.f32.mrb[0].mxu0
        %2262 = vmatprep.mubr.f32.mxu0 0.0
        %v2263 = vand.u32 %v834, 4294901760
        %2264 = vmatmul.mubr.f32.gmra.mrb[0].mxu0 %v2263
        %v2265 = vpop.f32.mrb[0].mxu0
        %v2266 = vadd.f32 %v2183, %v2265
        %v2267 = vpop.f32.mrb[0].mxu0
        %2268 = vdwg.mxu0
        %2269 = vmatprep.subr.mxu0 0.0
        %v2270 = vand.u32 %v1837, 4294901760
        %2271 = vmatpush1.msra.mxu0 %v2270
        %2272 = vmatprep.subr.mxu0 0.0
        %v2273 = vand.u32 %v1843, 4294901760
        %2274 = vmatpush1.msra.mxu0 %v2273
        %2275 = vmatprep.subr.mxu0 0.0
        %2276 = vmatpush1.msra.mxu0 0.0
        %2277 = vmatprep.subr.mxu0 0.0
        %2278 = vmatpush1.msra.mxu0 0.0
        %2279 = vmatprep.subr.mxu0 0.0
        %2280 = vmatpush1.msra.mxu0 0.0
        %2281 = vmatprep.subr.mxu0 0.0
        %2282 = vmatpush1.msra.mxu0 0.0
        %2283 = vmatprep.subr.mxu0 0.0
        %2284 = vmatpush1.msra.mxu0 0.0
        %2285 = vmatprep.subr.mxu0 0.0
        %2286 = vmatpush1.msra.mxu0 0.0
        %2287 = vmatprep.subr.mxu0 0.0
        %2288 = vmatpush1.msra.mxu0 0.0
        %2289 = vmatprep.subr.mxu0 0.0
        %2290 = vmatpush1.msra.mxu0 0.0
        %2291 = vmatprep.subr.mxu0 0.0
        %2292 = vmatpush1.msra.mxu0 0.0
        %2293 = vmatprep.subr.mxu0 0.0
        %2294 = vmatpush1.msra.mxu0 0.0
        %2295 = vmatprep.subr.mxu0 0.0
        %2296 = vmatpush1.msra.mxu0 0.0
        %2297 = vmatprep.subr.mxu0 0.0
        %2298 = vmatpush1.msra.mxu0 0.0
        %2299 = vmatprep.subr.mxu0 0.0
        %2300 = vmatpush1.msra.mxu0 0.0
        %2301 = vmatprep.subr.mxu0 0.0
        %2302 = vmatpush1.msra.mxu0 0.0
        %2303 = vmatprep.subr.mxu0 0.0
        %2304 = vmatpush1.msra.mxu0 0.0
        %2305 = vmatprep.subr.mxu0 0.0
        %2306 = vmatpush1.msra.mxu0 0.0
        %2307 = vmatprep.subr.mxu0 0.0
        %2308 = vmatpush1.msra.mxu0 0.0
        %2309 = vmatprep.subr.mxu0 0.0
        %2310 = vmatpush1.msra.mxu0 0.0
        %2311 = vmatprep.subr.mxu0 0.0
        %2312 = vmatpush1.msra.mxu0 0.0
        %2313 = vmatprep.subr.mxu0 0.0
        %2314 = vmatpush1.msra.mxu0 0.0
        %2315 = vmatprep.subr.mxu0 0.0
        %2316 = vmatpush1.msra.mxu0 0.0
        %2317 = vmatprep.subr.mxu0 0.0
        %2318 = vmatpush1.msra.mxu0 0.0
        %2319 = vmatprep.subr.mxu0 0.0
        %2320 = vmatpush1.msra.mxu0 0.0
        %2321 = vmatprep.subr.mxu0 0.0
        %2322 = vmatpush1.msra.mxu0 0.0
        %2323 = vmatprep.subr.mxu0 0.0
        %2324 = vmatpush1.msra.mxu0 0.0
        %2325 = vmatprep.subr.mxu0 0.0
        %2326 = vmatpush1.msra.mxu0 0.0
        %2327 = vmatprep.subr.mxu0 0.0
        %2328 = vmatpush1.msra.mxu0 0.0
        %2329 = vmatprep.subr.mxu0 0.0
        %2330 = vmatpush1.msra.mxu0 0.0
        %2331 = vmatprep.subr.mxu0 0.0
        %2332 = vmatpush1.msra.mxu0 0.0
        %2333 = vmatprep.subr.mxu0 0.0
        %2334 = vmatpush1.msra.mxu0 0.0
        %2335 = vmatprep.mubr.f32.mxu0 0.0
        %v2336 = vand.u32 %v831, 4294901760
        %2337 = vmatmul.mubr.f32.gmra.mrb[0].mxu0 %v2336
        %v2338 = vpop.f32.mrb[0].mxu0
        %v2339 = vadd.f32 %v2260, %v2338
        %v2340 = vpop.f32.mrb[0].mxu0
        %2341 = vmatprep.mubr.f32.mxu0 0.0
        %v2342 = vand.u32 %v834, 4294901760
        %2343 = vmatmul.mubr.f32.gmra.mrb[0].mxu0 %v2342
        %v2344 = vpop.f32.mrb[0].mxu0
        %v2345 = vadd.f32 %v2266, %v2344
        %v2346 = vpop.f32.mrb[0].mxu0
        %2347 = vdwg.mxu0
        %v2348 = vmul.f32 %v313, %v313
        %v2349 = vmul.f32 %v314, %v314
        %v2351 = vsel %vm321, %v2348, 0
        %v2354 = vsel %vm321, %v2349, 0
        %2356 = vmatprep.subr.mxu0 0.0
        %v2357 = vand.u32 %v317, 4294901760
        %2358 = vmatpush1.msra.mxu0 %v2357
        %2359 = vmatprep.subr.mxu0 0.0
        %v2360 = vand.u32 %v318, 4294901760
        %2361 = vmatpush1.msra.mxu0 %v2360
        %2362 = vmatprep.subr.mxu0 0.0
        %2363 = vmatpush1.msra.mxu0 0.0
        %2364 = vmatprep.subr.mxu0 0.0
        %2365 = vmatpush1.msra.mxu0 0.0
        %2366 = vmatprep.subr.mxu0 0.0
        %2367 = vmatpush1.msra.mxu0 0.0
        %2368 = vmatprep.subr.mxu0 0.0
        %2369 = vmatpush1.msra.mxu0 0.0
        %2370 = vmatprep.subr.mxu0 0.0
        %2371 = vmatpush1.msra.mxu0 0.0
        %2372 = vmatprep.subr.mxu0 0.0
        %2373 = vmatpush1.msra.mxu0 0.0
        %2374 = vmatprep.subr.mxu0 0.0
        %2375 = vmatpush1.msra.mxu0 0.0
        %2376 = vmatprep.subr.mxu0 0.0
        %2377 = vmatpush1.msra.mxu0 0.0
        %2378 = vmatprep.subr.mxu0 0.0
        %2379 = vmatpush1.msra.mxu0 0.0
        %2380 = vmatprep.subr.mxu0 0.0
        %2381 = vmatpush1.msra.mxu0 0.0
        %2382 = vmatprep.subr.mxu0 0.0
        %2383 = vmatpush1.msra.mxu0 0.0
        %2384 = vmatprep.subr.mxu0 0.0
        %2385 = vmatpush1.msra.mxu0 0.0
        %2386 = vmatprep.subr.mxu0 0.0
        %2387 = vmatpush1.msra.mxu0 0.0
        %2388 = vmatprep.subr.mxu0 0.0
        %2389 = vmatpush1.msra.mxu0 0.0
        %2390 = vmatprep.subr.mxu0 0.0
        %2391 = vmatpush1.msra.mxu0 0.0
        %2392 = vmatprep.subr.mxu0 0.0
        %2393 = vmatpush1.msra.mxu0 0.0
        %2394 = vmatprep.subr.mxu0 0.0
        %2395 = vmatpush1.msra.mxu0 0.0
        %2396 = vmatprep.subr.mxu0 0.0
        %2397 = vmatpush1.msra.mxu0 0.0
        %2398 = vmatprep.subr.mxu0 0.0
        %2399 = vmatpush1.msra.mxu0 0.0
        %2400 = vmatprep.subr.mxu0 0.0
        %2401 = vmatpush1.msra.mxu0 0.0
        %2402 = vmatprep.subr.mxu0 0.0
        %2403 = vmatpush1.msra.mxu0 0.0
        %2404 = vmatprep.subr.mxu0 0.0
        %2405 = vmatpush1.msra.mxu0 0.0
        %2406 = vmatprep.subr.mxu0 0.0
        %2407 = vmatpush1.msra.mxu0 0.0
        %2408 = vmatprep.subr.mxu0 0.0
        %2409 = vmatpush1.msra.mxu0 0.0
        %2410 = vmatprep.subr.mxu0 0.0
        %2411 = vmatpush1.msra.mxu0 0.0
        %2412 = vmatprep.subr.mxu0 0.0
        %2413 = vmatpush1.msra.mxu0 0.0
        %2414 = vmatprep.subr.mxu0 0.0
        %2415 = vmatpush1.msra.mxu0 0.0
        %2416 = vmatprep.subr.mxu0 0.0
        %2417 = vmatpush1.msra.mxu0 0.0
        %2418 = vmatprep.subr.mxu0 0.0
        %2419 = vmatpush1.msra.mxu0 0.0
        %2420 = vmatprep.subr.mxu0 0.0
        %2421 = vmatpush1.msra.mxu0 0.0
        %2422 = vmatprep.mubr.f32.mxu0 0.0
        %v2423 = vand.u32 %v2351, 4294901760
        %v2424 = vsub.f32 %v2351, %v2423
        %v2425 = vand.u32 %v2424, 4294901760
        %v2426 = vsub.f32 %v2424, %v2425
        %v2427 = vand.u32 %v2426, 4294901760
        %2428 = vmatmul.mubr.f32.gmra.mrb[0].mxu0 %v2427
        %v2429 = vpop.f32.mrb[0].mxu0
        %v2430 = vadd.f32 0.0, %v2429
        %v2431 = vpop.f32.mrb[0].mxu0
        %2432 = vmatprep.mubr.f32.mxu0 0.0
        %v2433 = vand.u32 %v2354, 4294901760
        %v2434 = vsub.f32 %v2354, %v2433
        %v2435 = vand.u32 %v2434, 4294901760
        %v2436 = vsub.f32 %v2434, %v2435
        %v2437 = vand.u32 %v2436, 4294901760
        %2438 = vmatmul.mubr.f32.gmra.mrb[0].mxu0 %v2437
        %v2439 = vpop.f32.mrb[0].mxu0
        %v2440 = vadd.f32 0.0, %v2439
        %v2441 = vpop.f32.mrb[0].mxu0
        %2442 = vdwg.mxu0
        %2443 = vmatprep.subr.mxu0 0.0
        %v2444 = vand.u32 %v317, 4294901760
        %v2445 = vsub.f32 %v317, %v2444
        %v2446 = vand.u32 %v2445, 4294901760
        %v2447 = vsub.f32 %v2445, %v2446
        %v2448 = vand.u32 %v2447, 4294901760
        %2449 = vmatpush1.msra.mxu0 %v2448
        %2450 = vmatprep.subr.mxu0 0.0
        %v2451 = vand.u32 %v318, 4294901760
        %v2452 = vsub.f32 %v318, %v2451
        %v2453 = vand.u32 %v2452, 4294901760
        %v2454 = vsub.f32 %v2452, %v2453
        %v2455 = vand.u32 %v2454, 4294901760
        %2456 = vmatpush1.msra.mxu0 %v2455
        %2457 = vmatprep.subr.mxu0 0.0
        %2458 = vmatpush1.msra.mxu0 0.0
        %2459 = vmatprep.subr.mxu0 0.0
        %2460 = vmatpush1.msra.mxu0 0.0
        %2461 = vmatprep.subr.mxu0 0.0
        %2462 = vmatpush1.msra.mxu0 0.0
        %2463 = vmatprep.subr.mxu0 0.0
        %2464 = vmatpush1.msra.mxu0 0.0
        %2465 = vmatprep.subr.mxu0 0.0
        %2466 = vmatpush1.msra.mxu0 0.0
        %2467 = vmatprep.subr.mxu0 0.0
        %2468 = vmatpush1.msra.mxu0 0.0
        %2469 = vmatprep.subr.mxu0 0.0
        %2470 = vmatpush1.msra.mxu0 0.0
        %2471 = vmatprep.subr.mxu0 0.0
        %2472 = vmatpush1.msra.mxu0 0.0
        %2473 = vmatprep.subr.mxu0 0.0
        %2474 = vmatpush1.msra.mxu0 0.0
        %2475 = vmatprep.subr.mxu0 0.0
        %2476 = vmatpush1.msra.mxu0 0.0
        %2477 = vmatprep.subr.mxu0 0.0
        %2478 = vmatpush1.msra.mxu0 0.0
        %2479 = vmatprep.subr.mxu0 0.0
        %2480 = vmatpush1.msra.mxu0 0.0
        %2481 = vmatprep.subr.mxu0 0.0
        %2482 = vmatpush1.msra.mxu0 0.0
        %2483 = vmatprep.subr.mxu0 0.0
        %2484 = vmatpush1.msra.mxu0 0.0
        %2485 = vmatprep.subr.mxu0 0.0
        %2486 = vmatpush1.msra.mxu0 0.0
        %2487 = vmatprep.subr.mxu0 0.0
        %2488 = vmatpush1.msra.mxu0 0.0
        %2489 = vmatprep.subr.mxu0 0.0
        %2490 = vmatpush1.msra.mxu0 0.0
        %2491 = vmatprep.subr.mxu0 0.0
        %2492 = vmatpush1.msra.mxu0 0.0
        %2493 = vmatprep.subr.mxu0 0.0
        %2494 = vmatpush1.msra.mxu0 0.0
        %2495 = vmatprep.subr.mxu0 0.0
        %2496 = vmatpush1.msra.mxu0 0.0
        %2497 = vmatprep.subr.mxu0 0.0
        %2498 = vmatpush1.msra.mxu0 0.0
        %2499 = vmatprep.subr.mxu0 0.0
        %2500 = vmatpush1.msra.mxu0 0.0
        %2501 = vmatprep.subr.mxu0 0.0
        %2502 = vmatpush1.msra.mxu0 0.0
        %2503 = vmatprep.subr.mxu0 0.0
        %2504 = vmatpush1.msra.mxu0 0.0
        %2505 = vmatprep.subr.mxu0 0.0
        %2506 = vmatpush1.msra.mxu0 0.0
        %2507 = vmatprep.subr.mxu0 0.0
        %2508 = vmatpush1.msra.mxu0 0.0
        %2509 = vmatprep.subr.mxu0 0.0
        %2510 = vmatpush1.msra.mxu0 0.0
        %2511 = vmatprep.subr.mxu0 0.0
        %2512 = vmatpush1.msra.mxu0 0.0
        %2513 = vmatprep.subr.mxu0 0.0
        %2514 = vmatpush1.msra.mxu0 0.0
        %2515 = vmatprep.subr.mxu0 0.0
        %2516 = vmatpush1.msra.mxu0 0.0
        %2517 = vmatprep.mubr.f32.mxu0 0.0
        %v2518 = vand.u32 %v2351, 4294901760
        %2519 = vmatmul.mubr.f32.gmra.mrb[0].mxu0 %v2518
        %v2520 = vpop.f32.mrb[0].mxu0
        %v2521 = vadd.f32 %v2430, %v2520
        %v2522 = vpop.f32.mrb[0].mxu0
        %2523 = vmatprep.mubr.f32.mxu0 0.0
        %v2524 = vand.u32 %v2354, 4294901760
        %2525 = vmatmul.mubr.f32.gmra.mrb[0].mxu0 %v2524
        %v2526 = vpop.f32.mrb[0].mxu0
        %v2527 = vadd.f32 %v2440, %v2526
        %v2528 = vpop.f32.mrb[0].mxu0
        %2529 = vdwg.mxu0
        %2530 = vmatprep.subr.mxu0 0.0
        %v2531 = vand.u32 %v317, 4294901760
        %v2532 = vsub.f32 %v317, %v2531
        %2533 = vmatpush1.msra.mxu0 %v2532
        %2534 = vmatprep.subr.mxu0 0.0
        %v2535 = vand.u32 %v318, 4294901760
        %v2536 = vsub.f32 %v318, %v2535
        %2537 = vmatpush1.msra.mxu0 %v2536
        %2538 = vmatprep.subr.mxu0 0.0
        %2539 = vmatpush1.msra.mxu0 0.0
        %2540 = vmatprep.subr.mxu0 0.0
        %2541 = vmatpush1.msra.mxu0 0.0
        %2542 = vmatprep.subr.mxu0 0.0
        %2543 = vmatpush1.msra.mxu0 0.0
        %2544 = vmatprep.subr.mxu0 0.0
        %2545 = vmatpush1.msra.mxu0 0.0
        %2546 = vmatprep.subr.mxu0 0.0
        %2547 = vmatpush1.msra.mxu0 0.0
        %2548 = vmatprep.subr.mxu0 0.0
        %2549 = vmatpush1.msra.mxu0 0.0
        %2550 = vmatprep.subr.mxu0 0.0
        %2551 = vmatpush1.msra.mxu0 0.0
        %2552 = vmatprep.subr.mxu0 0.0
        %2553 = vmatpush1.msra.mxu0 0.0
        %2554 = vmatprep.subr.mxu0 0.0
        %2555 = vmatpush1.msra.mxu0 0.0
        %2556 = vmatprep.subr.mxu0 0.0
        %2557 = vmatpush1.msra.mxu0 0.0
        %2558 = vmatprep.subr.mxu0 0.0
        %2559 = vmatpush1.msra.mxu0 0.0
        %2560 = vmatprep.subr.mxu0 0.0
        %2561 = vmatpush1.msra.mxu0 0.0
        %2562 = vmatprep.subr.mxu0 0.0
        %2563 = vmatpush1.msra.mxu0 0.0
        %2564 = vmatprep.subr.mxu0 0.0
        %2565 = vmatpush1.msra.mxu0 0.0
        %2566 = vmatprep.subr.mxu0 0.0
        %2567 = vmatpush1.msra.mxu0 0.0
        %2568 = vmatprep.subr.mxu0 0.0
        %2569 = vmatpush1.msra.mxu0 0.0
        %2570 = vmatprep.subr.mxu0 0.0
        %2571 = vmatpush1.msra.mxu0 0.0
        %2572 = vmatprep.subr.mxu0 0.0
        %2573 = vmatpush1.msra.mxu0 0.0
        %2574 = vmatprep.subr.mxu0 0.0
        %2575 = vmatpush1.msra.mxu0 0.0
        %2576 = vmatprep.subr.mxu0 0.0
        %2577 = vmatpush1.msra.mxu0 0.0
        %2578 = vmatprep.subr.mxu0 0.0
        %2579 = vmatpush1.msra.mxu0 0.0
        %2580 = vmatprep.subr.mxu0 0.0
        %2581 = vmatpush1.msra.mxu0 0.0
        %2582 = vmatprep.subr.mxu0 0.0
        %2583 = vmatpush1.msra.mxu0 0.0
        %2584 = vmatprep.subr.mxu0 0.0
        %2585 = vmatpush1.msra.mxu0 0.0
        %2586 = vmatprep.subr.mxu0 0.0
        %2587 = vmatpush1.msra.mxu0 0.0
        %2588 = vmatprep.subr.mxu0 0.0
        %2589 = vmatpush1.msra.mxu0 0.0
        %2590 = vmatprep.subr.mxu0 0.0
        %2591 = vmatpush1.msra.mxu0 0.0
        %2592 = vmatprep.subr.mxu0 0.0
        %2593 = vmatpush1.msra.mxu0 0.0
        %2594 = vmatprep.subr.mxu0 0.0
        %2595 = vmatpush1.msra.mxu0 0.0
        %2596 = vmatprep.subr.mxu0 0.0
        %2597 = vmatpush1.msra.mxu0 0.0
        %2598 = vmatprep.mubr.f32.mxu0 0.0
        %v2599 = vand.u32 %v2351, 4294901760
        %v2600 = vsub.f32 %v2351, %v2599
        %2601 = vmatmul.mubr.f32.gmra.mrb[0].mxu0 %v2600
        %v2602 = vpop.f32.mrb[0].mxu0
        %v2603 = vadd.f32 %v2521, %v2602
        %v2604 = vpop.f32.mrb[0].mxu0
        %2605 = vmatprep.mubr.f32.mxu0 0.0
        %v2606 = vand.u32 %v2354, 4294901760
        %v2607 = vsub.f32 %v2354, %v2606
        %2608 = vmatmul.mubr.f32.gmra.mrb[0].mxu0 %v2607
        %v2609 = vpop.f32.mrb[0].mxu0
        %v2610 = vadd.f32 %v2527, %v2609
        %v2611 = vpop.f32.mrb[0].mxu0
        %2612 = vdwg.mxu0
        %2613 = vmatprep.subr.mxu0 0.0
        %v2614 = vand.u32 %v317, 4294901760
        %2615 = vmatpush1.msra.mxu0 %v2614
        %2616 = vmatprep.subr.mxu0 0.0
        %v2617 = vand.u32 %v318, 4294901760
        %2618 = vmatpush1.msra.mxu0 %v2617
        %2619 = vmatprep.subr.mxu0 0.0
        %2620 = vmatpush1.msra.mxu0 0.0
        %2621 = vmatprep.subr.mxu0 0.0
        %2622 = vmatpush1.msra.mxu0 0.0
        %2623 = vmatprep.subr.mxu0 0.0
        %2624 = vmatpush1.msra.mxu0 0.0
        %2625 = vmatprep.subr.mxu0 0.0
        %2626 = vmatpush1.msra.mxu0 0.0
        %2627 = vmatprep.subr.mxu0 0.0
        %2628 = vmatpush1.msra.mxu0 0.0
        %2629 = vmatprep.subr.mxu0 0.0
        %2630 = vmatpush1.msra.mxu0 0.0
        %2631 = vmatprep.subr.mxu0 0.0
        %2632 = vmatpush1.msra.mxu0 0.0
        %2633 = vmatprep.subr.mxu0 0.0
        %2634 = vmatpush1.msra.mxu0 0.0
        %2635 = vmatprep.subr.mxu0 0.0
        %2636 = vmatpush1.msra.mxu0 0.0
        %2637 = vmatprep.subr.mxu0 0.0
        %2638 = vmatpush1.msra.mxu0 0.0
        %2639 = vmatprep.subr.mxu0 0.0
        %2640 = vmatpush1.msra.mxu0 0.0
        %2641 = vmatprep.subr.mxu0 0.0
        %2642 = vmatpush1.msra.mxu0 0.0
        %2643 = vmatprep.subr.mxu0 0.0
        %2644 = vmatpush1.msra.mxu0 0.0
        %2645 = vmatprep.subr.mxu0 0.0
        %2646 = vmatpush1.msra.mxu0 0.0
        %2647 = vmatprep.subr.mxu0 0.0
        %2648 = vmatpush1.msra.mxu0 0.0
        %2649 = vmatprep.subr.mxu0 0.0
        %2650 = vmatpush1.msra.mxu0 0.0
        %2651 = vmatprep.subr.mxu0 0.0
        %2652 = vmatpush1.msra.mxu0 0.0
        %2653 = vmatprep.subr.mxu0 0.0
        %2654 = vmatpush1.msra.mxu0 0.0
        %2655 = vmatprep.subr.mxu0 0.0
        %2656 = vmatpush1.msra.mxu0 0.0
        %2657 = vmatprep.subr.mxu0 0.0
        %2658 = vmatpush1.msra.mxu0 0.0
        %2659 = vmatprep.subr.mxu0 0.0
        %2660 = vmatpush1.msra.mxu0 0.0
        %2661 = vmatprep.subr.mxu0 0.0
        %2662 = vmatpush1.msra.mxu0 0.0
        %2663 = vmatprep.subr.mxu0 0.0
        %2664 = vmatpush1.msra.mxu0 0.0
        %2665 = vmatprep.subr.mxu0 0.0
        %2666 = vmatpush1.msra.mxu0 0.0
        %2667 = vmatprep.subr.mxu0 0.0
        %2668 = vmatpush1.msra.mxu0 0.0
        %2669 = vmatprep.subr.mxu0 0.0
        %2670 = vmatpush1.msra.mxu0 0.0
        %2671 = vmatprep.subr.mxu0 0.0
        %2672 = vmatpush1.msra.mxu0 0.0
        %2673 = vmatprep.subr.mxu0 0.0
        %2674 = vmatpush1.msra.mxu0 0.0
        %2675 = vmatprep.subr.mxu0 0.0
        %2676 = vmatpush1.msra.mxu0 0.0
        %2677 = vmatprep.subr.mxu0 0.0
        %2678 = vmatpush1.msra.mxu0 0.0
        %2679 = vmatprep.mubr.f32.mxu0 0.0
        %v2680 = vand.u32 %v2351, 4294901760
        %v2681 = vsub.f32 %v2351, %v2680
        %v2682 = vand.u32 %v2681, 4294901760
        %2683 = vmatmul.mubr.f32.gmra.mrb[0].mxu0 %v2682
        %v2684 = vpop.f32.mrb[0].mxu0
        %v2685 = vadd.f32 %v2603, %v2684
        %v2686 = vpop.f32.mrb[0].mxu0
        %2687 = vmatprep.mubr.f32.mxu0 0.0
        %v2688 = vand.u32 %v2354, 4294901760
        %v2689 = vsub.f32 %v2354, %v2688
        %v2690 = vand.u32 %v2689, 4294901760
        %2691 = vmatmul.mubr.f32.gmra.mrb[0].mxu0 %v2690
        %v2692 = vpop.f32.mrb[0].mxu0
        %v2693 = vadd.f32 %v2610, %v2692
        %v2694 = vpop.f32.mrb[0].mxu0
        %2695 = vdwg.mxu0
        %2696 = vmatprep.subr.mxu0 0.0
        %v2697 = vand.u32 %v317, 4294901760
        %v2698 = vsub.f32 %v317, %v2697
        %v2699 = vand.u32 %v2698, 4294901760
        %2700 = vmatpush1.msra.mxu0 %v2699
        %2701 = vmatprep.subr.mxu0 0.0
        %v2702 = vand.u32 %v318, 4294901760
        %v2703 = vsub.f32 %v318, %v2702
        %v2704 = vand.u32 %v2703, 4294901760
        %2705 = vmatpush1.msra.mxu0 %v2704
        %2706 = vmatprep.subr.mxu0 0.0
        %2707 = vmatpush1.msra.mxu0 0.0
        %2708 = vmatprep.subr.mxu0 0.0
        %2709 = vmatpush1.msra.mxu0 0.0
        %2710 = vmatprep.subr.mxu0 0.0
        %2711 = vmatpush1.msra.mxu0 0.0
        %2712 = vmatprep.subr.mxu0 0.0
        %2713 = vmatpush1.msra.mxu0 0.0
        %2714 = vmatprep.subr.mxu0 0.0
        %2715 = vmatpush1.msra.mxu0 0.0
        %2716 = vmatprep.subr.mxu0 0.0
        %2717 = vmatpush1.msra.mxu0 0.0
        %2718 = vmatprep.subr.mxu0 0.0
        %2719 = vmatpush1.msra.mxu0 0.0
        %2720 = vmatprep.subr.mxu0 0.0
        %2721 = vmatpush1.msra.mxu0 0.0
        %2722 = vmatprep.subr.mxu0 0.0
        %2723 = vmatpush1.msra.mxu0 0.0
        %2724 = vmatprep.subr.mxu0 0.0
        %2725 = vmatpush1.msra.mxu0 0.0
        %2726 = vmatprep.subr.mxu0 0.0
        %2727 = vmatpush1.msra.mxu0 0.0
        %2728 = vmatprep.subr.mxu0 0.0
        %2729 = vmatpush1.msra.mxu0 0.0
        %2730 = vmatprep.subr.mxu0 0.0
        %2731 = vmatpush1.msra.mxu0 0.0
        %2732 = vmatprep.subr.mxu0 0.0
        %2733 = vmatpush1.msra.mxu0 0.0
        %2734 = vmatprep.subr.mxu0 0.0
        %2735 = vmatpush1.msra.mxu0 0.0
        %2736 = vmatprep.subr.mxu0 0.0
        %2737 = vmatpush1.msra.mxu0 0.0
        %2738 = vmatprep.subr.mxu0 0.0
        %2739 = vmatpush1.msra.mxu0 0.0
        %2740 = vmatprep.subr.mxu0 0.0
        %2741 = vmatpush1.msra.mxu0 0.0
        %2742 = vmatprep.subr.mxu0 0.0
        %2743 = vmatpush1.msra.mxu0 0.0
        %2744 = vmatprep.subr.mxu0 0.0
        %2745 = vmatpush1.msra.mxu0 0.0
        %2746 = vmatprep.subr.mxu0 0.0
        %2747 = vmatpush1.msra.mxu0 0.0
        %2748 = vmatprep.subr.mxu0 0.0
        %2749 = vmatpush1.msra.mxu0 0.0
        %2750 = vmatprep.subr.mxu0 0.0
        %2751 = vmatpush1.msra.mxu0 0.0
        %2752 = vmatprep.subr.mxu0 0.0
        %2753 = vmatpush1.msra.mxu0 0.0
        %2754 = vmatprep.subr.mxu0 0.0
        %2755 = vmatpush1.msra.mxu0 0.0
        %2756 = vmatprep.subr.mxu0 0.0
        %2757 = vmatpush1.msra.mxu0 0.0
        %2758 = vmatprep.subr.mxu0 0.0
        %2759 = vmatpush1.msra.mxu0 0.0
        %2760 = vmatprep.subr.mxu0 0.0
        %2761 = vmatpush1.msra.mxu0 0.0
        %2762 = vmatprep.subr.mxu0 0.0
        %2763 = vmatpush1.msra.mxu0 0.0
        %2764 = vmatprep.subr.mxu0 0.0
        %2765 = vmatpush1.msra.mxu0 0.0
        %2766 = vmatprep.mubr.f32.mxu0 0.0
        %v2767 = vand.u32 %v2351, 4294901760
        %2768 = vmatmul.mubr.f32.gmra.mrb[0].mxu0 %v2767
        %v2769 = vpop.f32.mrb[0].mxu0
        %v2770 = vadd.f32 %v2685, %v2769
        %v2771 = vpop.f32.mrb[0].mxu0
        %2772 = vmatprep.mubr.f32.mxu0 0.0
        %v2773 = vand.u32 %v2354, 4294901760
        %2774 = vmatmul.mubr.f32.gmra.mrb[0].mxu0 %v2773
        %v2775 = vpop.f32.mrb[0].mxu0
        %v2776 = vadd.f32 %v2693, %v2775
        %v2777 = vpop.f32.mrb[0].mxu0
        %2778 = vdwg.mxu0
        %2779 = vmatprep.subr.mxu0 0.0
        %v2780 = vand.u32 %v317, 4294901760
        %2781 = vmatpush1.msra.mxu0 %v2780
        %2782 = vmatprep.subr.mxu0 0.0
        %v2783 = vand.u32 %v318, 4294901760
        %2784 = vmatpush1.msra.mxu0 %v2783
        %2785 = vmatprep.subr.mxu0 0.0
        %2786 = vmatpush1.msra.mxu0 0.0
        %2787 = vmatprep.subr.mxu0 0.0
        %2788 = vmatpush1.msra.mxu0 0.0
        %2789 = vmatprep.subr.mxu0 0.0
        %2790 = vmatpush1.msra.mxu0 0.0
        %2791 = vmatprep.subr.mxu0 0.0
        %2792 = vmatpush1.msra.mxu0 0.0
        %2793 = vmatprep.subr.mxu0 0.0
        %2794 = vmatpush1.msra.mxu0 0.0
        %2795 = vmatprep.subr.mxu0 0.0
        %2796 = vmatpush1.msra.mxu0 0.0
        %2797 = vmatprep.subr.mxu0 0.0
        %2798 = vmatpush1.msra.mxu0 0.0
        %2799 = vmatprep.subr.mxu0 0.0
        %2800 = vmatpush1.msra.mxu0 0.0
        %2801 = vmatprep.subr.mxu0 0.0
        %2802 = vmatpush1.msra.mxu0 0.0
        %2803 = vmatprep.subr.mxu0 0.0
        %2804 = vmatpush1.msra.mxu0 0.0
        %2805 = vmatprep.subr.mxu0 0.0
        %2806 = vmatpush1.msra.mxu0 0.0
        %2807 = vmatprep.subr.mxu0 0.0
        %2808 = vmatpush1.msra.mxu0 0.0
        %2809 = vmatprep.subr.mxu0 0.0
        %2810 = vmatpush1.msra.mxu0 0.0
        %2811 = vmatprep.subr.mxu0 0.0
        %2812 = vmatpush1.msra.mxu0 0.0
        %2813 = vmatprep.subr.mxu0 0.0
        %2814 = vmatpush1.msra.mxu0 0.0
        %2815 = vmatprep.subr.mxu0 0.0
        %2816 = vmatpush1.msra.mxu0 0.0
        %2817 = vmatprep.subr.mxu0 0.0
        %2818 = vmatpush1.msra.mxu0 0.0
        %2819 = vmatprep.subr.mxu0 0.0
        %2820 = vmatpush1.msra.mxu0 0.0
        %2821 = vmatprep.subr.mxu0 0.0
        %2822 = vmatpush1.msra.mxu0 0.0
        %2823 = vmatprep.subr.mxu0 0.0
        %2824 = vmatpush1.msra.mxu0 0.0
        %2825 = vmatprep.subr.mxu0 0.0
        %2826 = vmatpush1.msra.mxu0 0.0
        %2827 = vmatprep.subr.mxu0 0.0
        %2828 = vmatpush1.msra.mxu0 0.0
        %2829 = vmatprep.subr.mxu0 0.0
        %2830 = vmatpush1.msra.mxu0 0.0
        %2831 = vmatprep.subr.mxu0 0.0
        %2832 = vmatpush1.msra.mxu0 0.0
        %2833 = vmatprep.subr.mxu0 0.0
        %2834 = vmatpush1.msra.mxu0 0.0
        %2835 = vmatprep.subr.mxu0 0.0
        %2836 = vmatpush1.msra.mxu0 0.0
        %2837 = vmatprep.subr.mxu0 0.0
        %2838 = vmatpush1.msra.mxu0 0.0
        %2839 = vmatprep.subr.mxu0 0.0
        %2840 = vmatpush1.msra.mxu0 0.0
        %2841 = vmatprep.subr.mxu0 0.0
        %2842 = vmatpush1.msra.mxu0 0.0
        %2843 = vmatprep.subr.mxu0 0.0
        %2844 = vmatpush1.msra.mxu0 0.0
        %2845 = vmatprep.mubr.f32.mxu0 0.0
        %v2846 = vand.u32 %v2351, 4294901760
        %2847 = vmatmul.mubr.f32.gmra.mrb[0].mxu0 %v2846
        %v2848 = vpop.f32.mrb[0].mxu0
        %v2849 = vadd.f32 %v2770, %v2848
        %v2850 = vpop.f32.mrb[0].mxu0
        %2851 = vmatprep.mubr.f32.mxu0 0.0
        %v2852 = vand.u32 %v2354, 4294901760
        %2853 = vmatmul.mubr.f32.gmra.mrb[0].mxu0 %v2852
        %v2854 = vpop.f32.mrb[0].mxu0
        %v2855 = vadd.f32 %v2776, %v2854
        %v2856 = vpop.f32.mrb[0].mxu0
        %2857 = vdwg.mxu0
        %2858 = vmatprep.subr.mxu0 0.0
        %v2859 = vand.u32 %v2849, 4294901760
        %2860 = vmatpush1.msra.mxu0 %v2859
        %2861 = vmatprep.subr.mxu0 0.0
        %v2862 = vand.u32 %v2855, 4294901760
        %2863 = vmatpush1.msra.mxu0 %v2862
        %2864 = vmatprep.subr.mxu0 0.0
        %2865 = vmatpush1.msra.mxu0 0.0
        %2866 = vmatprep.subr.mxu0 0.0
        %2867 = vmatpush1.msra.mxu0 0.0
        %2868 = vmatprep.subr.mxu0 0.0
        %2869 = vmatpush1.msra.mxu0 0.0
        %2870 = vmatprep.subr.mxu0 0.0
        %2871 = vmatpush1.msra.mxu0 0.0
        %2872 = vmatprep.subr.mxu0 0.0
        %2873 = vmatpush1.msra.mxu0 0.0
        %2874 = vmatprep.subr.mxu0 0.0
        %2875 = vmatpush1.msra.mxu0 0.0
        %2876 = vmatprep.subr.mxu0 0.0
        %2877 = vmatpush1.msra.mxu0 0.0
        %2878 = vmatprep.subr.mxu0 0.0
        %2879 = vmatpush1.msra.mxu0 0.0
        %2880 = vmatprep.subr.mxu0 0.0
        %2881 = vmatpush1.msra.mxu0 0.0
        %2882 = vmatprep.subr.mxu0 0.0
        %2883 = vmatpush1.msra.mxu0 0.0
        %2884 = vmatprep.subr.mxu0 0.0
        %2885 = vmatpush1.msra.mxu0 0.0
        %2886 = vmatprep.subr.mxu0 0.0
        %2887 = vmatpush1.msra.mxu0 0.0
        %2888 = vmatprep.subr.mxu0 0.0
        %2889 = vmatpush1.msra.mxu0 0.0
        %2890 = vmatprep.subr.mxu0 0.0
        %2891 = vmatpush1.msra.mxu0 0.0
        %2892 = vmatprep.subr.mxu0 0.0
        %2893 = vmatpush1.msra.mxu0 0.0
        %2894 = vmatprep.subr.mxu0 0.0
        %2895 = vmatpush1.msra.mxu0 0.0
        %2896 = vmatprep.subr.mxu0 0.0
        %2897 = vmatpush1.msra.mxu0 0.0
        %2898 = vmatprep.subr.mxu0 0.0
        %2899 = vmatpush1.msra.mxu0 0.0
        %2900 = vmatprep.subr.mxu0 0.0
        %2901 = vmatpush1.msra.mxu0 0.0
        %2902 = vmatprep.subr.mxu0 0.0
        %2903 = vmatpush1.msra.mxu0 0.0
        %2904 = vmatprep.subr.mxu0 0.0
        %2905 = vmatpush1.msra.mxu0 0.0
        %2906 = vmatprep.subr.mxu0 0.0
        %2907 = vmatpush1.msra.mxu0 0.0
        %2908 = vmatprep.subr.mxu0 0.0
        %2909 = vmatpush1.msra.mxu0 0.0
        %2910 = vmatprep.subr.mxu0 0.0
        %2911 = vmatpush1.msra.mxu0 0.0
        %2912 = vmatprep.subr.mxu0 0.0
        %2913 = vmatpush1.msra.mxu0 0.0
        %2914 = vmatprep.subr.mxu0 0.0
        %2915 = vmatpush1.msra.mxu0 0.0
        %2916 = vmatprep.subr.mxu0 0.0
        %2917 = vmatpush1.msra.mxu0 0.0
        %2918 = vmatprep.subr.mxu0 0.0
        %2919 = vmatpush1.msra.mxu0 0.0
        %2920 = vmatprep.subr.mxu0 0.0
        %2921 = vmatpush1.msra.mxu0 0.0
        %2922 = vmatprep.subr.mxu0 0.0
        %2923 = vmatpush1.msra.mxu0 0.0
        %2924 = vmatprep.mubr.f32.mxu0 0.0
        %v2925 = vand.u32 %v831, 4294901760
        %v2926 = vsub.f32 %v831, %v2925
        %v2927 = vand.u32 %v2926, 4294901760
        %v2928 = vsub.f32 %v2926, %v2927
        %v2929 = vand.u32 %v2928, 4294901760
        %2930 = vmatmul.mubr.f32.gmra.mrb[0].mxu0 %v2929
        %v2931 = vpop.f32.mrb[0].mxu0
        %v2932 = vadd.f32 0.0, %v2931
        %v2933 = vpop.f32.mrb[0].mxu0
        %2934 = vmatprep.mubr.f32.mxu0 0.0
        %v2935 = vand.u32 %v834, 4294901760
        %v2936 = vsub.f32 %v834, %v2935
        %v2937 = vand.u32 %v2936, 4294901760
        %v2938 = vsub.f32 %v2936, %v2937
        %v2939 = vand.u32 %v2938, 4294901760
        %2940 = vmatmul.mubr.f32.gmra.mrb[0].mxu0 %v2939
        %v2941 = vpop.f32.mrb[0].mxu0
        %v2942 = vadd.f32 0.0, %v2941
        %v2943 = vpop.f32.mrb[0].mxu0
        %2944 = vdwg.mxu0
        %2945 = vmatprep.subr.mxu0 0.0
        %v2946 = vand.u32 %v2849, 4294901760
        %v2947 = vsub.f32 %v2849, %v2946
        %v2948 = vand.u32 %v2947, 4294901760
        %v2949 = vsub.f32 %v2947, %v2948
        %v2950 = vand.u32 %v2949, 4294901760
        %2951 = vmatpush1.msra.mxu0 %v2950
        %2952 = vmatprep.subr.mxu0 0.0
        %v2953 = vand.u32 %v2855, 4294901760
        %v2954 = vsub.f32 %v2855, %v2953
        %v2955 = vand.u32 %v2954, 4294901760
        %v2956 = vsub.f32 %v2954, %v2955
        %v2957 = vand.u32 %v2956, 4294901760
        %2958 = vmatpush1.msra.mxu0 %v2957
        %2959 = vmatprep.subr.mxu0 0.0
        %2960 = vmatpush1.msra.mxu0 0.0
        %2961 = vmatprep.subr.mxu0 0.0
        %2962 = vmatpush1.msra.mxu0 0.0
        %2963 = vmatprep.subr.mxu0 0.0
        %2964 = vmatpush1.msra.mxu0 0.0
        %2965 = vmatprep.subr.mxu0 0.0
        %2966 = vmatpush1.msra.mxu0 0.0
        %2967 = vmatprep.subr.mxu0 0.0
        %2968 = vmatpush1.msra.mxu0 0.0
        %2969 = vmatprep.subr.mxu0 0.0
        %2970 = vmatpush1.msra.mxu0 0.0
        %2971 = vmatprep.subr.mxu0 0.0
        %2972 = vmatpush1.msra.mxu0 0.0
        %2973 = vmatprep.subr.mxu0 0.0
        %2974 = vmatpush1.msra.mxu0 0.0
        %2975 = vmatprep.subr.mxu0 0.0
        %2976 = vmatpush1.msra.mxu0 0.0
        %2977 = vmatprep.subr.mxu0 0.0
        %2978 = vmatpush1.msra.mxu0 0.0
        %2979 = vmatprep.subr.mxu0 0.0
        %2980 = vmatpush1.msra.mxu0 0.0
        %2981 = vmatprep.subr.mxu0 0.0
        %2982 = vmatpush1.msra.mxu0 0.0
        %2983 = vmatprep.subr.mxu0 0.0
        %2984 = vmatpush1.msra.mxu0 0.0
        %2985 = vmatprep.subr.mxu0 0.0
        %2986 = vmatpush1.msra.mxu0 0.0
        %2987 = vmatprep.subr.mxu0 0.0
        %2988 = vmatpush1.msra.mxu0 0.0
        %2989 = vmatprep.subr.mxu0 0.0
        %2990 = vmatpush1.msra.mxu0 0.0
        %2991 = vmatprep.subr.mxu0 0.0
        %2992 = vmatpush1.msra.mxu0 0.0
        %2993 = vmatprep.subr.mxu0 0.0
        %2994 = vmatpush1.msra.mxu0 0.0
        %2995 = vmatprep.subr.mxu0 0.0
        %2996 = vmatpush1.msra.mxu0 0.0
        %2997 = vmatprep.subr.mxu0 0.0
        %2998 = vmatpush1.msra.mxu0 0.0
        %2999 = vmatprep.subr.mxu0 0.0
        %3000 = vmatpush1.msra.mxu0 0.0
        %3001 = vmatprep.subr.mxu0 0.0
        %3002 = vmatpush1.msra.mxu0 0.0
        %3003 = vmatprep.subr.mxu0 0.0
        %3004 = vmatpush1.msra.mxu0 0.0
        %3005 = vmatprep.subr.mxu0 0.0
        %3006 = vmatpush1.msra.mxu0 0.0
        %3007 = vmatprep.subr.mxu0 0.0
        %3008 = vmatpush1.msra.mxu0 0.0
        %3009 = vmatprep.subr.mxu0 0.0
        %3010 = vmatpush1.msra.mxu0 0.0
        %3011 = vmatprep.subr.mxu0 0.0
        %3012 = vmatpush1.msra.mxu0 0.0
        %3013 = vmatprep.subr.mxu0 0.0
        %3014 = vmatpush1.msra.mxu0 0.0
        %3015 = vmatprep.subr.mxu0 0.0
        %3016 = vmatpush1.msra.mxu0 0.0
        %3017 = vmatprep.subr.mxu0 0.0
        %3018 = vmatpush1.msra.mxu0 0.0
        %3019 = vmatprep.mubr.f32.mxu0 0.0
        %v3020 = vand.u32 %v831, 4294901760
        %3021 = vmatmul.mubr.f32.gmra.mrb[0].mxu0 %v3020
        %v3022 = vpop.f32.mrb[0].mxu0
        %v3023 = vadd.f32 %v2932, %v3022
        %v3024 = vpop.f32.mrb[0].mxu0
        %3025 = vmatprep.mubr.f32.mxu0 0.0
        %v3026 = vand.u32 %v834, 4294901760
        %3027 = vmatmul.mubr.f32.gmra.mrb[0].mxu0 %v3026
        %v3028 = vpop.f32.mrb[0].mxu0
        %v3029 = vadd.f32 %v2942, %v3028
        %v3030 = vpop.f32.mrb[0].mxu0
        %3031 = vdwg.mxu0
        %3032 = vmatprep.subr.mxu0 0.0
        %v3033 = vand.u32 %v2849, 4294901760
        %v3034 = vsub.f32 %v2849, %v3033
        %3035 = vmatpush1.msra.mxu0 %v3034
        %3036 = vmatprep.subr.mxu0 0.0
        %v3037 = vand.u32 %v2855, 4294901760
        %v3038 = vsub.f32 %v2855, %v3037
        %3039 = vmatpush1.msra.mxu0 %v3038
        %3040 = vmatprep.subr.mxu0 0.0
        %3041 = vmatpush1.msra.mxu0 0.0
        %3042 = vmatprep.subr.mxu0 0.0
        %3043 = vmatpush1.msra.mxu0 0.0
        %3044 = vmatprep.subr.mxu0 0.0
        %3045 = vmatpush1.msra.mxu0 0.0
        %3046 = vmatprep.subr.mxu0 0.0
        %3047 = vmatpush1.msra.mxu0 0.0
        %3048 = vmatprep.subr.mxu0 0.0
        %3049 = vmatpush1.msra.mxu0 0.0
        %3050 = vmatprep.subr.mxu0 0.0
        %3051 = vmatpush1.msra.mxu0 0.0
        %3052 = vmatprep.subr.mxu0 0.0
        %3053 = vmatpush1.msra.mxu0 0.0
        %3054 = vmatprep.subr.mxu0 0.0
        %3055 = vmatpush1.msra.mxu0 0.0
        %3056 = vmatprep.subr.mxu0 0.0
        %3057 = vmatpush1.msra.mxu0 0.0
        %3058 = vmatprep.subr.mxu0 0.0
        %3059 = vmatpush1.msra.mxu0 0.0
        %3060 = vmatprep.subr.mxu0 0.0
        %3061 = vmatpush1.msra.mxu0 0.0
        %3062 = vmatprep.subr.mxu0 0.0
        %3063 = vmatpush1.msra.mxu0 0.0
        %3064 = vmatprep.subr.mxu0 0.0
        %3065 = vmatpush1.msra.mxu0 0.0
        %3066 = vmatprep.subr.mxu0 0.0
        %3067 = vmatpush1.msra.mxu0 0.0
        %3068 = vmatprep.subr.mxu0 0.0
        %3069 = vmatpush1.msra.mxu0 0.0
        %3070 = vmatprep.subr.mxu0 0.0
        %3071 = vmatpush1.msra.mxu0 0.0
        %3072 = vmatprep.subr.mxu0 0.0
        %3073 = vmatpush1.msra.mxu0 0.0
        %3074 = vmatprep.subr.mxu0 0.0
        %3075 = vmatpush1.msra.mxu0 0.0
        %3076 = vmatprep.subr.mxu0 0.0
        %3077 = vmatpush1.msra.mxu0 0.0
        %3078 = vmatprep.subr.mxu0 0.0
        %3079 = vmatpush1.msra.mxu0 0.0
        %3080 = vmatprep.subr.mxu0 0.0
        %3081 = vmatpush1.msra.mxu0 0.0
        %3082 = vmatprep.subr.mxu0 0.0
        %3083 = vmatpush1.msra.mxu0 0.0
        %3084 = vmatprep.subr.mxu0 0.0
        %3085 = vmatpush1.msra.mxu0 0.0
        %3086 = vmatprep.subr.mxu0 0.0
        %3087 = vmatpush1.msra.mxu0 0.0
        %3088 = vmatprep.subr.mxu0 0.0
        %3089 = vmatpush1.msra.mxu0 0.0
        %3090 = vmatprep.subr.mxu0 0.0
        %3091 = vmatpush1.msra.mxu0 0.0
        %3092 = vmatprep.subr.mxu0 0.0
        %3093 = vmatpush1.msra.mxu0 0.0
        %3094 = vmatprep.subr.mxu0 0.0
        %3095 = vmatpush1.msra.mxu0 0.0
        %3096 = vmatprep.subr.mxu0 0.0
        %3097 = vmatpush1.msra.mxu0 0.0
        %3098 = vmatprep.subr.mxu0 0.0
        %3099 = vmatpush1.msra.mxu0 0.0
        %3100 = vmatprep.mubr.f32.mxu0 0.0
        %v3101 = vand.u32 %v831, 4294901760
        %v3102 = vsub.f32 %v831, %v3101
        %3103 = vmatmul.mubr.f32.gmra.mrb[0].mxu0 %v3102
        %v3104 = vpop.f32.mrb[0].mxu0
        %v3105 = vadd.f32 %v3023, %v3104
        %v3106 = vpop.f32.mrb[0].mxu0
        %3107 = vmatprep.mubr.f32.mxu0 0.0
        %v3108 = vand.u32 %v834, 4294901760
        %v3109 = vsub.f32 %v834, %v3108
        %3110 = vmatmul.mubr.f32.gmra.mrb[0].mxu0 %v3109
        %v3111 = vpop.f32.mrb[0].mxu0
        %v3112 = vadd.f32 %v3029, %v3111
        %v3113 = vpop.f32.mrb[0].mxu0
        %3114 = vdwg.mxu0
        %3115 = vmatprep.subr.mxu0 0.0
        %v3116 = vand.u32 %v2849, 4294901760
        %3117 = vmatpush1.msra.mxu0 %v3116
        %3118 = vmatprep.subr.mxu0 0.0
        %v3119 = vand.u32 %v2855, 4294901760
        %3120 = vmatpush1.msra.mxu0 %v3119
        %3121 = vmatprep.subr.mxu0 0.0
        %3122 = vmatpush1.msra.mxu0 0.0
        %3123 = vmatprep.subr.mxu0 0.0
        %3124 = vmatpush1.msra.mxu0 0.0
        %3125 = vmatprep.subr.mxu0 0.0
        %3126 = vmatpush1.msra.mxu0 0.0
        %3127 = vmatprep.subr.mxu0 0.0
        %3128 = vmatpush1.msra.mxu0 0.0
        %3129 = vmatprep.subr.mxu0 0.0
        %3130 = vmatpush1.msra.mxu0 0.0
        %3131 = vmatprep.subr.mxu0 0.0
        %3132 = vmatpush1.msra.mxu0 0.0
        %3133 = vmatprep.subr.mxu0 0.0
        %3134 = vmatpush1.msra.mxu0 0.0
        %3135 = vmatprep.subr.mxu0 0.0
        %3136 = vmatpush1.msra.mxu0 0.0
        %3137 = vmatprep.subr.mxu0 0.0
        %3138 = vmatpush1.msra.mxu0 0.0
        %3139 = vmatprep.subr.mxu0 0.0
        %3140 = vmatpush1.msra.mxu0 0.0
        %3141 = vmatprep.subr.mxu0 0.0
        %3142 = vmatpush1.msra.mxu0 0.0
        %3143 = vmatprep.subr.mxu0 0.0
        %3144 = vmatpush1.msra.mxu0 0.0
        %3145 = vmatprep.subr.mxu0 0.0
        %3146 = vmatpush1.msra.mxu0 0.0
        %3147 = vmatprep.subr.mxu0 0.0
        %3148 = vmatpush1.msra.mxu0 0.0
        %3149 = vmatprep.subr.mxu0 0.0
        %3150 = vmatpush1.msra.mxu0 0.0
        %3151 = vmatprep.subr.mxu0 0.0
        %3152 = vmatpush1.msra.mxu0 0.0
        %3153 = vmatprep.subr.mxu0 0.0
        %3154 = vmatpush1.msra.mxu0 0.0
        %3155 = vmatprep.subr.mxu0 0.0
        %3156 = vmatpush1.msra.mxu0 0.0
        %3157 = vmatprep.subr.mxu0 0.0
        %3158 = vmatpush1.msra.mxu0 0.0
        %3159 = vmatprep.subr.mxu0 0.0
        %3160 = vmatpush1.msra.mxu0 0.0
        %3161 = vmatprep.subr.mxu0 0.0
        %3162 = vmatpush1.msra.mxu0 0.0
        %3163 = vmatprep.subr.mxu0 0.0
        %3164 = vmatpush1.msra.mxu0 0.0
        %3165 = vmatprep.subr.mxu0 0.0
        %3166 = vmatpush1.msra.mxu0 0.0
        %3167 = vmatprep.subr.mxu0 0.0
        %3168 = vmatpush1.msra.mxu0 0.0
        %3169 = vmatprep.subr.mxu0 0.0
        %3170 = vmatpush1.msra.mxu0 0.0
        %3171 = vmatprep.subr.mxu0 0.0
        %3172 = vmatpush1.msra.mxu0 0.0
        %3173 = vmatprep.subr.mxu0 0.0
        %3174 = vmatpush1.msra.mxu0 0.0
        %3175 = vmatprep.subr.mxu0 0.0
        %3176 = vmatpush1.msra.mxu0 0.0
        %3177 = vmatprep.subr.mxu0 0.0
        %3178 = vmatpush1.msra.mxu0 0.0
        %3179 = vmatprep.subr.mxu0 0.0
        %3180 = vmatpush1.msra.mxu0 0.0
        %3181 = vmatprep.mubr.f32.mxu0 0.0
        %v3182 = vand.u32 %v831, 4294901760
        %v3183 = vsub.f32 %v831, %v3182
        %v3184 = vand.u32 %v3183, 4294901760
        %3185 = vmatmul.mubr.f32.gmra.mrb[0].mxu0 %v3184
        %v3186 = vpop.f32.mrb[0].mxu0
        %v3187 = vadd.f32 %v3105, %v3186
        %v3188 = vpop.f32.mrb[0].mxu0
        %3189 = vmatprep.mubr.f32.mxu0 0.0
        %v3190 = vand.u32 %v834, 4294901760
        %v3191 = vsub.f32 %v834, %v3190
        %v3192 = vand.u32 %v3191, 4294901760
        %3193 = vmatmul.mubr.f32.gmra.mrb[0].mxu0 %v3192
        %v3194 = vpop.f32.mrb[0].mxu0
        %v3195 = vadd.f32 %v3112, %v3194
        %v3196 = vpop.f32.mrb[0].mxu0
        %3197 = vdwg.mxu0
        %3198 = vmatprep.subr.mxu0 0.0
        %v3199 = vand.u32 %v2849, 4294901760
        %v3200 = vsub.f32 %v2849, %v3199
        %v3201 = vand.u32 %v3200, 4294901760
        %3202 = vmatpush1.msra.mxu0 %v3201
        %3203 = vmatprep.subr.mxu0 0.0
        %v3204 = vand.u32 %v2855, 4294901760
        %v3205 = vsub.f32 %v2855, %v3204
        %v3206 = vand.u32 %v3205, 4294901760
        %3207 = vmatpush1.msra.mxu0 %v3206
        %3208 = vmatprep.subr.mxu0 0.0
        %3209 = vmatpush1.msra.mxu0 0.0
        %3210 = vmatprep.subr.mxu0 0.0
        %3211 = vmatpush1.msra.mxu0 0.0
        %3212 = vmatprep.subr.mxu0 0.0
        %3213 = vmatpush1.msra.mxu0 0.0
        %3214 = vmatprep.subr.mxu0 0.0
        %3215 = vmatpush1.msra.mxu0 0.0
        %3216 = vmatprep.subr.mxu0 0.0
        %3217 = vmatpush1.msra.mxu0 0.0
        %3218 = vmatprep.subr.mxu0 0.0
        %3219 = vmatpush1.msra.mxu0 0.0
        %3220 = vmatprep.subr.mxu0 0.0
        %3221 = vmatpush1.msra.mxu0 0.0
        %3222 = vmatprep.subr.mxu0 0.0
        %3223 = vmatpush1.msra.mxu0 0.0
        %3224 = vmatprep.subr.mxu0 0.0
        %3225 = vmatpush1.msra.mxu0 0.0
        %3226 = vmatprep.subr.mxu0 0.0
        %3227 = vmatpush1.msra.mxu0 0.0
        %3228 = vmatprep.subr.mxu0 0.0
        %3229 = vmatpush1.msra.mxu0 0.0
        %3230 = vmatprep.subr.mxu0 0.0
        %3231 = vmatpush1.msra.mxu0 0.0
        %3232 = vmatprep.subr.mxu0 0.0
        %3233 = vmatpush1.msra.mxu0 0.0
        %3234 = vmatprep.subr.mxu0 0.0
        %3235 = vmatpush1.msra.mxu0 0.0
        %3236 = vmatprep.subr.mxu0 0.0
        %3237 = vmatpush1.msra.mxu0 0.0
        %3238 = vmatprep.subr.mxu0 0.0
        %3239 = vmatpush1.msra.mxu0 0.0
        %3240 = vmatprep.subr.mxu0 0.0
        %3241 = vmatpush1.msra.mxu0 0.0
        %3242 = vmatprep.subr.mxu0 0.0
        %3243 = vmatpush1.msra.mxu0 0.0
        %3244 = vmatprep.subr.mxu0 0.0
        %3245 = vmatpush1.msra.mxu0 0.0
        %3246 = vmatprep.subr.mxu0 0.0
        %3247 = vmatpush1.msra.mxu0 0.0
        %3248 = vmatprep.subr.mxu0 0.0
        %3249 = vmatpush1.msra.mxu0 0.0
        %3250 = vmatprep.subr.mxu0 0.0
        %3251 = vmatpush1.msra.mxu0 0.0
        %3252 = vmatprep.subr.mxu0 0.0
        %3253 = vmatpush1.msra.mxu0 0.0
        %3254 = vmatprep.subr.mxu0 0.0
        %3255 = vmatpush1.msra.mxu0 0.0
        %3256 = vmatprep.subr.mxu0 0.0
        %3257 = vmatpush1.msra.mxu0 0.0
        %3258 = vmatprep.subr.mxu0 0.0
        %3259 = vmatpush1.msra.mxu0 0.0
        %3260 = vmatprep.subr.mxu0 0.0
        %3261 = vmatpush1.msra.mxu0 0.0
        %3262 = vmatprep.subr.mxu0 0.0
        %3263 = vmatpush1.msra.mxu0 0.0
        %3264 = vmatprep.subr.mxu0 0.0
        %3265 = vmatpush1.msra.mxu0 0.0
        %3266 = vmatprep.subr.mxu0 0.0
        %3267 = vmatpush1.msra.mxu0 0.0
        %3268 = vmatprep.mubr.f32.mxu0 0.0
        %v3269 = vand.u32 %v831, 4294901760
        %3270 = vmatmul.mubr.f32.gmra.mrb[0].mxu0 %v3269
        %v3271 = vpop.f32.mrb[0].mxu0
        %v3272 = vadd.f32 %v3187, %v3271
        %v3273 = vpop.f32.mrb[0].mxu0
        %3274 = vmatprep.mubr.f32.mxu0 0.0
        %v3275 = vand.u32 %v834, 4294901760
        %3276 = vmatmul.mubr.f32.gmra.mrb[0].mxu0 %v3275
        %v3277 = vpop.f32.mrb[0].mxu0
        %v3278 = vadd.f32 %v3195, %v3277
        %v3279 = vpop.f32.mrb[0].mxu0
        %3280 = vdwg.mxu0
        %3281 = vmatprep.subr.mxu0 0.0
        %v3282 = vand.u32 %v2849, 4294901760
        %3283 = vmatpush1.msra.mxu0 %v3282
        %3284 = vmatprep.subr.mxu0 0.0
        %v3285 = vand.u32 %v2855, 4294901760
        %3286 = vmatpush1.msra.mxu0 %v3285
        %3287 = vmatprep.subr.mxu0 0.0
        %3288 = vmatpush1.msra.mxu0 0.0
        %3289 = vmatprep.subr.mxu0 0.0
        %3290 = vmatpush1.msra.mxu0 0.0
        %3291 = vmatprep.subr.mxu0 0.0
        %3292 = vmatpush1.msra.mxu0 0.0
        %3293 = vmatprep.subr.mxu0 0.0
        %3294 = vmatpush1.msra.mxu0 0.0
        %3295 = vmatprep.subr.mxu0 0.0
        %3296 = vmatpush1.msra.mxu0 0.0
        %3297 = vmatprep.subr.mxu0 0.0
        %3298 = vmatpush1.msra.mxu0 0.0
        %3299 = vmatprep.subr.mxu0 0.0
        %3300 = vmatpush1.msra.mxu0 0.0
        %3301 = vmatprep.subr.mxu0 0.0
        %3302 = vmatpush1.msra.mxu0 0.0
        %3303 = vmatprep.subr.mxu0 0.0
        %3304 = vmatpush1.msra.mxu0 0.0
        %3305 = vmatprep.subr.mxu0 0.0
        %3306 = vmatpush1.msra.mxu0 0.0
        %3307 = vmatprep.subr.mxu0 0.0
        %3308 = vmatpush1.msra.mxu0 0.0
        %3309 = vmatprep.subr.mxu0 0.0
        %3310 = vmatpush1.msra.mxu0 0.0
        %3311 = vmatprep.subr.mxu0 0.0
        %3312 = vmatpush1.msra.mxu0 0.0
        %3313 = vmatprep.subr.mxu0 0.0
        %3314 = vmatpush1.msra.mxu0 0.0
        %3315 = vmatprep.subr.mxu0 0.0
        %3316 = vmatpush1.msra.mxu0 0.0
        %3317 = vmatprep.subr.mxu0 0.0
        %3318 = vmatpush1.msra.mxu0 0.0
        %3319 = vmatprep.subr.mxu0 0.0
        %3320 = vmatpush1.msra.mxu0 0.0
        %3321 = vmatprep.subr.mxu0 0.0
        %3322 = vmatpush1.msra.mxu0 0.0
        %3323 = vmatprep.subr.mxu0 0.0
        %3324 = vmatpush1.msra.mxu0 0.0
        %3325 = vmatprep.subr.mxu0 0.0
        %3326 = vmatpush1.msra.mxu0 0.0
        %3327 = vmatprep.subr.mxu0 0.0
        %3328 = vmatpush1.msra.mxu0 0.0
        %3329 = vmatprep.subr.mxu0 0.0
        %3330 = vmatpush1.msra.mxu0 0.0
        %3331 = vmatprep.subr.mxu0 0.0
        %3332 = vmatpush1.msra.mxu0 0.0
        %3333 = vmatprep.subr.mxu0 0.0
        %3334 = vmatpush1.msra.mxu0 0.0
        %3335 = vmatprep.subr.mxu0 0.0
        %3336 = vmatpush1.msra.mxu0 0.0
        %3337 = vmatprep.subr.mxu0 0.0
        %3338 = vmatpush1.msra.mxu0 0.0
        %3339 = vmatprep.subr.mxu0 0.0
        %3340 = vmatpush1.msra.mxu0 0.0
        %3341 = vmatprep.subr.mxu0 0.0
        %3342 = vmatpush1.msra.mxu0 0.0
        %3343 = vmatprep.subr.mxu0 0.0
        %3344 = vmatpush1.msra.mxu0 0.0
        %3345 = vmatprep.subr.mxu0 0.0
        %3346 = vmatpush1.msra.mxu0 0.0
        %3347 = vmatprep.mubr.f32.mxu0 0.0
        %v3348 = vand.u32 %v831, 4294901760
        %3349 = vmatmul.mubr.f32.gmra.mrb[0].mxu0 %v3348
        %v3350 = vpop.f32.mrb[0].mxu0
        %v3351 = vadd.f32 %v3272, %v3350
        %v3352 = vpop.f32.mrb[0].mxu0
        %3353 = vmatprep.mubr.f32.mxu0 0.0
        %v3354 = vand.u32 %v834, 4294901760
        %3355 = vmatmul.mubr.f32.gmra.mrb[0].mxu0 %v3354
        %v3356 = vpop.f32.mrb[0].mxu0
        %v3357 = vadd.f32 %v3278, %v3356
        %v3358 = vpop.f32.mrb[0].mxu0
        %3359 = vdwg.mxu0
        %v3360 = vmul.f32 %v315, %v315
        %v3361 = vmul.f32 %v316, %v316
        %v3363 = vsel %vm321, %v3360, 0
        %v3366 = vsel %vm321, %v3361, 0
        %3368 = vmatprep.subr.mxu0 0.0
        %v3369 = vand.u32 %v317, 4294901760
        %3370 = vmatpush1.msra.mxu0 %v3369
        %3371 = vmatprep.subr.mxu0 0.0
        %v3372 = vand.u32 %v318, 4294901760
        %3373 = vmatpush1.msra.mxu0 %v3372
        %3374 = vmatprep.subr.mxu0 0.0
        %3375 = vmatpush1.msra.mxu0 0.0
        %3376 = vmatprep.subr.mxu0 0.0
        %3377 = vmatpush1.msra.mxu0 0.0
        %3378 = vmatprep.subr.mxu0 0.0
        %3379 = vmatpush1.msra.mxu0 0.0
        %3380 = vmatprep.subr.mxu0 0.0
        %3381 = vmatpush1.msra.mxu0 0.0
        %3382 = vmatprep.subr.mxu0 0.0
        %3383 = vmatpush1.msra.mxu0 0.0
        %3384 = vmatprep.subr.mxu0 0.0
        %3385 = vmatpush1.msra.mxu0 0.0
        %3386 = vmatprep.subr.mxu0 0.0
        %3387 = vmatpush1.msra.mxu0 0.0
        %3388 = vmatprep.subr.mxu0 0.0
        %3389 = vmatpush1.msra.mxu0 0.0
        %3390 = vmatprep.subr.mxu0 0.0
        %3391 = vmatpush1.msra.mxu0 0.0
        %3392 = vmatprep.subr.mxu0 0.0
        %3393 = vmatpush1.msra.mxu0 0.0
        %3394 = vmatprep.subr.mxu0 0.0
        %3395 = vmatpush1.msra.mxu0 0.0
        %3396 = vmatprep.subr.mxu0 0.0
        %3397 = vmatpush1.msra.mxu0 0.0
        %3398 = vmatprep.subr.mxu0 0.0
        %3399 = vmatpush1.msra.mxu0 0.0
        %3400 = vmatprep.subr.mxu0 0.0
        %3401 = vmatpush1.msra.mxu0 0.0
        %3402 = vmatprep.subr.mxu0 0.0
        %3403 = vmatpush1.msra.mxu0 0.0
        %3404 = vmatprep.subr.mxu0 0.0
        %3405 = vmatpush1.msra.mxu0 0.0
        %3406 = vmatprep.subr.mxu0 0.0
        %3407 = vmatpush1.msra.mxu0 0.0
        %3408 = vmatprep.subr.mxu0 0.0
        %3409 = vmatpush1.msra.mxu0 0.0
        %3410 = vmatprep.subr.mxu0 0.0
        %3411 = vmatpush1.msra.mxu0 0.0
        %3412 = vmatprep.subr.mxu0 0.0
        %3413 = vmatpush1.msra.mxu0 0.0
        %3414 = vmatprep.subr.mxu0 0.0
        %3415 = vmatpush1.msra.mxu0 0.0
        %3416 = vmatprep.subr.mxu0 0.0
        %3417 = vmatpush1.msra.mxu0 0.0
        %3418 = vmatprep.subr.mxu0 0.0
        %3419 = vmatpush1.msra.mxu0 0.0
        %3420 = vmatprep.subr.mxu0 0.0
        %3421 = vmatpush1.msra.mxu0 0.0
        %3422 = vmatprep.subr.mxu0 0.0
        %3423 = vmatpush1.msra.mxu0 0.0
        %3424 = vmatprep.subr.mxu0 0.0
        %3425 = vmatpush1.msra.mxu0 0.0
        %3426 = vmatprep.subr.mxu0 0.0
        %3427 = vmatpush1.msra.mxu0 0.0
        %3428 = vmatprep.subr.mxu0 0.0
        %3429 = vmatpush1.msra.mxu0 0.0
        %3430 = vmatprep.subr.mxu0 0.0
        %3431 = vmatpush1.msra.mxu0 0.0
        %3432 = vmatprep.subr.mxu0 0.0
        %3433 = vmatpush1.msra.mxu0 0.0
        %3434 = vmatprep.mubr.f32.mxu0 0.0
        %v3435 = vand.u32 %v3363, 4294901760
        %v3436 = vsub.f32 %v3363, %v3435
        %v3437 = vand.u32 %v3436, 4294901760
        %v3438 = vsub.f32 %v3436, %v3437
        %v3439 = vand.u32 %v3438, 4294901760
        %3440 = vmatmul.mubr.f32.gmra.mrb[0].mxu0 %v3439
        %v3441 = vpop.f32.mrb[0].mxu0
        %v3442 = vadd.f32 0.0, %v3441
        %v3443 = vpop.f32.mrb[0].mxu0
        %3444 = vmatprep.mubr.f32.mxu0 0.0
        %v3445 = vand.u32 %v3366, 4294901760
        %v3446 = vsub.f32 %v3366, %v3445
        %v3447 = vand.u32 %v3446, 4294901760
        %v3448 = vsub.f32 %v3446, %v3447
        %v3449 = vand.u32 %v3448, 4294901760
        %3450 = vmatmul.mubr.f32.gmra.mrb[0].mxu0 %v3449
        %v3451 = vpop.f32.mrb[0].mxu0
        %v3452 = vadd.f32 0.0, %v3451
        %v3453 = vpop.f32.mrb[0].mxu0
        %3454 = vdwg.mxu0
        %3455 = vmatprep.subr.mxu0 0.0
        %v3456 = vand.u32 %v317, 4294901760
        %v3457 = vsub.f32 %v317, %v3456
        %v3458 = vand.u32 %v3457, 4294901760
        %v3459 = vsub.f32 %v3457, %v3458
        %v3460 = vand.u32 %v3459, 4294901760
        %3461 = vmatpush1.msra.mxu0 %v3460
        %3462 = vmatprep.subr.mxu0 0.0
        %v3463 = vand.u32 %v318, 4294901760
        %v3464 = vsub.f32 %v318, %v3463
        %v3465 = vand.u32 %v3464, 4294901760
        %v3466 = vsub.f32 %v3464, %v3465
        %v3467 = vand.u32 %v3466, 4294901760
        %3468 = vmatpush1.msra.mxu0 %v3467
        %3469 = vmatprep.subr.mxu0 0.0
        %3470 = vmatpush1.msra.mxu0 0.0
        %3471 = vmatprep.subr.mxu0 0.0
        %3472 = vmatpush1.msra.mxu0 0.0
        %3473 = vmatprep.subr.mxu0 0.0
        %3474 = vmatpush1.msra.mxu0 0.0
        %3475 = vmatprep.subr.mxu0 0.0
        %3476 = vmatpush1.msra.mxu0 0.0
        %3477 = vmatprep.subr.mxu0 0.0
        %3478 = vmatpush1.msra.mxu0 0.0
        %3479 = vmatprep.subr.mxu0 0.0
        %3480 = vmatpush1.msra.mxu0 0.0
        %3481 = vmatprep.subr.mxu0 0.0
        %3482 = vmatpush1.msra.mxu0 0.0
        %3483 = vmatprep.subr.mxu0 0.0
        %3484 = vmatpush1.msra.mxu0 0.0
        %3485 = vmatprep.subr.mxu0 0.0
        %3486 = vmatpush1.msra.mxu0 0.0
        %3487 = vmatprep.subr.mxu0 0.0
        %3488 = vmatpush1.msra.mxu0 0.0
        %3489 = vmatprep.subr.mxu0 0.0
        %3490 = vmatpush1.msra.mxu0 0.0
        %3491 = vmatprep.subr.mxu0 0.0
        %3492 = vmatpush1.msra.mxu0 0.0
        %3493 = vmatprep.subr.mxu0 0.0
        %3494 = vmatpush1.msra.mxu0 0.0
        %3495 = vmatprep.subr.mxu0 0.0
        %3496 = vmatpush1.msra.mxu0 0.0
        %3497 = vmatprep.subr.mxu0 0.0
        %3498 = vmatpush1.msra.mxu0 0.0
        %3499 = vmatprep.subr.mxu0 0.0
        %3500 = vmatpush1.msra.mxu0 0.0
        %3501 = vmatprep.subr.mxu0 0.0
        %3502 = vmatpush1.msra.mxu0 0.0
        %3503 = vmatprep.subr.mxu0 0.0
        %3504 = vmatpush1.msra.mxu0 0.0
        %3505 = vmatprep.subr.mxu0 0.0
        %3506 = vmatpush1.msra.mxu0 0.0
        %3507 = vmatprep.subr.mxu0 0.0
        %3508 = vmatpush1.msra.mxu0 0.0
        %3509 = vmatprep.subr.mxu0 0.0
        %3510 = vmatpush1.msra.mxu0 0.0
        %3511 = vmatprep.subr.mxu0 0.0
        %3512 = vmatpush1.msra.mxu0 0.0
        %3513 = vmatprep.subr.mxu0 0.0
        %3514 = vmatpush1.msra.mxu0 0.0
        %3515 = vmatprep.subr.mxu0 0.0
        %3516 = vmatpush1.msra.mxu0 0.0
        %3517 = vmatprep.subr.mxu0 0.0
        %3518 = vmatpush1.msra.mxu0 0.0
        %3519 = vmatprep.subr.mxu0 0.0
        %3520 = vmatpush1.msra.mxu0 0.0
        %3521 = vmatprep.subr.mxu0 0.0
        %3522 = vmatpush1.msra.mxu0 0.0
        %3523 = vmatprep.subr.mxu0 0.0
        %3524 = vmatpush1.msra.mxu0 0.0
        %3525 = vmatprep.subr.mxu0 0.0
        %3526 = vmatpush1.msra.mxu0 0.0
        %3527 = vmatprep.subr.mxu0 0.0
        %3528 = vmatpush1.msra.mxu0 0.0
        %3529 = vmatprep.mubr.f32.mxu0 0.0
        %v3530 = vand.u32 %v3363, 4294901760
        %3531 = vmatmul.mubr.f32.gmra.mrb[0].mxu0 %v3530
        %v3532 = vpop.f32.mrb[0].mxu0
        %v3533 = vadd.f32 %v3442, %v3532
        %v3534 = vpop.f32.mrb[0].mxu0
        %3535 = vmatprep.mubr.f32.mxu0 0.0
        %v3536 = vand.u32 %v3366, 4294901760
        %3537 = vmatmul.mubr.f32.gmra.mrb[0].mxu0 %v3536
        %v3538 = vpop.f32.mrb[0].mxu0
        %v3539 = vadd.f32 %v3452, %v3538
        %v3540 = vpop.f32.mrb[0].mxu0
        %3541 = vdwg.mxu0
        %3542 = vmatprep.subr.mxu0 0.0
        %v3543 = vand.u32 %v317, 4294901760
        %v3544 = vsub.f32 %v317, %v3543
        %3545 = vmatpush1.msra.mxu0 %v3544
        %3546 = vmatprep.subr.mxu0 0.0
        %v3547 = vand.u32 %v318, 4294901760
        %v3548 = vsub.f32 %v318, %v3547
        %3549 = vmatpush1.msra.mxu0 %v3548
        %3550 = vmatprep.subr.mxu0 0.0
        %3551 = vmatpush1.msra.mxu0 0.0
        %3552 = vmatprep.subr.mxu0 0.0
        %3553 = vmatpush1.msra.mxu0 0.0
        %3554 = vmatprep.subr.mxu0 0.0
        %3555 = vmatpush1.msra.mxu0 0.0
        %3556 = vmatprep.subr.mxu0 0.0
        %3557 = vmatpush1.msra.mxu0 0.0
        %3558 = vmatprep.subr.mxu0 0.0
        %3559 = vmatpush1.msra.mxu0 0.0
        %3560 = vmatprep.subr.mxu0 0.0
        %3561 = vmatpush1.msra.mxu0 0.0
        %3562 = vmatprep.subr.mxu0 0.0
        %3563 = vmatpush1.msra.mxu0 0.0
        %3564 = vmatprep.subr.mxu0 0.0
        %3565 = vmatpush1.msra.mxu0 0.0
        %3566 = vmatprep.subr.mxu0 0.0
        %3567 = vmatpush1.msra.mxu0 0.0
        %3568 = vmatprep.subr.mxu0 0.0
        %3569 = vmatpush1.msra.mxu0 0.0
        %3570 = vmatprep.subr.mxu0 0.0
        %3571 = vmatpush1.msra.mxu0 0.0
        %3572 = vmatprep.subr.mxu0 0.0
        %3573 = vmatpush1.msra.mxu0 0.0
        %3574 = vmatprep.subr.mxu0 0.0
        %3575 = vmatpush1.msra.mxu0 0.0
        %3576 = vmatprep.subr.mxu0 0.0
        %3577 = vmatpush1.msra.mxu0 0.0
        %3578 = vmatprep.subr.mxu0 0.0
        %3579 = vmatpush1.msra.mxu0 0.0
        %3580 = vmatprep.subr.mxu0 0.0
        %3581 = vmatpush1.msra.mxu0 0.0
        %3582 = vmatprep.subr.mxu0 0.0
        %3583 = vmatpush1.msra.mxu0 0.0
        %3584 = vmatprep.subr.mxu0 0.0
        %3585 = vmatpush1.msra.mxu0 0.0
        %3586 = vmatprep.subr.mxu0 0.0
        %3587 = vmatpush1.msra.mxu0 0.0
        %3588 = vmatprep.subr.mxu0 0.0
        %3589 = vmatpush1.msra.mxu0 0.0
        %3590 = vmatprep.subr.mxu0 0.0
        %3591 = vmatpush1.msra.mxu0 0.0
        %3592 = vmatprep.subr.mxu0 0.0
        %3593 = vmatpush1.msra.mxu0 0.0
        %3594 = vmatprep.subr.mxu0 0.0
        %3595 = vmatpush1.msra.mxu0 0.0
        %3596 = vmatprep.subr.mxu0 0.0
        %3597 = vmatpush1.msra.mxu0 0.0
        %3598 = vmatprep.subr.mxu0 0.0
        %3599 = vmatpush1.msra.mxu0 0.0
        %3600 = vmatprep.subr.mxu0 0.0
        %3601 = vmatpush1.msra.mxu0 0.0
        %3602 = vmatprep.subr.mxu0 0.0
        %3603 = vmatpush1.msra.mxu0 0.0
        %3604 = vmatprep.subr.mxu0 0.0
        %3605 = vmatpush1.msra.mxu0 0.0
        %3606 = vmatprep.subr.mxu0 0.0
        %3607 = vmatpush1.msra.mxu0 0.0
        %3608 = vmatprep.subr.mxu0 0.0
        %3609 = vmatpush1.msra.mxu0 0.0
        %3610 = vmatprep.mubr.f32.mxu0 0.0
        %v3611 = vand.u32 %v3363, 4294901760
        %v3612 = vsub.f32 %v3363, %v3611
        %3613 = vmatmul.mubr.f32.gmra.mrb[0].mxu0 %v3612
        %v3614 = vpop.f32.mrb[0].mxu0
        %v3615 = vadd.f32 %v3533, %v3614
        %v3616 = vpop.f32.mrb[0].mxu0
        %3617 = vmatprep.mubr.f32.mxu0 0.0
        %v3618 = vand.u32 %v3366, 4294901760
        %v3619 = vsub.f32 %v3366, %v3618
        %3620 = vmatmul.mubr.f32.gmra.mrb[0].mxu0 %v3619
        %v3621 = vpop.f32.mrb[0].mxu0
        %v3622 = vadd.f32 %v3539, %v3621
        %v3623 = vpop.f32.mrb[0].mxu0
        %3624 = vdwg.mxu0
        %3625 = vmatprep.subr.mxu0 0.0
        %v3626 = vand.u32 %v317, 4294901760
        %3627 = vmatpush1.msra.mxu0 %v3626
        %3628 = vmatprep.subr.mxu0 0.0
        %v3629 = vand.u32 %v318, 4294901760
        %3630 = vmatpush1.msra.mxu0 %v3629
        %3631 = vmatprep.subr.mxu0 0.0
        %3632 = vmatpush1.msra.mxu0 0.0
        %3633 = vmatprep.subr.mxu0 0.0
        %3634 = vmatpush1.msra.mxu0 0.0
        %3635 = vmatprep.subr.mxu0 0.0
        %3636 = vmatpush1.msra.mxu0 0.0
        %3637 = vmatprep.subr.mxu0 0.0
        %3638 = vmatpush1.msra.mxu0 0.0
        %3639 = vmatprep.subr.mxu0 0.0
        %3640 = vmatpush1.msra.mxu0 0.0
        %3641 = vmatprep.subr.mxu0 0.0
        %3642 = vmatpush1.msra.mxu0 0.0
        %3643 = vmatprep.subr.mxu0 0.0
        %3644 = vmatpush1.msra.mxu0 0.0
        %3645 = vmatprep.subr.mxu0 0.0
        %3646 = vmatpush1.msra.mxu0 0.0
        %3647 = vmatprep.subr.mxu0 0.0
        %3648 = vmatpush1.msra.mxu0 0.0
        %3649 = vmatprep.subr.mxu0 0.0
        %3650 = vmatpush1.msra.mxu0 0.0
        %3651 = vmatprep.subr.mxu0 0.0
        %3652 = vmatpush1.msra.mxu0 0.0
        %3653 = vmatprep.subr.mxu0 0.0
        %3654 = vmatpush1.msra.mxu0 0.0
        %3655 = vmatprep.subr.mxu0 0.0
        %3656 = vmatpush1.msra.mxu0 0.0
        %3657 = vmatprep.subr.mxu0 0.0
        %3658 = vmatpush1.msra.mxu0 0.0
        %3659 = vmatprep.subr.mxu0 0.0
        %3660 = vmatpush1.msra.mxu0 0.0
        %3661 = vmatprep.subr.mxu0 0.0
        %3662 = vmatpush1.msra.mxu0 0.0
        %3663 = vmatprep.subr.mxu0 0.0
        %3664 = vmatpush1.msra.mxu0 0.0
        %3665 = vmatprep.subr.mxu0 0.0
        %3666 = vmatpush1.msra.mxu0 0.0
        %3667 = vmatprep.subr.mxu0 0.0
        %3668 = vmatpush1.msra.mxu0 0.0
        %3669 = vmatprep.subr.mxu0 0.0
        %3670 = vmatpush1.msra.mxu0 0.0
        %3671 = vmatprep.subr.mxu0 0.0
        %3672 = vmatpush1.msra.mxu0 0.0
        %3673 = vmatprep.subr.mxu0 0.0
        %3674 = vmatpush1.msra.mxu0 0.0
        %3675 = vmatprep.subr.mxu0 0.0
        %3676 = vmatpush1.msra.mxu0 0.0
        %3677 = vmatprep.subr.mxu0 0.0
        %3678 = vmatpush1.msra.mxu0 0.0
        %3679 = vmatprep.subr.mxu0 0.0
        %3680 = vmatpush1.msra.mxu0 0.0
        %3681 = vmatprep.subr.mxu0 0.0
        %3682 = vmatpush1.msra.mxu0 0.0
        %3683 = vmatprep.subr.mxu0 0.0
        %3684 = vmatpush1.msra.mxu0 0.0
        %3685 = vmatprep.subr.mxu0 0.0
        %3686 = vmatpush1.msra.mxu0 0.0
        %3687 = vmatprep.subr.mxu0 0.0
        %3688 = vmatpush1.msra.mxu0 0.0
        %3689 = vmatprep.subr.mxu0 0.0
        %3690 = vmatpush1.msra.mxu0 0.0
        %3691 = vmatprep.mubr.f32.mxu0 0.0
        %v3692 = vand.u32 %v3363, 4294901760
        %v3693 = vsub.f32 %v3363, %v3692
        %v3694 = vand.u32 %v3693, 4294901760
        %3695 = vmatmul.mubr.f32.gmra.mrb[0].mxu0 %v3694
        %v3696 = vpop.f32.mrb[0].mxu0
        %v3697 = vadd.f32 %v3615, %v3696
        %v3698 = vpop.f32.mrb[0].mxu0
        %3699 = vmatprep.mubr.f32.mxu0 0.0
        %v3700 = vand.u32 %v3366, 4294901760
        %v3701 = vsub.f32 %v3366, %v3700
        %v3702 = vand.u32 %v3701, 4294901760
        %3703 = vmatmul.mubr.f32.gmra.mrb[0].mxu0 %v3702
        %v3704 = vpop.f32.mrb[0].mxu0
        %v3705 = vadd.f32 %v3622, %v3704
        %v3706 = vpop.f32.mrb[0].mxu0
        %3707 = vdwg.mxu0
        %3708 = vmatprep.subr.mxu0 0.0
        %v3709 = vand.u32 %v317, 4294901760
        %v3710 = vsub.f32 %v317, %v3709
        %v3711 = vand.u32 %v3710, 4294901760
        %3712 = vmatpush1.msra.mxu0 %v3711
        %3713 = vmatprep.subr.mxu0 0.0
        %v3714 = vand.u32 %v318, 4294901760
        %v3715 = vsub.f32 %v318, %v3714
        %v3716 = vand.u32 %v3715, 4294901760
        %3717 = vmatpush1.msra.mxu0 %v3716
        %3718 = vmatprep.subr.mxu0 0.0
        %3719 = vmatpush1.msra.mxu0 0.0
        %3720 = vmatprep.subr.mxu0 0.0
        %3721 = vmatpush1.msra.mxu0 0.0
        %3722 = vmatprep.subr.mxu0 0.0
        %3723 = vmatpush1.msra.mxu0 0.0
        %3724 = vmatprep.subr.mxu0 0.0
        %3725 = vmatpush1.msra.mxu0 0.0
        %3726 = vmatprep.subr.mxu0 0.0
        %3727 = vmatpush1.msra.mxu0 0.0
        %3728 = vmatprep.subr.mxu0 0.0
        %3729 = vmatpush1.msra.mxu0 0.0
        %3730 = vmatprep.subr.mxu0 0.0
        %3731 = vmatpush1.msra.mxu0 0.0
        %3732 = vmatprep.subr.mxu0 0.0
        %3733 = vmatpush1.msra.mxu0 0.0
        %3734 = vmatprep.subr.mxu0 0.0
        %3735 = vmatpush1.msra.mxu0 0.0
        %3736 = vmatprep.subr.mxu0 0.0
        %3737 = vmatpush1.msra.mxu0 0.0
        %3738 = vmatprep.subr.mxu0 0.0
        %3739 = vmatpush1.msra.mxu0 0.0
        %3740 = vmatprep.subr.mxu0 0.0
        %3741 = vmatpush1.msra.mxu0 0.0
        %3742 = vmatprep.subr.mxu0 0.0
        %3743 = vmatpush1.msra.mxu0 0.0
        %3744 = vmatprep.subr.mxu0 0.0
        %3745 = vmatpush1.msra.mxu0 0.0
        %3746 = vmatprep.subr.mxu0 0.0
        %3747 = vmatpush1.msra.mxu0 0.0
        %3748 = vmatprep.subr.mxu0 0.0
        %3749 = vmatpush1.msra.mxu0 0.0
        %3750 = vmatprep.subr.mxu0 0.0
        %3751 = vmatpush1.msra.mxu0 0.0
        %3752 = vmatprep.subr.mxu0 0.0
        %3753 = vmatpush1.msra.mxu0 0.0
        %3754 = vmatprep.subr.mxu0 0.0
        %3755 = vmatpush1.msra.mxu0 0.0
        %3756 = vmatprep.subr.mxu0 0.0
        %3757 = vmatpush1.msra.mxu0 0.0
        %3758 = vmatprep.subr.mxu0 0.0
        %3759 = vmatpush1.msra.mxu0 0.0
        %3760 = vmatprep.subr.mxu0 0.0
        %3761 = vmatpush1.msra.mxu0 0.0
        %3762 = vmatprep.subr.mxu0 0.0
        %3763 = vmatpush1.msra.mxu0 0.0
        %3764 = vmatprep.subr.mxu0 0.0
        %3765 = vmatpush1.msra.mxu0 0.0
        %3766 = vmatprep.subr.mxu0 0.0
        %3767 = vmatpush1.msra.mxu0 0.0
        %3768 = vmatprep.subr.mxu0 0.0
        %3769 = vmatpush1.msra.mxu0 0.0
        %3770 = vmatprep.subr.mxu0 0.0
        %3771 = vmatpush1.msra.mxu0 0.0
        %3772 = vmatprep.subr.mxu0 0.0
        %3773 = vmatpush1.msra.mxu0 0.0
        %3774 = vmatprep.subr.mxu0 0.0
        %3775 = vmatpush1.msra.mxu0 0.0
        %3776 = vmatprep.subr.mxu0 0.0
        %3777 = vmatpush1.msra.mxu0 0.0
        %3778 = vmatprep.mubr.f32.mxu0 0.0
        %v3779 = vand.u32 %v3363, 4294901760
        %3780 = vmatmul.mubr.f32.gmra.mrb[0].mxu0 %v3779
        %v3781 = vpop.f32.mrb[0].mxu0
        %v3782 = vadd.f32 %v3697, %v3781
        %v3783 = vpop.f32.mrb[0].mxu0
        %3784 = vmatprep.mubr.f32.mxu0 0.0
        %v3785 = vand.u32 %v3366, 4294901760
        %3786 = vmatmul.mubr.f32.gmra.mrb[0].mxu0 %v3785
        %v3787 = vpop.f32.mrb[0].mxu0
        %v3788 = vadd.f32 %v3705, %v3787
        %v3789 = vpop.f32.mrb[0].mxu0
        %3790 = vdwg.mxu0
        %3791 = vmatprep.subr.mxu0 0.0
        %v3792 = vand.u32 %v317, 4294901760
        %3793 = vmatpush1.msra.mxu0 %v3792
        %3794 = vmatprep.subr.mxu0 0.0
        %v3795 = vand.u32 %v318, 4294901760
        %3796 = vmatpush1.msra.mxu0 %v3795
        %3797 = vmatprep.subr.mxu0 0.0
        %3798 = vmatpush1.msra.mxu0 0.0
        %3799 = vmatprep.subr.mxu0 0.0
        %3800 = vmatpush1.msra.mxu0 0.0
        %3801 = vmatprep.subr.mxu0 0.0
        %3802 = vmatpush1.msra.mxu0 0.0
        %3803 = vmatprep.subr.mxu0 0.0
        %3804 = vmatpush1.msra.mxu0 0.0
        %3805 = vmatprep.subr.mxu0 0.0
        %3806 = vmatpush1.msra.mxu0 0.0
        %3807 = vmatprep.subr.mxu0 0.0
        %3808 = vmatpush1.msra.mxu0 0.0
        %3809 = vmatprep.subr.mxu0 0.0
        %3810 = vmatpush1.msra.mxu0 0.0
        %3811 = vmatprep.subr.mxu0 0.0
        %3812 = vmatpush1.msra.mxu0 0.0
        %3813 = vmatprep.subr.mxu0 0.0
        %3814 = vmatpush1.msra.mxu0 0.0
        %3815 = vmatprep.subr.mxu0 0.0
        %3816 = vmatpush1.msra.mxu0 0.0
        %3817 = vmatprep.subr.mxu0 0.0
        %3818 = vmatpush1.msra.mxu0 0.0
        %3819 = vmatprep.subr.mxu0 0.0
        %3820 = vmatpush1.msra.mxu0 0.0
        %3821 = vmatprep.subr.mxu0 0.0
        %3822 = vmatpush1.msra.mxu0 0.0
        %3823 = vmatprep.subr.mxu0 0.0
        %3824 = vmatpush1.msra.mxu0 0.0
        %3825 = vmatprep.subr.mxu0 0.0
        %3826 = vmatpush1.msra.mxu0 0.0
        %3827 = vmatprep.subr.mxu0 0.0
        %3828 = vmatpush1.msra.mxu0 0.0
        %3829 = vmatprep.subr.mxu0 0.0
        %3830 = vmatpush1.msra.mxu0 0.0
        %3831 = vmatprep.subr.mxu0 0.0
        %3832 = vmatpush1.msra.mxu0 0.0
        %3833 = vmatprep.subr.mxu0 0.0
        %3834 = vmatpush1.msra.mxu0 0.0
        %3835 = vmatprep.subr.mxu0 0.0
        %3836 = vmatpush1.msra.mxu0 0.0
        %3837 = vmatprep.subr.mxu0 0.0
        %3838 = vmatpush1.msra.mxu0 0.0
        %3839 = vmatprep.subr.mxu0 0.0
        %3840 = vmatpush1.msra.mxu0 0.0
        %3841 = vmatprep.subr.mxu0 0.0
        %3842 = vmatpush1.msra.mxu0 0.0
        %3843 = vmatprep.subr.mxu0 0.0
        %3844 = vmatpush1.msra.mxu0 0.0
        %3845 = vmatprep.subr.mxu0 0.0
        %3846 = vmatpush1.msra.mxu0 0.0
        %3847 = vmatprep.subr.mxu0 0.0
        %3848 = vmatpush1.msra.mxu0 0.0
        %3849 = vmatprep.subr.mxu0 0.0
        %3850 = vmatpush1.msra.mxu0 0.0
        %3851 = vmatprep.subr.mxu0 0.0
        %3852 = vmatpush1.msra.mxu0 0.0
        %3853 = vmatprep.subr.mxu0 0.0
        %3854 = vmatpush1.msra.mxu0 0.0
        %3855 = vmatprep.subr.mxu0 0.0
        %3856 = vmatpush1.msra.mxu0 0.0
        %3857 = vmatprep.mubr.f32.mxu0 0.0
        %v3858 = vand.u32 %v3363, 4294901760
        %3859 = vmatmul.mubr.f32.gmra.mrb[0].mxu0 %v3858
        %v3860 = vpop.f32.mrb[0].mxu0
        %v3861 = vadd.f32 %v3782, %v3860
        %v3862 = vpop.f32.mrb[0].mxu0
        %3863 = vmatprep.mubr.f32.mxu0 0.0
        %v3864 = vand.u32 %v3366, 4294901760
        %3865 = vmatmul.mubr.f32.gmra.mrb[0].mxu0 %v3864
        %v3866 = vpop.f32.mrb[0].mxu0
        %v3867 = vadd.f32 %v3788, %v3866
        %v3868 = vpop.f32.mrb[0].mxu0
        %3869 = vdwg.mxu0
        %3870 = vmatprep.subr.mxu0 0.0
        %v3871 = vand.u32 %v3861, 4294901760
        %3872 = vmatpush1.msra.mxu0 %v3871
        %3873 = vmatprep.subr.mxu0 0.0
        %v3874 = vand.u32 %v3867, 4294901760
        %3875 = vmatpush1.msra.mxu0 %v3874
        %3876 = vmatprep.subr.mxu0 0.0
        %3877 = vmatpush1.msra.mxu0 0.0
        %3878 = vmatprep.subr.mxu0 0.0
        %3879 = vmatpush1.msra.mxu0 0.0
        %3880 = vmatprep.subr.mxu0 0.0
        %3881 = vmatpush1.msra.mxu0 0.0
        %3882 = vmatprep.subr.mxu0 0.0
        %3883 = vmatpush1.msra.mxu0 0.0
        %3884 = vmatprep.subr.mxu0 0.0
        %3885 = vmatpush1.msra.mxu0 0.0
        %3886 = vmatprep.subr.mxu0 0.0
        %3887 = vmatpush1.msra.mxu0 0.0
        %3888 = vmatprep.subr.mxu0 0.0
        %3889 = vmatpush1.msra.mxu0 0.0
        %3890 = vmatprep.subr.mxu0 0.0
        %3891 = vmatpush1.msra.mxu0 0.0
        %3892 = vmatprep.subr.mxu0 0.0
        %3893 = vmatpush1.msra.mxu0 0.0
        %3894 = vmatprep.subr.mxu0 0.0
        %3895 = vmatpush1.msra.mxu0 0.0
        %3896 = vmatprep.subr.mxu0 0.0
        %3897 = vmatpush1.msra.mxu0 0.0
        %3898 = vmatprep.subr.mxu0 0.0
        %3899 = vmatpush1.msra.mxu0 0.0
        %3900 = vmatprep.subr.mxu0 0.0
        %3901 = vmatpush1.msra.mxu0 0.0
        %3902 = vmatprep.subr.mxu0 0.0
        %3903 = vmatpush1.msra.mxu0 0.0
        %3904 = vmatprep.subr.mxu0 0.0
        %3905 = vmatpush1.msra.mxu0 0.0
        %3906 = vmatprep.subr.mxu0 0.0
        %3907 = vmatpush1.msra.mxu0 0.0
        %3908 = vmatprep.subr.mxu0 0.0
        %3909 = vmatpush1.msra.mxu0 0.0
        %3910 = vmatprep.subr.mxu0 0.0
        %3911 = vmatpush1.msra.mxu0 0.0
        %3912 = vmatprep.subr.mxu0 0.0
        %3913 = vmatpush1.msra.mxu0 0.0
        %3914 = vmatprep.subr.mxu0 0.0
        %3915 = vmatpush1.msra.mxu0 0.0
        %3916 = vmatprep.subr.mxu0 0.0
        %3917 = vmatpush1.msra.mxu0 0.0
        %3918 = vmatprep.subr.mxu0 0.0
        %3919 = vmatpush1.msra.mxu0 0.0
        %3920 = vmatprep.subr.mxu0 0.0
        %3921 = vmatpush1.msra.mxu0 0.0
        %3922 = vmatprep.subr.mxu0 0.0
        %3923 = vmatpush1.msra.mxu0 0.0
        %3924 = vmatprep.subr.mxu0 0.0
        %3925 = vmatpush1.msra.mxu0 0.0
        %3926 = vmatprep.subr.mxu0 0.0
        %3927 = vmatpush1.msra.mxu0 0.0
        %3928 = vmatprep.subr.mxu0 0.0
        %3929 = vmatpush1.msra.mxu0 0.0
        %3930 = vmatprep.subr.mxu0 0.0
        %3931 = vmatpush1.msra.mxu0 0.0
        %3932 = vmatprep.subr.mxu0 0.0
        %3933 = vmatpush1.msra.mxu0 0.0
        %3934 = vmatprep.subr.mxu0 0.0
        %3935 = vmatpush1.msra.mxu0 0.0
        %3936 = vmatprep.mubr.f32.mxu0 0.0
        %v3937 = vand.u32 %v831, 4294901760
        %v3938 = vsub.f32 %v831, %v3937
        %v3939 = vand.u32 %v3938, 4294901760
        %v3940 = vsub.f32 %v3938, %v3939
        %v3941 = vand.u32 %v3940, 4294901760
        %3942 = vmatmul.mubr.f32.gmra.mrb[0].mxu0 %v3941
        %v3943 = vpop.f32.mrb[0].mxu0
        %v3944 = vadd.f32 0.0, %v3943
        %v3945 = vpop.f32.mrb[0].mxu0
        %3946 = vmatprep.mubr.f32.mxu0 0.0
        %v3947 = vand.u32 %v834, 4294901760
        %v3948 = vsub.f32 %v834, %v3947
        %v3949 = vand.u32 %v3948, 4294901760
        %v3950 = vsub.f32 %v3948, %v3949
        %v3951 = vand.u32 %v3950, 4294901760
        %3952 = vmatmul.mubr.f32.gmra.mrb[0].mxu0 %v3951
        %v3953 = vpop.f32.mrb[0].mxu0
        %v3954 = vadd.f32 0.0, %v3953
        %v3955 = vpop.f32.mrb[0].mxu0
        %3956 = vdwg.mxu0
        %3957 = vmatprep.subr.mxu0 0.0
        %v3958 = vand.u32 %v3861, 4294901760
        %v3959 = vsub.f32 %v3861, %v3958
        %v3960 = vand.u32 %v3959, 4294901760
        %v3961 = vsub.f32 %v3959, %v3960
        %v3962 = vand.u32 %v3961, 4294901760
        %3963 = vmatpush1.msra.mxu0 %v3962
        %3964 = vmatprep.subr.mxu0 0.0
        %v3965 = vand.u32 %v3867, 4294901760
        %v3966 = vsub.f32 %v3867, %v3965
        %v3967 = vand.u32 %v3966, 4294901760
        %v3968 = vsub.f32 %v3966, %v3967
        %v3969 = vand.u32 %v3968, 4294901760
        %3970 = vmatpush1.msra.mxu0 %v3969
        %3971 = vmatprep.subr.mxu0 0.0
        %3972 = vmatpush1.msra.mxu0 0.0
        %3973 = vmatprep.subr.mxu0 0.0
        %3974 = vmatpush1.msra.mxu0 0.0
        %3975 = vmatprep.subr.mxu0 0.0
        %3976 = vmatpush1.msra.mxu0 0.0
        %3977 = vmatprep.subr.mxu0 0.0
        %3978 = vmatpush1.msra.mxu0 0.0
        %3979 = vmatprep.subr.mxu0 0.0
        %3980 = vmatpush1.msra.mxu0 0.0
        %3981 = vmatprep.subr.mxu0 0.0
        %3982 = vmatpush1.msra.mxu0 0.0
        %3983 = vmatprep.subr.mxu0 0.0
        %3984 = vmatpush1.msra.mxu0 0.0
        %3985 = vmatprep.subr.mxu0 0.0
        %3986 = vmatpush1.msra.mxu0 0.0
        %3987 = vmatprep.subr.mxu0 0.0
        %3988 = vmatpush1.msra.mxu0 0.0
        %3989 = vmatprep.subr.mxu0 0.0
        %3990 = vmatpush1.msra.mxu0 0.0
        %3991 = vmatprep.subr.mxu0 0.0
        %3992 = vmatpush1.msra.mxu0 0.0
        %3993 = vmatprep.subr.mxu0 0.0
        %3994 = vmatpush1.msra.mxu0 0.0
        %3995 = vmatprep.subr.mxu0 0.0
        %3996 = vmatpush1.msra.mxu0 0.0
        %3997 = vmatprep.subr.mxu0 0.0
        %3998 = vmatpush1.msra.mxu0 0.0
        %3999 = vmatprep.subr.mxu0 0.0
        %4000 = vmatpush1.msra.mxu0 0.0
        %4001 = vmatprep.subr.mxu0 0.0
        %4002 = vmatpush1.msra.mxu0 0.0
        %4003 = vmatprep.subr.mxu0 0.0
        %4004 = vmatpush1.msra.mxu0 0.0
        %4005 = vmatprep.subr.mxu0 0.0
        %4006 = vmatpush1.msra.mxu0 0.0
        %4007 = vmatprep.subr.mxu0 0.0
        %4008 = vmatpush1.msra.mxu0 0.0
        %4009 = vmatprep.subr.mxu0 0.0
        %4010 = vmatpush1.msra.mxu0 0.0
        %4011 = vmatprep.subr.mxu0 0.0
        %4012 = vmatpush1.msra.mxu0 0.0
        %4013 = vmatprep.subr.mxu0 0.0
        %4014 = vmatpush1.msra.mxu0 0.0
        %4015 = vmatprep.subr.mxu0 0.0
        %4016 = vmatpush1.msra.mxu0 0.0
        %4017 = vmatprep.subr.mxu0 0.0
        %4018 = vmatpush1.msra.mxu0 0.0
        %4019 = vmatprep.subr.mxu0 0.0
        %4020 = vmatpush1.msra.mxu0 0.0
        %4021 = vmatprep.subr.mxu0 0.0
        %4022 = vmatpush1.msra.mxu0 0.0
        %4023 = vmatprep.subr.mxu0 0.0
        %4024 = vmatpush1.msra.mxu0 0.0
        %4025 = vmatprep.subr.mxu0 0.0
        %4026 = vmatpush1.msra.mxu0 0.0
        %4027 = vmatprep.subr.mxu0 0.0
        %4028 = vmatpush1.msra.mxu0 0.0
        %4029 = vmatprep.subr.mxu0 0.0
        %4030 = vmatpush1.msra.mxu0 0.0
        %4031 = vmatprep.mubr.f32.mxu0 0.0
        %v4032 = vand.u32 %v831, 4294901760
        %4033 = vmatmul.mubr.f32.gmra.mrb[0].mxu0 %v4032
        %v4034 = vpop.f32.mrb[0].mxu0
        %v4035 = vadd.f32 %v3944, %v4034
        %v4036 = vpop.f32.mrb[0].mxu0
        %4037 = vmatprep.mubr.f32.mxu0 0.0
        %v4038 = vand.u32 %v834, 4294901760
        %4039 = vmatmul.mubr.f32.gmra.mrb[0].mxu0 %v4038
        %v4040 = vpop.f32.mrb[0].mxu0
        %v4041 = vadd.f32 %v3954, %v4040
        %v4042 = vpop.f32.mrb[0].mxu0
        %4043 = vdwg.mxu0
        %4044 = vmatprep.subr.mxu0 0.0
        %v4045 = vand.u32 %v3861, 4294901760
        %v4046 = vsub.f32 %v3861, %v4045
        %4047 = vmatpush1.msra.mxu0 %v4046
        %4048 = vmatprep.subr.mxu0 0.0
        %v4049 = vand.u32 %v3867, 4294901760
        %v4050 = vsub.f32 %v3867, %v4049
        %4051 = vmatpush1.msra.mxu0 %v4050
        %4052 = vmatprep.subr.mxu0 0.0
        %4053 = vmatpush1.msra.mxu0 0.0
        %4054 = vmatprep.subr.mxu0 0.0
        %4055 = vmatpush1.msra.mxu0 0.0
        %4056 = vmatprep.subr.mxu0 0.0
        %4057 = vmatpush1.msra.mxu0 0.0
        %4058 = vmatprep.subr.mxu0 0.0
        %4059 = vmatpush1.msra.mxu0 0.0
        %4060 = vmatprep.subr.mxu0 0.0
        %4061 = vmatpush1.msra.mxu0 0.0
        %4062 = vmatprep.subr.mxu0 0.0
        %4063 = vmatpush1.msra.mxu0 0.0
        %4064 = vmatprep.subr.mxu0 0.0
        %4065 = vmatpush1.msra.mxu0 0.0
        %4066 = vmatprep.subr.mxu0 0.0
        %4067 = vmatpush1.msra.mxu0 0.0
        %4068 = vmatprep.subr.mxu0 0.0
        %4069 = vmatpush1.msra.mxu0 0.0
        %4070 = vmatprep.subr.mxu0 0.0
        %4071 = vmatpush1.msra.mxu0 0.0
        %4072 = vmatprep.subr.mxu0 0.0
        %4073 = vmatpush1.msra.mxu0 0.0
        %4074 = vmatprep.subr.mxu0 0.0
        %4075 = vmatpush1.msra.mxu0 0.0
        %4076 = vmatprep.subr.mxu0 0.0
        %4077 = vmatpush1.msra.mxu0 0.0
        %4078 = vmatprep.subr.mxu0 0.0
        %4079 = vmatpush1.msra.mxu0 0.0
        %4080 = vmatprep.subr.mxu0 0.0
        %4081 = vmatpush1.msra.mxu0 0.0
        %4082 = vmatprep.subr.mxu0 0.0
        %4083 = vmatpush1.msra.mxu0 0.0
        %4084 = vmatprep.subr.mxu0 0.0
        %4085 = vmatpush1.msra.mxu0 0.0
        %4086 = vmatprep.subr.mxu0 0.0
        %4087 = vmatpush1.msra.mxu0 0.0
        %4088 = vmatprep.subr.mxu0 0.0
        %4089 = vmatpush1.msra.mxu0 0.0
        %4090 = vmatprep.subr.mxu0 0.0
        %4091 = vmatpush1.msra.mxu0 0.0
        %4092 = vmatprep.subr.mxu0 0.0
        %4093 = vmatpush1.msra.mxu0 0.0
        %4094 = vmatprep.subr.mxu0 0.0
        %4095 = vmatpush1.msra.mxu0 0.0
        %4096 = vmatprep.subr.mxu0 0.0
        %4097 = vmatpush1.msra.mxu0 0.0
        %4098 = vmatprep.subr.mxu0 0.0
        %4099 = vmatpush1.msra.mxu0 0.0
        %4100 = vmatprep.subr.mxu0 0.0
        %4101 = vmatpush1.msra.mxu0 0.0
        %4102 = vmatprep.subr.mxu0 0.0
        %4103 = vmatpush1.msra.mxu0 0.0
        %4104 = vmatprep.subr.mxu0 0.0
        %4105 = vmatpush1.msra.mxu0 0.0
        %4106 = vmatprep.subr.mxu0 0.0
        %4107 = vmatpush1.msra.mxu0 0.0
        %4108 = vmatprep.subr.mxu0 0.0
        %4109 = vmatpush1.msra.mxu0 0.0
        %4110 = vmatprep.subr.mxu0 0.0
        %4111 = vmatpush1.msra.mxu0 0.0
        %4112 = vmatprep.mubr.f32.mxu0 0.0
        %v4113 = vand.u32 %v831, 4294901760
        %v4114 = vsub.f32 %v831, %v4113
        %4115 = vmatmul.mubr.f32.gmra.mrb[0].mxu0 %v4114
        %v4116 = vpop.f32.mrb[0].mxu0
        %v4117 = vadd.f32 %v4035, %v4116
        %v4118 = vpop.f32.mrb[0].mxu0
        %4119 = vmatprep.mubr.f32.mxu0 0.0
        %v4120 = vand.u32 %v834, 4294901760
        %v4121 = vsub.f32 %v834, %v4120
        %4122 = vmatmul.mubr.f32.gmra.mrb[0].mxu0 %v4121
        %v4123 = vpop.f32.mrb[0].mxu0
        %v4124 = vadd.f32 %v4041, %v4123
        %v4125 = vpop.f32.mrb[0].mxu0
        %4126 = vdwg.mxu0
        %4127 = vmatprep.subr.mxu0 0.0
        %v4128 = vand.u32 %v3861, 4294901760
        %4129 = vmatpush1.msra.mxu0 %v4128
        %4130 = vmatprep.subr.mxu0 0.0
        %v4131 = vand.u32 %v3867, 4294901760
        %4132 = vmatpush1.msra.mxu0 %v4131
        %4133 = vmatprep.subr.mxu0 0.0
        %4134 = vmatpush1.msra.mxu0 0.0
        %4135 = vmatprep.subr.mxu0 0.0
        %4136 = vmatpush1.msra.mxu0 0.0
        %4137 = vmatprep.subr.mxu0 0.0
        %4138 = vmatpush1.msra.mxu0 0.0
        %4139 = vmatprep.subr.mxu0 0.0
        %4140 = vmatpush1.msra.mxu0 0.0
        %4141 = vmatprep.subr.mxu0 0.0
        %4142 = vmatpush1.msra.mxu0 0.0
        %4143 = vmatprep.subr.mxu0 0.0
        %4144 = vmatpush1.msra.mxu0 0.0
        %4145 = vmatprep.subr.mxu0 0.0
        %4146 = vmatpush1.msra.mxu0 0.0
        %4147 = vmatprep.subr.mxu0 0.0
        %4148 = vmatpush1.msra.mxu0 0.0
        %4149 = vmatprep.subr.mxu0 0.0
        %4150 = vmatpush1.msra.mxu0 0.0
        %4151 = vmatprep.subr.mxu0 0.0
        %4152 = vmatpush1.msra.mxu0 0.0
        %4153 = vmatprep.subr.mxu0 0.0
        %4154 = vmatpush1.msra.mxu0 0.0
        %4155 = vmatprep.subr.mxu0 0.0
        %4156 = vmatpush1.msra.mxu0 0.0
        %4157 = vmatprep.subr.mxu0 0.0
        %4158 = vmatpush1.msra.mxu0 0.0
        %4159 = vmatprep.subr.mxu0 0.0
        %4160 = vmatpush1.msra.mxu0 0.0
        %4161 = vmatprep.subr.mxu0 0.0
        %4162 = vmatpush1.msra.mxu0 0.0
        %4163 = vmatprep.subr.mxu0 0.0
        %4164 = vmatpush1.msra.mxu0 0.0
        %4165 = vmatprep.subr.mxu0 0.0
        %4166 = vmatpush1.msra.mxu0 0.0
        %4167 = vmatprep.subr.mxu0 0.0
        %4168 = vmatpush1.msra.mxu0 0.0
        %4169 = vmatprep.subr.mxu0 0.0
        %4170 = vmatpush1.msra.mxu0 0.0
        %4171 = vmatprep.subr.mxu0 0.0
        %4172 = vmatpush1.msra.mxu0 0.0
        %4173 = vmatprep.subr.mxu0 0.0
        %4174 = vmatpush1.msra.mxu0 0.0
        %4175 = vmatprep.subr.mxu0 0.0
        %4176 = vmatpush1.msra.mxu0 0.0
        %4177 = vmatprep.subr.mxu0 0.0
        %4178 = vmatpush1.msra.mxu0 0.0
        %4179 = vmatprep.subr.mxu0 0.0
        %4180 = vmatpush1.msra.mxu0 0.0
        %4181 = vmatprep.subr.mxu0 0.0
        %4182 = vmatpush1.msra.mxu0 0.0
        %4183 = vmatprep.subr.mxu0 0.0
        %4184 = vmatpush1.msra.mxu0 0.0
        %4185 = vmatprep.subr.mxu0 0.0
        %4186 = vmatpush1.msra.mxu0 0.0
        %4187 = vmatprep.subr.mxu0 0.0
        %4188 = vmatpush1.msra.mxu0 0.0
        %4189 = vmatprep.subr.mxu0 0.0
        %4190 = vmatpush1.msra.mxu0 0.0
        %4191 = vmatprep.subr.mxu0 0.0
        %4192 = vmatpush1.msra.mxu0 0.0
        %4193 = vmatprep.mubr.f32.mxu0 0.0
        %v4194 = vand.u32 %v831, 4294901760
        %v4195 = vsub.f32 %v831, %v4194
        %v4196 = vand.u32 %v4195, 4294901760
        %4197 = vmatmul.mubr.f32.gmra.mrb[0].mxu0 %v4196
        %v4198 = vpop.f32.mrb[0].mxu0
        %v4199 = vadd.f32 %v4117, %v4198
        %v4200 = vpop.f32.mrb[0].mxu0
        %4201 = vmatprep.mubr.f32.mxu0 0.0
        %v4202 = vand.u32 %v834, 4294901760
        %v4203 = vsub.f32 %v834, %v4202
        %v4204 = vand.u32 %v4203, 4294901760
        %4205 = vmatmul.mubr.f32.gmra.mrb[0].mxu0 %v4204
        %v4206 = vpop.f32.mrb[0].mxu0
        %v4207 = vadd.f32 %v4124, %v4206
        %v4208 = vpop.f32.mrb[0].mxu0
        %4209 = vdwg.mxu0
        %4210 = vmatprep.subr.mxu0 0.0
        %v4211 = vand.u32 %v3861, 4294901760
        %v4212 = vsub.f32 %v3861, %v4211
        %v4213 = vand.u32 %v4212, 4294901760
        %4214 = vmatpush1.msra.mxu0 %v4213
        %4215 = vmatprep.subr.mxu0 0.0
        %v4216 = vand.u32 %v3867, 4294901760
        %v4217 = vsub.f32 %v3867, %v4216
        %v4218 = vand.u32 %v4217, 4294901760
        %4219 = vmatpush1.msra.mxu0 %v4218
        %4220 = vmatprep.subr.mxu0 0.0
        %4221 = vmatpush1.msra.mxu0 0.0
        %4222 = vmatprep.subr.mxu0 0.0
        %4223 = vmatpush1.msra.mxu0 0.0
        %4224 = vmatprep.subr.mxu0 0.0
        %4225 = vmatpush1.msra.mxu0 0.0
        %4226 = vmatprep.subr.mxu0 0.0
        %4227 = vmatpush1.msra.mxu0 0.0
        %4228 = vmatprep.subr.mxu0 0.0
        %4229 = vmatpush1.msra.mxu0 0.0
        %4230 = vmatprep.subr.mxu0 0.0
        %4231 = vmatpush1.msra.mxu0 0.0
        %4232 = vmatprep.subr.mxu0 0.0
        %4233 = vmatpush1.msra.mxu0 0.0
        %4234 = vmatprep.subr.mxu0 0.0
        %4235 = vmatpush1.msra.mxu0 0.0
        %4236 = vmatprep.subr.mxu0 0.0
        %4237 = vmatpush1.msra.mxu0 0.0
        %4238 = vmatprep.subr.mxu0 0.0
        %4239 = vmatpush1.msra.mxu0 0.0
        %4240 = vmatprep.subr.mxu0 0.0
        %4241 = vmatpush1.msra.mxu0 0.0
        %4242 = vmatprep.subr.mxu0 0.0
        %4243 = vmatpush1.msra.mxu0 0.0
        %4244 = vmatprep.subr.mxu0 0.0
        %4245 = vmatpush1.msra.mxu0 0.0
        %4246 = vmatprep.subr.mxu0 0.0
        %4247 = vmatpush1.msra.mxu0 0.0
        %4248 = vmatprep.subr.mxu0 0.0
        %4249 = vmatpush1.msra.mxu0 0.0
        %4250 = vmatprep.subr.mxu0 0.0
        %4251 = vmatpush1.msra.mxu0 0.0
        %4252 = vmatprep.subr.mxu0 0.0
        %4253 = vmatpush1.msra.mxu0 0.0
        %4254 = vmatprep.subr.mxu0 0.0
        %4255 = vmatpush1.msra.mxu0 0.0
        %4256 = vmatprep.subr.mxu0 0.0
        %4257 = vmatpush1.msra.mxu0 0.0
        %4258 = vmatprep.subr.mxu0 0.0
        %4259 = vmatpush1.msra.mxu0 0.0
        %4260 = vmatprep.subr.mxu0 0.0
        %4261 = vmatpush1.msra.mxu0 0.0
        %4262 = vmatprep.subr.mxu0 0.0
        %4263 = vmatpush1.msra.mxu0 0.0
        %4264 = vmatprep.subr.mxu0 0.0
        %4265 = vmatpush1.msra.mxu0 0.0
        %4266 = vmatprep.subr.mxu0 0.0
        %4267 = vmatpush1.msra.mxu0 0.0
        %4268 = vmatprep.subr.mxu0 0.0
        %4269 = vmatpush1.msra.mxu0 0.0
        %4270 = vmatprep.subr.mxu0 0.0
        %4271 = vmatpush1.msra.mxu0 0.0
        %4272 = vmatprep.subr.mxu0 0.0
        %4273 = vmatpush1.msra.mxu0 0.0
        %4274 = vmatprep.subr.mxu0 0.0
        %4275 = vmatpush1.msra.mxu0 0.0
        %4276 = vmatprep.subr.mxu0 0.0
        %4277 = vmatpush1.msra.mxu0 0.0
        %4278 = vmatprep.subr.mxu0 0.0
        %4279 = vmatpush1.msra.mxu0 0.0
        %4280 = vmatprep.mubr.f32.mxu0 0.0
        %v4281 = vand.u32 %v831, 4294901760
        %4282 = vmatmul.mubr.f32.gmra.mrb[0].mxu0 %v4281
        %v4283 = vpop.f32.mrb[0].mxu0
        %v4284 = vadd.f32 %v4199, %v4283
        %v4285 = vpop.f32.mrb[0].mxu0
        %4286 = vmatprep.mubr.f32.mxu0 0.0
        %v4287 = vand.u32 %v834, 4294901760
        %4288 = vmatmul.mubr.f32.gmra.mrb[0].mxu0 %v4287
        %v4289 = vpop.f32.mrb[0].mxu0
        %v4290 = vadd.f32 %v4207, %v4289
        %v4291 = vpop.f32.mrb[0].mxu0
        %4292 = vdwg.mxu0
        %4293 = vmatprep.subr.mxu0 0.0
        %v4294 = vand.u32 %v3861, 4294901760
        %4295 = vmatpush1.msra.mxu0 %v4294
        %4296 = vmatprep.subr.mxu0 0.0
        %v4297 = vand.u32 %v3867, 4294901760
        %4298 = vmatpush1.msra.mxu0 %v4297
        %4299 = vmatprep.subr.mxu0 0.0
        %4300 = vmatpush1.msra.mxu0 0.0
        %4301 = vmatprep.subr.mxu0 0.0
        %4302 = vmatpush1.msra.mxu0 0.0
        %4303 = vmatprep.subr.mxu0 0.0
        %4304 = vmatpush1.msra.mxu0 0.0
        %4305 = vmatprep.subr.mxu0 0.0
        %4306 = vmatpush1.msra.mxu0 0.0
        %4307 = vmatprep.subr.mxu0 0.0
        %4308 = vmatpush1.msra.mxu0 0.0
        %4309 = vmatprep.subr.mxu0 0.0
        %4310 = vmatpush1.msra.mxu0 0.0
        %4311 = vmatprep.subr.mxu0 0.0
        %4312 = vmatpush1.msra.mxu0 0.0
        %4313 = vmatprep.subr.mxu0 0.0
        %4314 = vmatpush1.msra.mxu0 0.0
        %4315 = vmatprep.subr.mxu0 0.0
        %4316 = vmatpush1.msra.mxu0 0.0
        %4317 = vmatprep.subr.mxu0 0.0
        %4318 = vmatpush1.msra.mxu0 0.0
        %4319 = vmatprep.subr.mxu0 0.0
        %4320 = vmatpush1.msra.mxu0 0.0
        %4321 = vmatprep.subr.mxu0 0.0
        %4322 = vmatpush1.msra.mxu0 0.0
        %4323 = vmatprep.subr.mxu0 0.0
        %4324 = vmatpush1.msra.mxu0 0.0
        %4325 = vmatprep.subr.mxu0 0.0
        %4326 = vmatpush1.msra.mxu0 0.0
        %4327 = vmatprep.subr.mxu0 0.0
        %4328 = vmatpush1.msra.mxu0 0.0
        %4329 = vmatprep.subr.mxu0 0.0
        %4330 = vmatpush1.msra.mxu0 0.0
        %4331 = vmatprep.subr.mxu0 0.0
        %4332 = vmatpush1.msra.mxu0 0.0
        %4333 = vmatprep.subr.mxu0 0.0
        %4334 = vmatpush1.msra.mxu0 0.0
        %4335 = vmatprep.subr.mxu0 0.0
        %4336 = vmatpush1.msra.mxu0 0.0
        %4337 = vmatprep.subr.mxu0 0.0
        %4338 = vmatpush1.msra.mxu0 0.0
        %4339 = vmatprep.subr.mxu0 0.0
        %4340 = vmatpush1.msra.mxu0 0.0
        %4341 = vmatprep.subr.mxu0 0.0
        %4342 = vmatpush1.msra.mxu0 0.0
        %4343 = vmatprep.subr.mxu0 0.0
        %4344 = vmatpush1.msra.mxu0 0.0
        %4345 = vmatprep.subr.mxu0 0.0
        %4346 = vmatpush1.msra.mxu0 0.0
        %4347 = vmatprep.subr.mxu0 0.0
        %4348 = vmatpush1.msra.mxu0 0.0
        %4349 = vmatprep.subr.mxu0 0.0
        %4350 = vmatpush1.msra.mxu0 0.0
        %4351 = vmatprep.subr.mxu0 0.0
        %4352 = vmatpush1.msra.mxu0 0.0
        %4353 = vmatprep.subr.mxu0 0.0
        %4354 = vmatpush1.msra.mxu0 0.0
        %4355 = vmatprep.subr.mxu0 0.0
        %4356 = vmatpush1.msra.mxu0 0.0
        %4357 = vmatprep.subr.mxu0 0.0
        %4358 = vmatpush1.msra.mxu0 0.0
        %4359 = vmatprep.mubr.f32.mxu0 0.0
        %v4360 = vand.u32 %v831, 4294901760
        %4361 = vmatmul.mubr.f32.gmra.mrb[0].mxu0 %v4360
        %v4362 = vpop.f32.mrb[0].mxu0
        %v4363 = vadd.f32 %v4284, %v4362
        %v4364 = vpop.f32.mrb[0].mxu0
        %4365 = vmatprep.mubr.f32.mxu0 0.0
        %v4366 = vand.u32 %v834, 4294901760
        %4367 = vmatmul.mubr.f32.gmra.mrb[0].mxu0 %v4366
        %v4368 = vpop.f32.mrb[0].mxu0
        %v4369 = vadd.f32 %v4290, %v4368
        %v4370 = vpop.f32.mrb[0].mxu0
        %4371 = vdwg.mxu0
        %v4372 = vmul.f32 %v313, %v315
        %v4373 = vmul.f32 %v314, %v316
        %v4375 = vsel %vm321, %v4372, 0
        %v4378 = vsel %vm321, %v4373, 0
        %4380 = vmatprep.subr.mxu0 0.0
        %v4381 = vand.u32 %v317, 4294901760
        %4382 = vmatpush1.msra.mxu0 %v4381
        %4383 = vmatprep.subr.mxu0 0.0
        %v4384 = vand.u32 %v318, 4294901760
        %4385 = vmatpush1.msra.mxu0 %v4384
        %4386 = vmatprep.subr.mxu0 0.0
        %4387 = vmatpush1.msra.mxu0 0.0
        %4388 = vmatprep.subr.mxu0 0.0
        %4389 = vmatpush1.msra.mxu0 0.0
        %4390 = vmatprep.subr.mxu0 0.0
        %4391 = vmatpush1.msra.mxu0 0.0
        %4392 = vmatprep.subr.mxu0 0.0
        %4393 = vmatpush1.msra.mxu0 0.0
        %4394 = vmatprep.subr.mxu0 0.0
        %4395 = vmatpush1.msra.mxu0 0.0
        %4396 = vmatprep.subr.mxu0 0.0
        %4397 = vmatpush1.msra.mxu0 0.0
        %4398 = vmatprep.subr.mxu0 0.0
        %4399 = vmatpush1.msra.mxu0 0.0
        %4400 = vmatprep.subr.mxu0 0.0
        %4401 = vmatpush1.msra.mxu0 0.0
        %4402 = vmatprep.subr.mxu0 0.0
        %4403 = vmatpush1.msra.mxu0 0.0
        %4404 = vmatprep.subr.mxu0 0.0
        %4405 = vmatpush1.msra.mxu0 0.0
        %4406 = vmatprep.subr.mxu0 0.0
        %4407 = vmatpush1.msra.mxu0 0.0
        %4408 = vmatprep.subr.mxu0 0.0
        %4409 = vmatpush1.msra.mxu0 0.0
        %4410 = vmatprep.subr.mxu0 0.0
        %4411 = vmatpush1.msra.mxu0 0.0
        %4412 = vmatprep.subr.mxu0 0.0
        %4413 = vmatpush1.msra.mxu0 0.0
        %4414 = vmatprep.subr.mxu0 0.0
        %4415 = vmatpush1.msra.mxu0 0.0
        %4416 = vmatprep.subr.mxu0 0.0
        %4417 = vmatpush1.msra.mxu0 0.0
        %4418 = vmatprep.subr.mxu0 0.0
        %4419 = vmatpush1.msra.mxu0 0.0
        %4420 = vmatprep.subr.mxu0 0.0
        %4421 = vmatpush1.msra.mxu0 0.0
        %4422 = vmatprep.subr.mxu0 0.0
        %4423 = vmatpush1.msra.mxu0 0.0
        %4424 = vmatprep.subr.mxu0 0.0
        %4425 = vmatpush1.msra.mxu0 0.0
        %4426 = vmatprep.subr.mxu0 0.0
        %4427 = vmatpush1.msra.mxu0 0.0
        %4428 = vmatprep.subr.mxu0 0.0
        %4429 = vmatpush1.msra.mxu0 0.0
        %4430 = vmatprep.subr.mxu0 0.0
        %4431 = vmatpush1.msra.mxu0 0.0
        %4432 = vmatprep.subr.mxu0 0.0
        %4433 = vmatpush1.msra.mxu0 0.0
        %4434 = vmatprep.subr.mxu0 0.0
        %4435 = vmatpush1.msra.mxu0 0.0
        %4436 = vmatprep.subr.mxu0 0.0
        %4437 = vmatpush1.msra.mxu0 0.0
        %4438 = vmatprep.subr.mxu0 0.0
        %4439 = vmatpush1.msra.mxu0 0.0
        %4440 = vmatprep.subr.mxu0 0.0
        %4441 = vmatpush1.msra.mxu0 0.0
        %4442 = vmatprep.subr.mxu0 0.0
        %4443 = vmatpush1.msra.mxu0 0.0
        %4444 = vmatprep.subr.mxu0 0.0
        %4445 = vmatpush1.msra.mxu0 0.0
        %4446 = vmatprep.mubr.f32.mxu0 0.0
        %v4447 = vand.u32 %v4375, 4294901760
        %v4448 = vsub.f32 %v4375, %v4447
        %v4449 = vand.u32 %v4448, 4294901760
        %v4450 = vsub.f32 %v4448, %v4449
        %v4451 = vand.u32 %v4450, 4294901760
        %4452 = vmatmul.mubr.f32.gmra.mrb[0].mxu0 %v4451
        %v4453 = vpop.f32.mrb[0].mxu0
        %v4454 = vadd.f32 0.0, %v4453
        %v4455 = vpop.f32.mrb[0].mxu0
        %4456 = vmatprep.mubr.f32.mxu0 0.0
        %v4457 = vand.u32 %v4378, 4294901760
        %v4458 = vsub.f32 %v4378, %v4457
        %v4459 = vand.u32 %v4458, 4294901760
        %v4460 = vsub.f32 %v4458, %v4459
        %v4461 = vand.u32 %v4460, 4294901760
        %4462 = vmatmul.mubr.f32.gmra.mrb[0].mxu0 %v4461
        %v4463 = vpop.f32.mrb[0].mxu0
        %v4464 = vadd.f32 0.0, %v4463
        %v4465 = vpop.f32.mrb[0].mxu0
        %4466 = vdwg.mxu0
        %4467 = vmatprep.subr.mxu0 0.0
        %v4468 = vand.u32 %v317, 4294901760
        %v4469 = vsub.f32 %v317, %v4468
        %v4470 = vand.u32 %v4469, 4294901760
        %v4471 = vsub.f32 %v4469, %v4470
        %v4472 = vand.u32 %v4471, 4294901760
        %4473 = vmatpush1.msra.mxu0 %v4472
        %4474 = vmatprep.subr.mxu0 0.0
        %v4475 = vand.u32 %v318, 4294901760
        %v4476 = vsub.f32 %v318, %v4475
        %v4477 = vand.u32 %v4476, 4294901760
        %v4478 = vsub.f32 %v4476, %v4477
        %v4479 = vand.u32 %v4478, 4294901760
        %4480 = vmatpush1.msra.mxu0 %v4479
        %4481 = vmatprep.subr.mxu0 0.0
        %4482 = vmatpush1.msra.mxu0 0.0
        %4483 = vmatprep.subr.mxu0 0.0
        %4484 = vmatpush1.msra.mxu0 0.0
        %4485 = vmatprep.subr.mxu0 0.0
        %4486 = vmatpush1.msra.mxu0 0.0
        %4487 = vmatprep.subr.mxu0 0.0
        %4488 = vmatpush1.msra.mxu0 0.0
        %4489 = vmatprep.subr.mxu0 0.0
        %4490 = vmatpush1.msra.mxu0 0.0
        %4491 = vmatprep.subr.mxu0 0.0
        %4492 = vmatpush1.msra.mxu0 0.0
        %4493 = vmatprep.subr.mxu0 0.0
        %4494 = vmatpush1.msra.mxu0 0.0
        %4495 = vmatprep.subr.mxu0 0.0
        %4496 = vmatpush1.msra.mxu0 0.0
        %4497 = vmatprep.subr.mxu0 0.0
        %4498 = vmatpush1.msra.mxu0 0.0
        %4499 = vmatprep.subr.mxu0 0.0
        %4500 = vmatpush1.msra.mxu0 0.0
        %4501 = vmatprep.subr.mxu0 0.0
        %4502 = vmatpush1.msra.mxu0 0.0
        %4503 = vmatprep.subr.mxu0 0.0
        %4504 = vmatpush1.msra.mxu0 0.0
        %4505 = vmatprep.subr.mxu0 0.0
        %4506 = vmatpush1.msra.mxu0 0.0
        %4507 = vmatprep.subr.mxu0 0.0
        %4508 = vmatpush1.msra.mxu0 0.0
        %4509 = vmatprep.subr.mxu0 0.0
        %4510 = vmatpush1.msra.mxu0 0.0
        %4511 = vmatprep.subr.mxu0 0.0
        %4512 = vmatpush1.msra.mxu0 0.0
        %4513 = vmatprep.subr.mxu0 0.0
        %4514 = vmatpush1.msra.mxu0 0.0
        %4515 = vmatprep.subr.mxu0 0.0
        %4516 = vmatpush1.msra.mxu0 0.0
        %4517 = vmatprep.subr.mxu0 0.0
        %4518 = vmatpush1.msra.mxu0 0.0
        %4519 = vmatprep.subr.mxu0 0.0
        %4520 = vmatpush1.msra.mxu0 0.0
        %4521 = vmatprep.subr.mxu0 0.0
        %4522 = vmatpush1.msra.mxu0 0.0
        %4523 = vmatprep.subr.mxu0 0.0
        %4524 = vmatpush1.msra.mxu0 0.0
        %4525 = vmatprep.subr.mxu0 0.0
        %4526 = vmatpush1.msra.mxu0 0.0
        %4527 = vmatprep.subr.mxu0 0.0
        %4528 = vmatpush1.msra.mxu0 0.0
        %4529 = vmatprep.subr.mxu0 0.0
        %4530 = vmatpush1.msra.mxu0 0.0
        %4531 = vmatprep.subr.mxu0 0.0
        %4532 = vmatpush1.msra.mxu0 0.0
        %4533 = vmatprep.subr.mxu0 0.0
        %4534 = vmatpush1.msra.mxu0 0.0
        %4535 = vmatprep.subr.mxu0 0.0
        %4536 = vmatpush1.msra.mxu0 0.0
        %4537 = vmatprep.subr.mxu0 0.0
        %4538 = vmatpush1.msra.mxu0 0.0
        %4539 = vmatprep.subr.mxu0 0.0
        %4540 = vmatpush1.msra.mxu0 0.0
        %4541 = vmatprep.mubr.f32.mxu0 0.0
        %v4542 = vand.u32 %v4375, 4294901760
        %4543 = vmatmul.mubr.f32.gmra.mrb[0].mxu0 %v4542
        %v4544 = vpop.f32.mrb[0].mxu0
        %v4545 = vadd.f32 %v4454, %v4544
        %v4546 = vpop.f32.mrb[0].mxu0
        %4547 = vmatprep.mubr.f32.mxu0 0.0
        %v4548 = vand.u32 %v4378, 4294901760
        %4549 = vmatmul.mubr.f32.gmra.mrb[0].mxu0 %v4548
        %v4550 = vpop.f32.mrb[0].mxu0
        %v4551 = vadd.f32 %v4464, %v4550
        %v4552 = vpop.f32.mrb[0].mxu0
        %4553 = vdwg.mxu0
        %4554 = vmatprep.subr.mxu0 0.0
        %v4555 = vand.u32 %v317, 4294901760
        %v4556 = vsub.f32 %v317, %v4555
        %4557 = vmatpush1.msra.mxu0 %v4556
        %4558 = vmatprep.subr.mxu0 0.0
        %v4559 = vand.u32 %v318, 4294901760
        %v4560 = vsub.f32 %v318, %v4559
        %4561 = vmatpush1.msra.mxu0 %v4560
        %4562 = vmatprep.subr.mxu0 0.0
        %4563 = vmatpush1.msra.mxu0 0.0
        %4564 = vmatprep.subr.mxu0 0.0
        %4565 = vmatpush1.msra.mxu0 0.0
        %4566 = vmatprep.subr.mxu0 0.0
        %4567 = vmatpush1.msra.mxu0 0.0
        %4568 = vmatprep.subr.mxu0 0.0
        %4569 = vmatpush1.msra.mxu0 0.0
        %4570 = vmatprep.subr.mxu0 0.0
        %4571 = vmatpush1.msra.mxu0 0.0
        %4572 = vmatprep.subr.mxu0 0.0
        %4573 = vmatpush1.msra.mxu0 0.0
        %4574 = vmatprep.subr.mxu0 0.0
        %4575 = vmatpush1.msra.mxu0 0.0
        %4576 = vmatprep.subr.mxu0 0.0
        %4577 = vmatpush1.msra.mxu0 0.0
        %4578 = vmatprep.subr.mxu0 0.0
        %4579 = vmatpush1.msra.mxu0 0.0
        %4580 = vmatprep.subr.mxu0 0.0
        %4581 = vmatpush1.msra.mxu0 0.0
        %4582 = vmatprep.subr.mxu0 0.0
        %4583 = vmatpush1.msra.mxu0 0.0
        %4584 = vmatprep.subr.mxu0 0.0
        %4585 = vmatpush1.msra.mxu0 0.0
        %4586 = vmatprep.subr.mxu0 0.0
        %4587 = vmatpush1.msra.mxu0 0.0
        %4588 = vmatprep.subr.mxu0 0.0
        %4589 = vmatpush1.msra.mxu0 0.0
        %4590 = vmatprep.subr.mxu0 0.0
        %4591 = vmatpush1.msra.mxu0 0.0
        %4592 = vmatprep.subr.mxu0 0.0
        %4593 = vmatpush1.msra.mxu0 0.0
        %4594 = vmatprep.subr.mxu0 0.0
        %4595 = vmatpush1.msra.mxu0 0.0
        %4596 = vmatprep.subr.mxu0 0.0
        %4597 = vmatpush1.msra.mxu0 0.0
        %4598 = vmatprep.subr.mxu0 0.0
        %4599 = vmatpush1.msra.mxu0 0.0
        %4600 = vmatprep.subr.mxu0 0.0
        %4601 = vmatpush1.msra.mxu0 0.0
        %4602 = vmatprep.subr.mxu0 0.0
        %4603 = vmatpush1.msra.mxu0 0.0
        %4604 = vmatprep.subr.mxu0 0.0
        %4605 = vmatpush1.msra.mxu0 0.0
        %4606 = vmatprep.subr.mxu0 0.0
        %4607 = vmatpush1.msra.mxu0 0.0
        %4608 = vmatprep.subr.mxu0 0.0
        %4609 = vmatpush1.msra.mxu0 0.0
        %4610 = vmatprep.subr.mxu0 0.0
        %4611 = vmatpush1.msra.mxu0 0.0
        %4612 = vmatprep.subr.mxu0 0.0
        %4613 = vmatpush1.msra.mxu0 0.0
        %4614 = vmatprep.subr.mxu0 0.0
        %4615 = vmatpush1.msra.mxu0 0.0
        %4616 = vmatprep.subr.mxu0 0.0
        %4617 = vmatpush1.msra.mxu0 0.0
        %4618 = vmatprep.subr.mxu0 0.0
        %4619 = vmatpush1.msra.mxu0 0.0
        %4620 = vmatprep.subr.mxu0 0.0
        %4621 = vmatpush1.msra.mxu0 0.0
        %4622 = vmatprep.mubr.f32.mxu0 0.0
        %v4623 = vand.u32 %v4375, 4294901760
        %v4624 = vsub.f32 %v4375, %v4623
        %4625 = vmatmul.mubr.f32.gmra.mrb[0].mxu0 %v4624
        %v4626 = vpop.f32.mrb[0].mxu0
        %v4627 = vadd.f32 %v4545, %v4626
        %v4628 = vpop.f32.mrb[0].mxu0
        %4629 = vmatprep.mubr.f32.mxu0 0.0
        %v4630 = vand.u32 %v4378, 4294901760
        %v4631 = vsub.f32 %v4378, %v4630
        %4632 = vmatmul.mubr.f32.gmra.mrb[0].mxu0 %v4631
        %v4633 = vpop.f32.mrb[0].mxu0
        %v4634 = vadd.f32 %v4551, %v4633
        %v4635 = vpop.f32.mrb[0].mxu0
        %4636 = vdwg.mxu0
        %4637 = vmatprep.subr.mxu0 0.0
        %v4638 = vand.u32 %v317, 4294901760
        %4639 = vmatpush1.msra.mxu0 %v4638
        %4640 = vmatprep.subr.mxu0 0.0
        %v4641 = vand.u32 %v318, 4294901760
        %4642 = vmatpush1.msra.mxu0 %v4641
        %4643 = vmatprep.subr.mxu0 0.0
        %4644 = vmatpush1.msra.mxu0 0.0
        %4645 = vmatprep.subr.mxu0 0.0
        %4646 = vmatpush1.msra.mxu0 0.0
        %4647 = vmatprep.subr.mxu0 0.0
        %4648 = vmatpush1.msra.mxu0 0.0
        %4649 = vmatprep.subr.mxu0 0.0
        %4650 = vmatpush1.msra.mxu0 0.0
        %4651 = vmatprep.subr.mxu0 0.0
        %4652 = vmatpush1.msra.mxu0 0.0
        %4653 = vmatprep.subr.mxu0 0.0
        %4654 = vmatpush1.msra.mxu0 0.0
        %4655 = vmatprep.subr.mxu0 0.0
        %4656 = vmatpush1.msra.mxu0 0.0
        %4657 = vmatprep.subr.mxu0 0.0
        %4658 = vmatpush1.msra.mxu0 0.0
        %4659 = vmatprep.subr.mxu0 0.0
        %4660 = vmatpush1.msra.mxu0 0.0
        %4661 = vmatprep.subr.mxu0 0.0
        %4662 = vmatpush1.msra.mxu0 0.0
        %4663 = vmatprep.subr.mxu0 0.0
        %4664 = vmatpush1.msra.mxu0 0.0
        %4665 = vmatprep.subr.mxu0 0.0
        %4666 = vmatpush1.msra.mxu0 0.0
        %4667 = vmatprep.subr.mxu0 0.0
        %4668 = vmatpush1.msra.mxu0 0.0
        %4669 = vmatprep.subr.mxu0 0.0
        %4670 = vmatpush1.msra.mxu0 0.0
        %4671 = vmatprep.subr.mxu0 0.0
        %4672 = vmatpush1.msra.mxu0 0.0
        %4673 = vmatprep.subr.mxu0 0.0
        %4674 = vmatpush1.msra.mxu0 0.0
        %4675 = vmatprep.subr.mxu0 0.0
        %4676 = vmatpush1.msra.mxu0 0.0
        %4677 = vmatprep.subr.mxu0 0.0
        %4678 = vmatpush1.msra.mxu0 0.0
        %4679 = vmatprep.subr.mxu0 0.0
        %4680 = vmatpush1.msra.mxu0 0.0
        %4681 = vmatprep.subr.mxu0 0.0
        %4682 = vmatpush1.msra.mxu0 0.0
        %4683 = vmatprep.subr.mxu0 0.0
        %4684 = vmatpush1.msra.mxu0 0.0
        %4685 = vmatprep.subr.mxu0 0.0
        %4686 = vmatpush1.msra.mxu0 0.0
        %4687 = vmatprep.subr.mxu0 0.0
        %4688 = vmatpush1.msra.mxu0 0.0
        %4689 = vmatprep.subr.mxu0 0.0
        %4690 = vmatpush1.msra.mxu0 0.0
        %4691 = vmatprep.subr.mxu0 0.0
        %4692 = vmatpush1.msra.mxu0 0.0
        %4693 = vmatprep.subr.mxu0 0.0
        %4694 = vmatpush1.msra.mxu0 0.0
        %4695 = vmatprep.subr.mxu0 0.0
        %4696 = vmatpush1.msra.mxu0 0.0
        %4697 = vmatprep.subr.mxu0 0.0
        %4698 = vmatpush1.msra.mxu0 0.0
        %4699 = vmatprep.subr.mxu0 0.0
        %4700 = vmatpush1.msra.mxu0 0.0
        %4701 = vmatprep.subr.mxu0 0.0
        %4702 = vmatpush1.msra.mxu0 0.0
        %4703 = vmatprep.mubr.f32.mxu0 0.0
        %v4704 = vand.u32 %v4375, 4294901760
        %v4705 = vsub.f32 %v4375, %v4704
        %v4706 = vand.u32 %v4705, 4294901760
        %4707 = vmatmul.mubr.f32.gmra.mrb[0].mxu0 %v4706
        %v4708 = vpop.f32.mrb[0].mxu0
        %v4709 = vadd.f32 %v4627, %v4708
        %v4710 = vpop.f32.mrb[0].mxu0
        %4711 = vmatprep.mubr.f32.mxu0 0.0
        %v4712 = vand.u32 %v4378, 4294901760
        %v4713 = vsub.f32 %v4378, %v4712
        %v4714 = vand.u32 %v4713, 4294901760
        %4715 = vmatmul.mubr.f32.gmra.mrb[0].mxu0 %v4714
        %v4716 = vpop.f32.mrb[0].mxu0
        %v4717 = vadd.f32 %v4634, %v4716
        %v4718 = vpop.f32.mrb[0].mxu0
        %4719 = vdwg.mxu0
        %4720 = vmatprep.subr.mxu0 0.0
        %v4721 = vand.u32 %v317, 4294901760
        %v4722 = vsub.f32 %v317, %v4721
        %v4723 = vand.u32 %v4722, 4294901760
        %4724 = vmatpush1.msra.mxu0 %v4723
        %4725 = vmatprep.subr.mxu0 0.0
        %v4726 = vand.u32 %v318, 4294901760
        %v4727 = vsub.f32 %v318, %v4726
        %v4728 = vand.u32 %v4727, 4294901760
        %4729 = vmatpush1.msra.mxu0 %v4728
        %4730 = vmatprep.subr.mxu0 0.0
        %4731 = vmatpush1.msra.mxu0 0.0
        %4732 = vmatprep.subr.mxu0 0.0
        %4733 = vmatpush1.msra.mxu0 0.0
        %4734 = vmatprep.subr.mxu0 0.0
        %4735 = vmatpush1.msra.mxu0 0.0
        %4736 = vmatprep.subr.mxu0 0.0
        %4737 = vmatpush1.msra.mxu0 0.0
        %4738 = vmatprep.subr.mxu0 0.0
        %4739 = vmatpush1.msra.mxu0 0.0
        %4740 = vmatprep.subr.mxu0 0.0
        %4741 = vmatpush1.msra.mxu0 0.0
        %4742 = vmatprep.subr.mxu0 0.0
        %4743 = vmatpush1.msra.mxu0 0.0
        %4744 = vmatprep.subr.mxu0 0.0
        %4745 = vmatpush1.msra.mxu0 0.0
        %4746 = vmatprep.subr.mxu0 0.0
        %4747 = vmatpush1.msra.mxu0 0.0
        %4748 = vmatprep.subr.mxu0 0.0
        %4749 = vmatpush1.msra.mxu0 0.0
        %4750 = vmatprep.subr.mxu0 0.0
        %4751 = vmatpush1.msra.mxu0 0.0
        %4752 = vmatprep.subr.mxu0 0.0
        %4753 = vmatpush1.msra.mxu0 0.0
        %4754 = vmatprep.subr.mxu0 0.0
        %4755 = vmatpush1.msra.mxu0 0.0
        %4756 = vmatprep.subr.mxu0 0.0
        %4757 = vmatpush1.msra.mxu0 0.0
        %4758 = vmatprep.subr.mxu0 0.0
        %4759 = vmatpush1.msra.mxu0 0.0
        %4760 = vmatprep.subr.mxu0 0.0
        %4761 = vmatpush1.msra.mxu0 0.0
        %4762 = vmatprep.subr.mxu0 0.0
        %4763 = vmatpush1.msra.mxu0 0.0
        %4764 = vmatprep.subr.mxu0 0.0
        %4765 = vmatpush1.msra.mxu0 0.0
        %4766 = vmatprep.subr.mxu0 0.0
        %4767 = vmatpush1.msra.mxu0 0.0
        %4768 = vmatprep.subr.mxu0 0.0
        %4769 = vmatpush1.msra.mxu0 0.0
        %4770 = vmatprep.subr.mxu0 0.0
        %4771 = vmatpush1.msra.mxu0 0.0
        %4772 = vmatprep.subr.mxu0 0.0
        %4773 = vmatpush1.msra.mxu0 0.0
        %4774 = vmatprep.subr.mxu0 0.0
        %4775 = vmatpush1.msra.mxu0 0.0
        %4776 = vmatprep.subr.mxu0 0.0
        %4777 = vmatpush1.msra.mxu0 0.0
        %4778 = vmatprep.subr.mxu0 0.0
        %4779 = vmatpush1.msra.mxu0 0.0
        %4780 = vmatprep.subr.mxu0 0.0
        %4781 = vmatpush1.msra.mxu0 0.0
        %4782 = vmatprep.subr.mxu0 0.0
        %4783 = vmatpush1.msra.mxu0 0.0
        %4784 = vmatprep.subr.mxu0 0.0
        %4785 = vmatpush1.msra.mxu0 0.0
        %4786 = vmatprep.subr.mxu0 0.0
        %4787 = vmatpush1.msra.mxu0 0.0
        %4788 = vmatprep.subr.mxu0 0.0
        %4789 = vmatpush1.msra.mxu0 0.0
        %4790 = vmatprep.mubr.f32.mxu0 0.0
        %v4791 = vand.u32 %v4375, 4294901760
        %4792 = vmatmul.mubr.f32.gmra.mrb[0].mxu0 %v4791
        %v4793 = vpop.f32.mrb[0].mxu0
        %v4794 = vadd.f32 %v4709, %v4793
        %v4795 = vpop.f32.mrb[0].mxu0
        %4796 = vmatprep.mubr.f32.mxu0 0.0
        %v4797 = vand.u32 %v4378, 4294901760
        %4798 = vmatmul.mubr.f32.gmra.mrb[0].mxu0 %v4797
        %v4799 = vpop.f32.mrb[0].mxu0
        %v4800 = vadd.f32 %v4717, %v4799
        %v4801 = vpop.f32.mrb[0].mxu0
        %4802 = vdwg.mxu0
        %4803 = vmatprep.subr.mxu0 0.0
        %v4804 = vand.u32 %v317, 4294901760
        %4805 = vmatpush1.msra.mxu0 %v4804
        %4806 = vmatprep.subr.mxu0 0.0
        %v4807 = vand.u32 %v318, 4294901760
        %4808 = vmatpush1.msra.mxu0 %v4807
        %4809 = vmatprep.subr.mxu0 0.0
        %4810 = vmatpush1.msra.mxu0 0.0
        %4811 = vmatprep.subr.mxu0 0.0
        %4812 = vmatpush1.msra.mxu0 0.0
        %4813 = vmatprep.subr.mxu0 0.0
        %4814 = vmatpush1.msra.mxu0 0.0
        %4815 = vmatprep.subr.mxu0 0.0
        %4816 = vmatpush1.msra.mxu0 0.0
        %4817 = vmatprep.subr.mxu0 0.0
        %4818 = vmatpush1.msra.mxu0 0.0
        %4819 = vmatprep.subr.mxu0 0.0
        %4820 = vmatpush1.msra.mxu0 0.0
        %4821 = vmatprep.subr.mxu0 0.0
        %4822 = vmatpush1.msra.mxu0 0.0
        %4823 = vmatprep.subr.mxu0 0.0
        %4824 = vmatpush1.msra.mxu0 0.0
        %4825 = vmatprep.subr.mxu0 0.0
        %4826 = vmatpush1.msra.mxu0 0.0
        %4827 = vmatprep.subr.mxu0 0.0
        %4828 = vmatpush1.msra.mxu0 0.0
        %4829 = vmatprep.subr.mxu0 0.0
        %4830 = vmatpush1.msra.mxu0 0.0
        %4831 = vmatprep.subr.mxu0 0.0
        %4832 = vmatpush1.msra.mxu0 0.0
        %4833 = vmatprep.subr.mxu0 0.0
        %4834 = vmatpush1.msra.mxu0 0.0
        %4835 = vmatprep.subr.mxu0 0.0
        %4836 = vmatpush1.msra.mxu0 0.0
        %4837 = vmatprep.subr.mxu0 0.0
        %4838 = vmatpush1.msra.mxu0 0.0
        %4839 = vmatprep.subr.mxu0 0.0
        %4840 = vmatpush1.msra.mxu0 0.0
        %4841 = vmatprep.subr.mxu0 0.0
        %4842 = vmatpush1.msra.mxu0 0.0
        %4843 = vmatprep.subr.mxu0 0.0
        %4844 = vmatpush1.msra.mxu0 0.0
        %4845 = vmatprep.subr.mxu0 0.0
        %4846 = vmatpush1.msra.mxu0 0.0
        %4847 = vmatprep.subr.mxu0 0.0
        %4848 = vmatpush1.msra.mxu0 0.0
        %4849 = vmatprep.subr.mxu0 0.0
        %4850 = vmatpush1.msra.mxu0 0.0
        %4851 = vmatprep.subr.mxu0 0.0
        %4852 = vmatpush1.msra.mxu0 0.0
        %4853 = vmatprep.subr.mxu0 0.0
        %4854 = vmatpush1.msra.mxu0 0.0
        %4855 = vmatprep.subr.mxu0 0.0
        %4856 = vmatpush1.msra.mxu0 0.0
        %4857 = vmatprep.subr.mxu0 0.0
        %4858 = vmatpush1.msra.mxu0 0.0
        %4859 = vmatprep.subr.mxu0 0.0
        %4860 = vmatpush1.msra.mxu0 0.0
        %4861 = vmatprep.subr.mxu0 0.0
        %4862 = vmatpush1.msra.mxu0 0.0
        %4863 = vmatprep.subr.mxu0 0.0
        %4864 = vmatpush1.msra.mxu0 0.0
        %4865 = vmatprep.subr.mxu0 0.0
        %4866 = vmatpush1.msra.mxu0 0.0
        %4867 = vmatprep.subr.mxu0 0.0
        %4868 = vmatpush1.msra.mxu0 0.0
        %4869 = vmatprep.mubr.f32.mxu0 0.0
        %v4870 = vand.u32 %v4375, 4294901760
        %4871 = vmatmul.mubr.f32.gmra.mrb[0].mxu0 %v4870
        %v4872 = vpop.f32.mrb[0].mxu0
        %v4873 = vadd.f32 %v4794, %v4872
        %v4874 = vpop.f32.mrb[0].mxu0
        %4875 = vmatprep.mubr.f32.mxu0 0.0
        %v4876 = vand.u32 %v4378, 4294901760
        %4877 = vmatmul.mubr.f32.gmra.mrb[0].mxu0 %v4876
        %v4878 = vpop.f32.mrb[0].mxu0
        %v4879 = vadd.f32 %v4800, %v4878
        %v4880 = vpop.f32.mrb[0].mxu0
        %4881 = vdwg.mxu0
        %4882 = vmatprep.subr.mxu0 0.0
        %v4883 = vand.u32 %v4873, 4294901760
        %4884 = vmatpush1.msra.mxu0 %v4883
        %4885 = vmatprep.subr.mxu0 0.0
        %v4886 = vand.u32 %v4879, 4294901760
        %4887 = vmatpush1.msra.mxu0 %v4886
        %4888 = vmatprep.subr.mxu0 0.0
        %4889 = vmatpush1.msra.mxu0 0.0
        %4890 = vmatprep.subr.mxu0 0.0
        %4891 = vmatpush1.msra.mxu0 0.0
        %4892 = vmatprep.subr.mxu0 0.0
        %4893 = vmatpush1.msra.mxu0 0.0
        %4894 = vmatprep.subr.mxu0 0.0
        %4895 = vmatpush1.msra.mxu0 0.0
        %4896 = vmatprep.subr.mxu0 0.0
        %4897 = vmatpush1.msra.mxu0 0.0
        %4898 = vmatprep.subr.mxu0 0.0
        %4899 = vmatpush1.msra.mxu0 0.0
        %4900 = vmatprep.subr.mxu0 0.0
        %4901 = vmatpush1.msra.mxu0 0.0
        %4902 = vmatprep.subr.mxu0 0.0
        %4903 = vmatpush1.msra.mxu0 0.0
        %4904 = vmatprep.subr.mxu0 0.0
        %4905 = vmatpush1.msra.mxu0 0.0
        %4906 = vmatprep.subr.mxu0 0.0
        %4907 = vmatpush1.msra.mxu0 0.0
        %4908 = vmatprep.subr.mxu0 0.0
        %4909 = vmatpush1.msra.mxu0 0.0
        %4910 = vmatprep.subr.mxu0 0.0
        %4911 = vmatpush1.msra.mxu0 0.0
        %4912 = vmatprep.subr.mxu0 0.0
        %4913 = vmatpush1.msra.mxu0 0.0
        %4914 = vmatprep.subr.mxu0 0.0
        %4915 = vmatpush1.msra.mxu0 0.0
        %4916 = vmatprep.subr.mxu0 0.0
        %4917 = vmatpush1.msra.mxu0 0.0
        %4918 = vmatprep.subr.mxu0 0.0
        %4919 = vmatpush1.msra.mxu0 0.0
        %4920 = vmatprep.subr.mxu0 0.0
        %4921 = vmatpush1.msra.mxu0 0.0
        %4922 = vmatprep.subr.mxu0 0.0
        %4923 = vmatpush1.msra.mxu0 0.0
        %4924 = vmatprep.subr.mxu0 0.0
        %4925 = vmatpush1.msra.mxu0 0.0
        %4926 = vmatprep.subr.mxu0 0.0
        %4927 = vmatpush1.msra.mxu0 0.0
        %4928 = vmatprep.subr.mxu0 0.0
        %4929 = vmatpush1.msra.mxu0 0.0
        %4930 = vmatprep.subr.mxu0 0.0
        %4931 = vmatpush1.msra.mxu0 0.0
        %4932 = vmatprep.subr.mxu0 0.0
        %4933 = vmatpush1.msra.mxu0 0.0
        %4934 = vmatprep.subr.mxu0 0.0
        %4935 = vmatpush1.msra.mxu0 0.0
        %4936 = vmatprep.subr.mxu0 0.0
        %4937 = vmatpush1.msra.mxu0 0.0
        %4938 = vmatprep.subr.mxu0 0.0
        %4939 = vmatpush1.msra.mxu0 0.0
        %4940 = vmatprep.subr.mxu0 0.0
        %4941 = vmatpush1.msra.mxu0 0.0
        %4942 = vmatprep.subr.mxu0 0.0
        %4943 = vmatpush1.msra.mxu0 0.0
        %4944 = vmatprep.subr.mxu0 0.0
        %4945 = vmatpush1.msra.mxu0 0.0
        %4946 = vmatprep.subr.mxu0 0.0
        %4947 = vmatpush1.msra.mxu0 0.0
        %4948 = vmatprep.mubr.f32.mxu0 0.0
        %v4949 = vand.u32 %v831, 4294901760
        %v4950 = vsub.f32 %v831, %v4949
        %v4951 = vand.u32 %v4950, 4294901760
        %v4952 = vsub.f32 %v4950, %v4951
        %v4953 = vand.u32 %v4952, 4294901760
        %4954 = vmatmul.mubr.f32.gmra.mrb[0].mxu0 %v4953
        %v4955 = vpop.f32.mrb[0].mxu0
        %v4956 = vadd.f32 0.0, %v4955
        %v4957 = vpop.f32.mrb[0].mxu0
        %4958 = vmatprep.mubr.f32.mxu0 0.0
        %v4959 = vand.u32 %v834, 4294901760
        %v4960 = vsub.f32 %v834, %v4959
        %v4961 = vand.u32 %v4960, 4294901760
        %v4962 = vsub.f32 %v4960, %v4961
        %v4963 = vand.u32 %v4962, 4294901760
        %4964 = vmatmul.mubr.f32.gmra.mrb[0].mxu0 %v4963
        %v4965 = vpop.f32.mrb[0].mxu0
        %v4966 = vadd.f32 0.0, %v4965
        %v4967 = vpop.f32.mrb[0].mxu0
        %4968 = vdwg.mxu0
        %4969 = vmatprep.subr.mxu0 0.0
        %v4970 = vand.u32 %v4873, 4294901760
        %v4971 = vsub.f32 %v4873, %v4970
        %v4972 = vand.u32 %v4971, 4294901760
        %v4973 = vsub.f32 %v4971, %v4972
        %v4974 = vand.u32 %v4973, 4294901760
        %4975 = vmatpush1.msra.mxu0 %v4974
        %4976 = vmatprep.subr.mxu0 0.0
        %v4977 = vand.u32 %v4879, 4294901760
        %v4978 = vsub.f32 %v4879, %v4977
        %v4979 = vand.u32 %v4978, 4294901760
        %v4980 = vsub.f32 %v4978, %v4979
        %v4981 = vand.u32 %v4980, 4294901760
        %4982 = vmatpush1.msra.mxu0 %v4981
        %4983 = vmatprep.subr.mxu0 0.0
        %4984 = vmatpush1.msra.mxu0 0.0
        %4985 = vmatprep.subr.mxu0 0.0
        %4986 = vmatpush1.msra.mxu0 0.0
        %4987 = vmatprep.subr.mxu0 0.0
        %4988 = vmatpush1.msra.mxu0 0.0
        %4989 = vmatprep.subr.mxu0 0.0
        %4990 = vmatpush1.msra.mxu0 0.0
        %4991 = vmatprep.subr.mxu0 0.0
        %4992 = vmatpush1.msra.mxu0 0.0
        %4993 = vmatprep.subr.mxu0 0.0
        %4994 = vmatpush1.msra.mxu0 0.0
        %4995 = vmatprep.subr.mxu0 0.0
        %4996 = vmatpush1.msra.mxu0 0.0
        %4997 = vmatprep.subr.mxu0 0.0
        %4998 = vmatpush1.msra.mxu0 0.0
        %4999 = vmatprep.subr.mxu0 0.0
        %5000 = vmatpush1.msra.mxu0 0.0
        %5001 = vmatprep.subr.mxu0 0.0
        %5002 = vmatpush1.msra.mxu0 0.0
        %5003 = vmatprep.subr.mxu0 0.0
        %5004 = vmatpush1.msra.mxu0 0.0
        %5005 = vmatprep.subr.mxu0 0.0
        %5006 = vmatpush1.msra.mxu0 0.0
        %5007 = vmatprep.subr.mxu0 0.0
        %5008 = vmatpush1.msra.mxu0 0.0
        %5009 = vmatprep.subr.mxu0 0.0
        %5010 = vmatpush1.msra.mxu0 0.0
        %5011 = vmatprep.subr.mxu0 0.0
        %5012 = vmatpush1.msra.mxu0 0.0
        %5013 = vmatprep.subr.mxu0 0.0
        %5014 = vmatpush1.msra.mxu0 0.0
        %5015 = vmatprep.subr.mxu0 0.0
        %5016 = vmatpush1.msra.mxu0 0.0
        %5017 = vmatprep.subr.mxu0 0.0
        %5018 = vmatpush1.msra.mxu0 0.0
        %5019 = vmatprep.subr.mxu0 0.0
        %5020 = vmatpush1.msra.mxu0 0.0
        %5021 = vmatprep.subr.mxu0 0.0
        %5022 = vmatpush1.msra.mxu0 0.0
        %5023 = vmatprep.subr.mxu0 0.0
        %5024 = vmatpush1.msra.mxu0 0.0
        %5025 = vmatprep.subr.mxu0 0.0
        %5026 = vmatpush1.msra.mxu0 0.0
        %5027 = vmatprep.subr.mxu0 0.0
        %5028 = vmatpush1.msra.mxu0 0.0
        %5029 = vmatprep.subr.mxu0 0.0
        %5030 = vmatpush1.msra.mxu0 0.0
        %5031 = vmatprep.subr.mxu0 0.0
        %5032 = vmatpush1.msra.mxu0 0.0
        %5033 = vmatprep.subr.mxu0 0.0
        %5034 = vmatpush1.msra.mxu0 0.0
        %5035 = vmatprep.subr.mxu0 0.0
        %5036 = vmatpush1.msra.mxu0 0.0
        %5037 = vmatprep.subr.mxu0 0.0
        %5038 = vmatpush1.msra.mxu0 0.0
        %5039 = vmatprep.subr.mxu0 0.0
        %5040 = vmatpush1.msra.mxu0 0.0
        %5041 = vmatprep.subr.mxu0 0.0
        %5042 = vmatpush1.msra.mxu0 0.0
        %5043 = vmatprep.mubr.f32.mxu0 0.0
        %v5044 = vand.u32 %v831, 4294901760
        %5045 = vmatmul.mubr.f32.gmra.mrb[0].mxu0 %v5044
        %v5046 = vpop.f32.mrb[0].mxu0
        %v5047 = vadd.f32 %v4956, %v5046
        %v5048 = vpop.f32.mrb[0].mxu0
        %5049 = vmatprep.mubr.f32.mxu0 0.0
        %v5050 = vand.u32 %v834, 4294901760
        %5051 = vmatmul.mubr.f32.gmra.mrb[0].mxu0 %v5050
        %v5052 = vpop.f32.mrb[0].mxu0
        %v5053 = vadd.f32 %v4966, %v5052
        %v5054 = vpop.f32.mrb[0].mxu0
        %5055 = vdwg.mxu0
        %5056 = vmatprep.subr.mxu0 0.0
        %v5057 = vand.u32 %v4873, 4294901760
        %v5058 = vsub.f32 %v4873, %v5057
        %5059 = vmatpush1.msra.mxu0 %v5058
        %5060 = vmatprep.subr.mxu0 0.0
        %v5061 = vand.u32 %v4879, 4294901760
        %v5062 = vsub.f32 %v4879, %v5061
        %5063 = vmatpush1.msra.mxu0 %v5062
        %5064 = vmatprep.subr.mxu0 0.0
        %5065 = vmatpush1.msra.mxu0 0.0
        %5066 = vmatprep.subr.mxu0 0.0
        %5067 = vmatpush1.msra.mxu0 0.0
        %5068 = vmatprep.subr.mxu0 0.0
        %5069 = vmatpush1.msra.mxu0 0.0
        %5070 = vmatprep.subr.mxu0 0.0
        %5071 = vmatpush1.msra.mxu0 0.0
        %5072 = vmatprep.subr.mxu0 0.0
        %5073 = vmatpush1.msra.mxu0 0.0
        %5074 = vmatprep.subr.mxu0 0.0
        %5075 = vmatpush1.msra.mxu0 0.0
        %5076 = vmatprep.subr.mxu0 0.0
        %5077 = vmatpush1.msra.mxu0 0.0
        %5078 = vmatprep.subr.mxu0 0.0
        %5079 = vmatpush1.msra.mxu0 0.0
        %5080 = vmatprep.subr.mxu0 0.0
        %5081 = vmatpush1.msra.mxu0 0.0
        %5082 = vmatprep.subr.mxu0 0.0
        %5083 = vmatpush1.msra.mxu0 0.0
        %5084 = vmatprep.subr.mxu0 0.0
        %5085 = vmatpush1.msra.mxu0 0.0
        %5086 = vmatprep.subr.mxu0 0.0
        %5087 = vmatpush1.msra.mxu0 0.0
        %5088 = vmatprep.subr.mxu0 0.0
        %5089 = vmatpush1.msra.mxu0 0.0
        %5090 = vmatprep.subr.mxu0 0.0
        %5091 = vmatpush1.msra.mxu0 0.0
        %5092 = vmatprep.subr.mxu0 0.0
        %5093 = vmatpush1.msra.mxu0 0.0
        %5094 = vmatprep.subr.mxu0 0.0
        %5095 = vmatpush1.msra.mxu0 0.0
        %5096 = vmatprep.subr.mxu0 0.0
        %5097 = vmatpush1.msra.mxu0 0.0
        %5098 = vmatprep.subr.mxu0 0.0
        %5099 = vmatpush1.msra.mxu0 0.0
        %5100 = vmatprep.subr.mxu0 0.0
        %5101 = vmatpush1.msra.mxu0 0.0
        %5102 = vmatprep.subr.mxu0 0.0
        %5103 = vmatpush1.msra.mxu0 0.0
        %5104 = vmatprep.subr.mxu0 0.0
        %5105 = vmatpush1.msra.mxu0 0.0
        %5106 = vmatprep.subr.mxu0 0.0
        %5107 = vmatpush1.msra.mxu0 0.0
        %5108 = vmatprep.subr.mxu0 0.0
        %5109 = vmatpush1.msra.mxu0 0.0
        %5110 = vmatprep.subr.mxu0 0.0
        %5111 = vmatpush1.msra.mxu0 0.0
        %5112 = vmatprep.subr.mxu0 0.0
        %5113 = vmatpush1.msra.mxu0 0.0
        %5114 = vmatprep.subr.mxu0 0.0
        %5115 = vmatpush1.msra.mxu0 0.0
        %5116 = vmatprep.subr.mxu0 0.0
        %5117 = vmatpush1.msra.mxu0 0.0
        %5118 = vmatprep.subr.mxu0 0.0
        %5119 = vmatpush1.msra.mxu0 0.0
        %5120 = vmatprep.subr.mxu0 0.0
        %5121 = vmatpush1.msra.mxu0 0.0
        %5122 = vmatprep.subr.mxu0 0.0
        %5123 = vmatpush1.msra.mxu0 0.0
        %5124 = vmatprep.mubr.f32.mxu0 0.0
        %v5125 = vand.u32 %v831, 4294901760
        %v5126 = vsub.f32 %v831, %v5125
        %5127 = vmatmul.mubr.f32.gmra.mrb[0].mxu0 %v5126
        %v5128 = vpop.f32.mrb[0].mxu0
        %v5129 = vadd.f32 %v5047, %v5128
        %v5130 = vpop.f32.mrb[0].mxu0
        %5131 = vmatprep.mubr.f32.mxu0 0.0
        %v5132 = vand.u32 %v834, 4294901760
        %v5133 = vsub.f32 %v834, %v5132
        %5134 = vmatmul.mubr.f32.gmra.mrb[0].mxu0 %v5133
        %v5135 = vpop.f32.mrb[0].mxu0
        %v5136 = vadd.f32 %v5053, %v5135
        %v5137 = vpop.f32.mrb[0].mxu0
        %5138 = vdwg.mxu0
        %5139 = vmatprep.subr.mxu0 0.0
        %v5140 = vand.u32 %v4873, 4294901760
        %5141 = vmatpush1.msra.mxu0 %v5140
        %5142 = vmatprep.subr.mxu0 0.0
        %v5143 = vand.u32 %v4879, 4294901760
        %5144 = vmatpush1.msra.mxu0 %v5143
        %5145 = vmatprep.subr.mxu0 0.0
        %5146 = vmatpush1.msra.mxu0 0.0
        %5147 = vmatprep.subr.mxu0 0.0
        %5148 = vmatpush1.msra.mxu0 0.0
        %5149 = vmatprep.subr.mxu0 0.0
        %5150 = vmatpush1.msra.mxu0 0.0
        %5151 = vmatprep.subr.mxu0 0.0
        %5152 = vmatpush1.msra.mxu0 0.0
        %5153 = vmatprep.subr.mxu0 0.0
        %5154 = vmatpush1.msra.mxu0 0.0
        %5155 = vmatprep.subr.mxu0 0.0
        %5156 = vmatpush1.msra.mxu0 0.0
        %5157 = vmatprep.subr.mxu0 0.0
        %5158 = vmatpush1.msra.mxu0 0.0
        %5159 = vmatprep.subr.mxu0 0.0
        %5160 = vmatpush1.msra.mxu0 0.0
        %5161 = vmatprep.subr.mxu0 0.0
        %5162 = vmatpush1.msra.mxu0 0.0
        %5163 = vmatprep.subr.mxu0 0.0
        %5164 = vmatpush1.msra.mxu0 0.0
        %5165 = vmatprep.subr.mxu0 0.0
        %5166 = vmatpush1.msra.mxu0 0.0
        %5167 = vmatprep.subr.mxu0 0.0
        %5168 = vmatpush1.msra.mxu0 0.0
        %5169 = vmatprep.subr.mxu0 0.0
        %5170 = vmatpush1.msra.mxu0 0.0
        %5171 = vmatprep.subr.mxu0 0.0
        %5172 = vmatpush1.msra.mxu0 0.0
        %5173 = vmatprep.subr.mxu0 0.0
        %5174 = vmatpush1.msra.mxu0 0.0
        %5175 = vmatprep.subr.mxu0 0.0
        %5176 = vmatpush1.msra.mxu0 0.0
        %5177 = vmatprep.subr.mxu0 0.0
        %5178 = vmatpush1.msra.mxu0 0.0
        %5179 = vmatprep.subr.mxu0 0.0
        %5180 = vmatpush1.msra.mxu0 0.0
        %5181 = vmatprep.subr.mxu0 0.0
        %5182 = vmatpush1.msra.mxu0 0.0
        %5183 = vmatprep.subr.mxu0 0.0
        %5184 = vmatpush1.msra.mxu0 0.0
        %5185 = vmatprep.subr.mxu0 0.0
        %5186 = vmatpush1.msra.mxu0 0.0
        %5187 = vmatprep.subr.mxu0 0.0
        %5188 = vmatpush1.msra.mxu0 0.0
        %5189 = vmatprep.subr.mxu0 0.0
        %5190 = vmatpush1.msra.mxu0 0.0
        %5191 = vmatprep.subr.mxu0 0.0
        %5192 = vmatpush1.msra.mxu0 0.0
        %5193 = vmatprep.subr.mxu0 0.0
        %5194 = vmatpush1.msra.mxu0 0.0
        %5195 = vmatprep.subr.mxu0 0.0
        %5196 = vmatpush1.msra.mxu0 0.0
        %5197 = vmatprep.subr.mxu0 0.0
        %5198 = vmatpush1.msra.mxu0 0.0
        %5199 = vmatprep.subr.mxu0 0.0
        %5200 = vmatpush1.msra.mxu0 0.0
        %5201 = vmatprep.subr.mxu0 0.0
        %5202 = vmatpush1.msra.mxu0 0.0
        %5203 = vmatprep.subr.mxu0 0.0
        %5204 = vmatpush1.msra.mxu0 0.0
        %5205 = vmatprep.mubr.f32.mxu0 0.0
        %v5206 = vand.u32 %v831, 4294901760
        %v5207 = vsub.f32 %v831, %v5206
        %v5208 = vand.u32 %v5207, 4294901760
        %5209 = vmatmul.mubr.f32.gmra.mrb[0].mxu0 %v5208
        %v5210 = vpop.f32.mrb[0].mxu0
        %v5211 = vadd.f32 %v5129, %v5210
        %v5212 = vpop.f32.mrb[0].mxu0
        %5213 = vmatprep.mubr.f32.mxu0 0.0
        %v5214 = vand.u32 %v834, 4294901760
        %v5215 = vsub.f32 %v834, %v5214
        %v5216 = vand.u32 %v5215, 4294901760
        %5217 = vmatmul.mubr.f32.gmra.mrb[0].mxu0 %v5216
        %v5218 = vpop.f32.mrb[0].mxu0
        %v5219 = vadd.f32 %v5136, %v5218
        %v5220 = vpop.f32.mrb[0].mxu0
        %5221 = vdwg.mxu0
        %5222 = vmatprep.subr.mxu0 0.0
        %v5223 = vand.u32 %v4873, 4294901760
        %v5224 = vsub.f32 %v4873, %v5223
        %v5225 = vand.u32 %v5224, 4294901760
        %5226 = vmatpush1.msra.mxu0 %v5225
        %5227 = vmatprep.subr.mxu0 0.0
        %v5228 = vand.u32 %v4879, 4294901760
        %v5229 = vsub.f32 %v4879, %v5228
        %v5230 = vand.u32 %v5229, 4294901760
        %5231 = vmatpush1.msra.mxu0 %v5230
        %5232 = vmatprep.subr.mxu0 0.0
        %5233 = vmatpush1.msra.mxu0 0.0
        %5234 = vmatprep.subr.mxu0 0.0
        %5235 = vmatpush1.msra.mxu0 0.0
        %5236 = vmatprep.subr.mxu0 0.0
        %5237 = vmatpush1.msra.mxu0 0.0
        %5238 = vmatprep.subr.mxu0 0.0
        %5239 = vmatpush1.msra.mxu0 0.0
        %5240 = vmatprep.subr.mxu0 0.0
        %5241 = vmatpush1.msra.mxu0 0.0
        %5242 = vmatprep.subr.mxu0 0.0
        %5243 = vmatpush1.msra.mxu0 0.0
        %5244 = vmatprep.subr.mxu0 0.0
        %5245 = vmatpush1.msra.mxu0 0.0
        %5246 = vmatprep.subr.mxu0 0.0
        %5247 = vmatpush1.msra.mxu0 0.0
        %5248 = vmatprep.subr.mxu0 0.0
        %5249 = vmatpush1.msra.mxu0 0.0
        %5250 = vmatprep.subr.mxu0 0.0
        %5251 = vmatpush1.msra.mxu0 0.0
        %5252 = vmatprep.subr.mxu0 0.0
        %5253 = vmatpush1.msra.mxu0 0.0
        %5254 = vmatprep.subr.mxu0 0.0
        %5255 = vmatpush1.msra.mxu0 0.0
        %5256 = vmatprep.subr.mxu0 0.0
        %5257 = vmatpush1.msra.mxu0 0.0
        %5258 = vmatprep.subr.mxu0 0.0
        %5259 = vmatpush1.msra.mxu0 0.0
        %5260 = vmatprep.subr.mxu0 0.0
        %5261 = vmatpush1.msra.mxu0 0.0
        %5262 = vmatprep.subr.mxu0 0.0
        %5263 = vmatpush1.msra.mxu0 0.0
        %5264 = vmatprep.subr.mxu0 0.0
        %5265 = vmatpush1.msra.mxu0 0.0
        %5266 = vmatprep.subr.mxu0 0.0
        %5267 = vmatpush1.msra.mxu0 0.0
        %5268 = vmatprep.subr.mxu0 0.0
        %5269 = vmatpush1.msra.mxu0 0.0
        %5270 = vmatprep.subr.mxu0 0.0
        %5271 = vmatpush1.msra.mxu0 0.0
        %5272 = vmatprep.subr.mxu0 0.0
        %5273 = vmatpush1.msra.mxu0 0.0
        %5274 = vmatprep.subr.mxu0 0.0
        %5275 = vmatpush1.msra.mxu0 0.0
        %5276 = vmatprep.subr.mxu0 0.0
        %5277 = vmatpush1.msra.mxu0 0.0
        %5278 = vmatprep.subr.mxu0 0.0
        %5279 = vmatpush1.msra.mxu0 0.0
        %5280 = vmatprep.subr.mxu0 0.0
        %5281 = vmatpush1.msra.mxu0 0.0
        %5282 = vmatprep.subr.mxu0 0.0
        %5283 = vmatpush1.msra.mxu0 0.0
        %5284 = vmatprep.subr.mxu0 0.0
        %5285 = vmatpush1.msra.mxu0 0.0
        %5286 = vmatprep.subr.mxu0 0.0
        %5287 = vmatpush1.msra.mxu0 0.0
        %5288 = vmatprep.subr.mxu0 0.0
        %5289 = vmatpush1.msra.mxu0 0.0
        %5290 = vmatprep.subr.mxu0 0.0
        %5291 = vmatpush1.msra.mxu0 0.0
        %5292 = vmatprep.mubr.f32.mxu0 0.0
        %v5293 = vand.u32 %v831, 4294901760
        %5294 = vmatmul.mubr.f32.gmra.mrb[0].mxu0 %v5293
        %v5295 = vpop.f32.mrb[0].mxu0
        %v5296 = vadd.f32 %v5211, %v5295
        %v5297 = vpop.f32.mrb[0].mxu0
        %5298 = vmatprep.mubr.f32.mxu0 0.0
        %v5299 = vand.u32 %v834, 4294901760
        %5300 = vmatmul.mubr.f32.gmra.mrb[0].mxu0 %v5299
        %v5301 = vpop.f32.mrb[0].mxu0
        %v5302 = vadd.f32 %v5219, %v5301
        %v5303 = vpop.f32.mrb[0].mxu0
        %5304 = vdwg.mxu0
        %5305 = vmatprep.subr.mxu0 0.0
        %v5306 = vand.u32 %v4873, 4294901760
        %5307 = vmatpush1.msra.mxu0 %v5306
        %5308 = vmatprep.subr.mxu0 0.0
        %v5309 = vand.u32 %v4879, 4294901760
        %5310 = vmatpush1.msra.mxu0 %v5309
        %5311 = vmatprep.subr.mxu0 0.0
        %5312 = vmatpush1.msra.mxu0 0.0
        %5313 = vmatprep.subr.mxu0 0.0
        %5314 = vmatpush1.msra.mxu0 0.0
        %5315 = vmatprep.subr.mxu0 0.0
        %5316 = vmatpush1.msra.mxu0 0.0
        %5317 = vmatprep.subr.mxu0 0.0
        %5318 = vmatpush1.msra.mxu0 0.0
        %5319 = vmatprep.subr.mxu0 0.0
        %5320 = vmatpush1.msra.mxu0 0.0
        %5321 = vmatprep.subr.mxu0 0.0
        %5322 = vmatpush1.msra.mxu0 0.0
        %5323 = vmatprep.subr.mxu0 0.0
        %5324 = vmatpush1.msra.mxu0 0.0
        %5325 = vmatprep.subr.mxu0 0.0
        %5326 = vmatpush1.msra.mxu0 0.0
        %5327 = vmatprep.subr.mxu0 0.0
        %5328 = vmatpush1.msra.mxu0 0.0
        %5329 = vmatprep.subr.mxu0 0.0
        %5330 = vmatpush1.msra.mxu0 0.0
        %5331 = vmatprep.subr.mxu0 0.0
        %5332 = vmatpush1.msra.mxu0 0.0
        %5333 = vmatprep.subr.mxu0 0.0
        %5334 = vmatpush1.msra.mxu0 0.0
        %5335 = vmatprep.subr.mxu0 0.0
        %5336 = vmatpush1.msra.mxu0 0.0
        %5337 = vmatprep.subr.mxu0 0.0
        %5338 = vmatpush1.msra.mxu0 0.0
        %5339 = vmatprep.subr.mxu0 0.0
        %5340 = vmatpush1.msra.mxu0 0.0
        %5341 = vmatprep.subr.mxu0 0.0
        %5342 = vmatpush1.msra.mxu0 0.0
        %5343 = vmatprep.subr.mxu0 0.0
        %5344 = vmatpush1.msra.mxu0 0.0
        %5345 = vmatprep.subr.mxu0 0.0
        %5346 = vmatpush1.msra.mxu0 0.0
        %5347 = vmatprep.subr.mxu0 0.0
        %5348 = vmatpush1.msra.mxu0 0.0
        %5349 = vmatprep.subr.mxu0 0.0
        %5350 = vmatpush1.msra.mxu0 0.0
        %5351 = vmatprep.subr.mxu0 0.0
        %5352 = vmatpush1.msra.mxu0 0.0
        %5353 = vmatprep.subr.mxu0 0.0
        %5354 = vmatpush1.msra.mxu0 0.0
        %5355 = vmatprep.subr.mxu0 0.0
        %5356 = vmatpush1.msra.mxu0 0.0
        %5357 = vmatprep.subr.mxu0 0.0
        %5358 = vmatpush1.msra.mxu0 0.0
        %5359 = vmatprep.subr.mxu0 0.0
        %5360 = vmatpush1.msra.mxu0 0.0
        %5361 = vmatprep.subr.mxu0 0.0
        %5362 = vmatpush1.msra.mxu0 0.0
        %5363 = vmatprep.subr.mxu0 0.0
        %5364 = vmatpush1.msra.mxu0 0.0
        %5365 = vmatprep.subr.mxu0 0.0
        %5366 = vmatpush1.msra.mxu0 0.0
        %5367 = vmatprep.subr.mxu0 0.0
        %5368 = vmatpush1.msra.mxu0 0.0
        %5369 = vmatprep.subr.mxu0 0.0
        %5370 = vmatpush1.msra.mxu0 0.0
        %5371 = vmatprep.mubr.f32.mxu0 0.0
        %v5372 = vand.u32 %v831, 4294901760
        %5373 = vmatmul.mubr.f32.gmra.mrb[0].mxu0 %v5372
        %v5374 = vpop.f32.mrb[0].mxu0
        %v5375 = vadd.f32 %v5296, %v5374
        %v5376 = vpop.f32.mrb[0].mxu0
        %5377 = vmatprep.mubr.f32.mxu0 0.0
        %v5378 = vand.u32 %v834, 4294901760
        %5379 = vmatmul.mubr.f32.gmra.mrb[0].mxu0 %v5378
        %v5380 = vpop.f32.mrb[0].mxu0
        %v5381 = vadd.f32 %v5302, %v5380
        %v5382 = vpop.f32.mrb[0].mxu0
        %5383 = vdwg.mxu0
        %v5384 = vmul.f32 %v1329, %v1329
        %v5385 = vmul.f32 %v1335, %v1335
        %v5386 = vmul.f32 %v2339, %v2339
        %v5387 = vmul.f32 %v2345, %v2345
        %v5388 = vmul.f32 %v1329, %v2339
        %v5389 = vmul.f32 %v1335, %v2345
        %v5390 = vsub.f32 %v3351, %v5384
        %v5391 = vsub.f32 %v3357, %v5385
        %v5392 = vsub.f32 %v4363, %v5386
        %v5393 = vsub.f32 %v4369, %v5387
        %v5394 = vsub.f32 %v5375, %v5388
        %v5395 = vsub.f32 %v5381, %v5389
        %v5396 = vmul.f32 %v5388, 2.0
        %v5397 = vmul.f32 %v5389, 2.0
        %v5398 = vadd.f32 %v5396, 0.0004
        %v5399 = vadd.f32 %v5397, 0.0004
        %v5400 = vmul.f32 %v5394, 2.0
        %v5401 = vmul.f32 %v5395, 2.0
        %v5402 = vadd.f32 %v5400, 0.0036
        %v5403 = vadd.f32 %v5401, 0.0036
        %v5404 = vmul.f32 %v5398, %v5402
        %v5405 = vmul.f32 %v5399, %v5403
        %v5406 = vadd.f32 %v5384, %v5386
        %v5407 = vadd.f32 %v5385, %v5387
        %v5408 = vadd.f32 %v5406, 0.0004
        %v5409 = vadd.f32 %v5407, 0.0004
        %v5410 = vadd.f32 %v5390, %v5392
        %v5411 = vadd.f32 %v5391, %v5393
        %v5412 = vadd.f32 %v5410, 0.0036
        %v5413 = vadd.f32 %v5411, 0.0036
        %v5414 = vmul.f32 %v5408, %v5412
        %v5415 = vmul.f32 %v5409, %v5413
        %v5416 = vrcp.pop %v5414
        %v5417 = vmul.f32 %v5404, %v5416
        %v5418 = vrcp.pop %v5415
        %v5419 = vmul.f32 %v5405, %v5418
        %v5420 = vsel %vm321, %v5417, 0.0
        %v5421 = vsel %vm321, %v5419, 0.0
        %v5422 = vadd.f32 %v5420, %v5421
        %5423 = vadd.xlane.f32.xlu0 %v5422
        %v5424 = vpop.xlane.xlu0 %5423
        %v5425 = vrot.slane %v5424, 4
        %v5426 = vadd.f32 %v5424, %v5425
        %v5427 = vrot.slane %v5426, 2
        %v5428 = vadd.f32 %v5426, %v5427
        %v5429 = vrot.slane %v5428, 1
        %v5430 = vadd.f32 %v5428, %v5429
        %s5431 = vtos %v5430
        %v5432 = vrcp.pop 256.0
        %s5433 = vtos %v5432
        %s5434 = smul.f32 %s5431, %s5433
        %v5435 = vstv %s5434
        %vm5436 = vcmask 0
        %5437 = vst.msk [vmem:[%s312] sm:$0x1] %vm5436, %v5435
        %p5438 = scmp.lt.s32.totalorder %s26, 1
        %s5439 = scalar_select %p5438, %s26, 1
        %p5440 = scmp.lt.s32.totalorder %s27, 3
        %s5441 = scalar_select %p5440, %s27, 3
        %s5442 = smul.addr %s5439, 4
        %s5443 = sadd.s32 %s5441, %s5442
        %s5444 = scalar_lea.vmem %s4, %s5443
        // Predicated region
        $region53: #{tpu_custom_call.1} parent=35 // pred_check
          %p5445 = pneg %p152
        $region54: #{tpu_custom_call.1} parent=35 // pred_check_branch
          %5447 = sbr.rel (%p5445) target = $region56
        $region55: #{tpu_custom_call.1} parent=35 // pred_region
          _
        $region56: #{tpu_custom_call.1} parent=35 // pred_fallthru
          _
      $region36: #{tpu_custom_call.1} parent=5 // pred_fallthru
        _
      %p5448 = scmp.le.s32.totalorder 2, %s17
      // Predicated region
      $region57: #{tpu_custom_call.1} parent=5 // pred_check
        %p5449 = pneg %p5448
      $region58: #{tpu_custom_call.1} parent=5 // pred_check_branch
        %5451 = sbr.rel (%p5449) target = $region60
      $region59: #{tpu_custom_call.1} parent=5 // pred_region
        %s5452 = ssub.s32 %s17, 2
        // Predicated region
        $region61: #{tpu_custom_call.1} parent=59 // pred_check
          %p5453 = pneg %p158
        $region62: #{tpu_custom_call.1} parent=59 // pred_check_branch
          %5455 = sbr.rel (%p5453) target = $region64
        $region63: #{tpu_custom_call.1} parent=59 // pred_region
          %p5456 = scmp.lt.s32.totalorder %s28, 1
          %s5457 = scalar_select %p5456, %s28, 1
          %p5458 = scmp.lt.s32.totalorder %s29, 3
          %s5459 = scalar_select %p5458, %s29, 3
          %s5460 = smul.addr %s5457, 4
          %s5461 = sadd.s32 %s5459, %s5460
          %s5462 = scalar_lea.vmem %s4, %s5461
        $region64: #{tpu_custom_call.1} parent=59 // pred_fallthru
          _
      $region60: #{tpu_custom_call.1} parent=5 // pred_fallthru
        _
    $region6: #{tpu_custom_call.1} parent=1 // loop_footer
      %s21 = sadd.s32 1, %s17
    $region7: #{tpu_custom_call.1} parent=1 // loop_footer_branch
      %16 = sbr.rel target = $region3
    $region8: #{tpu_custom_call.1} parent=1 // loop_exit
      _
    %5463 = vsyncpa [#allocation3], 1
    %s5464 = scalar_lea.sflag [#allocation3], 1
    %5465 = vsyncpa %s5464, 1
    %5466 = vsyncpa [#allocation5], 1
    %s5467 = scalar_lea.sflag [#allocation5], 1
    %5468 = vsyncpa %s5467, 1
    %5469 = vsyncpa [#allocation8], 1

</llo_original>
